<compile_context>
chip_gen: v7x
topology: tpu7x:2x2x1
jax: 0.10.0
libtpu: 0.0.40
codegen_flags: <defaults>
</compile_context>

<pallas_src>
import jax
import jax.numpy as jnp
from jax.experimental import pallas as pl
from jax.experimental.pallas import tpu as pltpu

LANE = 128
NEG_BIG = -1e30  # pad value for output bias -> padded logits never win the softmax


def _round_up(x, m):
    return (x + m - 1) // m * m


def fused_decoder_kernel(ids_ref,              # SMEM (T,)        token ids
                         emb_ref,              # VMEM (O, HP)     f32 embedding table
                         h0_ref,               # VMEM (1, HP)     f32 initial hidden
                         w_ih_ref, w_hh_ref,   # VMEM (HP, 3*HP)  bf16 packed gate weights
                         b_ih_ref, b_hh_ref,   # VMEM (1, 3*HP)   f32 packed gate biases
                         w_out_ref,            # VMEM (HP, OP)    bf16 output projection
                         b_out_ref,            # VMEM (1, OP)     f32 (padded tail = -1e30)
                         y_ref,                # out  (T, OP)     f32 log-probs
                         h_out_ref):           # out  (1, HP)     f32 final hidden
    HP = h0_ref.shape[1]
    T = y_ref.shape[0]

    def step(t, h):
        tok = ids_ref[t]
        # relu(embedding row); padded lanes stay exactly 0.
        x = jnp.maximum(emb_ref[pl.ds(tok, 1), :], 0.0)        # (1, HP) f32
        x_bf = x.astype(jnp.bfloat16)
        h_bf = h.astype(jnp.bfloat16)

        # Two fused gate matmuls (bf16 operands, f32 accumulation).
        gi = jnp.dot(x_bf, w_ih_ref[...],
                     preferred_element_type=jnp.float32) + b_ih_ref[...]   # (1, 3*HP)
        gh = jnp.dot(h_bf, w_hh_ref[...],
                     preferred_element_type=jnp.float32) + b_hh_ref[...]   # (1, 3*HP)

        # 128-lane-aligned static gate slices (r, z, n) — no lane shuffles.
        r = jax.nn.sigmoid(gi[:, 0:HP] + gh[:, 0:HP])
        z = jax.nn.sigmoid(gi[:, HP:2 * HP] + gh[:, HP:2 * HP])
        n = jnp.tanh(gi[:, 2 * HP:3 * HP] + r * gh[:, 2 * HP:3 * HP])
        h_new = (1.0 - z) * n + z * h                          # padded lanes stay 0

        # Output projection + numerically stable log-softmax (pads hold -1e30).
        logits = jnp.dot(h_new.astype(jnp.bfloat16), w_out_ref[...],
                         preferred_element_type=jnp.float32) + b_out_ref[...]   # (1, OP)
        m = jnp.max(logits, axis=1, keepdims=True)
        lse = jnp.log(jnp.sum(jnp.exp(logits - m), axis=1, keepdims=True)) + m
        y_ref[pl.ds(t, 1), :] = logits - lse
        return h_new

    h_final = jax.lax.fori_loop(0, T, step, h0_ref[...], unroll=True)
    h_out_ref[...] = h_final                                   # single final store


def prepare_decoder_params(params):
    """One-time weight prep: gate fuse/pack, transpose to (in, out), pad to 128, bf16 cast."""
    emb = params["embedding"]                      # (O, H) f32
    O, H = emb.shape
    HP = _round_up(H, LANE)
    OP = _round_up(O, LANE)

    def pack_gate_weights(w):                      # (3H, H) -> (HP, 3*HP) bf16
        wg = w.reshape(3, H, H)                    # (gate, out, in)
        wg = jnp.transpose(wg, (0, 2, 1))          # (gate, in, out)
        wg = jnp.pad(wg, ((0, 0), (0, HP - H), (0, HP - H)))     # (3, HP, HP)
        return jnp.transpose(wg, (1, 0, 2)).reshape(HP, 3 * HP).astype(jnp.bfloat16)

    def pack_gate_bias(b):                         # (3H,) -> (1, 3*HP) f32 (pads = 0)
        bg = jnp.pad(b.reshape(3, H), ((0, 0), (0, HP - H)))
        return bg.reshape(1, 3 * HP)

    w_out = jnp.pad(params["w_out"].T, ((0, HP - H), (0, OP - O))).astype(jnp.bfloat16)
    b_out = jnp.full((1, OP), NEG_BIG, jnp.float32).at[0, :O].set(params["b_out"])
    emb_p = jnp.pad(emb, ((0, 0), (0, HP - H)))    # (O, HP) f32; pads = 0

    return {
        "H": H, "O": O, "HP": HP, "OP": OP,
        "embedding": emb_p,
        "w_ih": pack_gate_weights(params["w_ih"]),
        "w_hh": pack_gate_weights(params["w_hh"]),
        "b_ih": pack_gate_bias(params["b_ih"]),
        "b_hh": pack_gate_bias(params["b_hh"]),
        "w_out": w_out, "b_out": b_out,
    }


def decoder_rnn_decode(tokens, hidden, prep):
    """Run T fused decoder steps in a single kernel invocation.

    tokens: (T,) int32; hidden: (1, 1, H) f32 initial hidden.
    Returns (log_probs (T, O), final hidden (1, 1, H)) — identical to calling
    the PyTorch module T times, feeding the hidden state forward.
    """
    H, O, HP, OP = prep["H"], prep["O"], prep["HP"], prep["OP"]
    T = tokens.shape[0]
    h0 = jnp.pad(hidden.reshape(1, H), ((0, 0), (0, HP - H)))

    vmem = lambda: pl.BlockSpec(memory_space=pltpu.MemorySpace.VMEM)
    smem = lambda: pl.BlockSpec(memory_space=pltpu.MemorySpace.SMEM)

    y_pad, h_pad = pl.pallas_call(
        fused_decoder_kernel,
        out_shape=(
            jax.ShapeDtypeStruct((T, OP), jnp.float32),
            jax.ShapeDtypeStruct((1, HP), jnp.float32),
        ),
        in_specs=[smem(),            # token ids
                  vmem(),            # embedding table
                  vmem(),            # h0
                  vmem(), vmem(),    # w_ih, w_hh
                  vmem(), vmem(),    # b_ih, b_hh
                  vmem(), vmem()],   # w_out, b_out
        out_specs=(vmem(), vmem()),
    )(tokens, prep["embedding"], h0, prep["w_ih"], prep["w_hh"],
      prep["b_ih"], prep["b_hh"], prep["w_out"], prep["b_out"])

    log_probs = y_pad[:, :O]
    h_final = h_pad[:, :H].reshape(1, 1, H)
    return log_probs, h_final


def init_params(key, hidden_size, output_size):
    ks = jax.random.split(key, 7)
    scale = 1.0 / jnp.sqrt(hidden_size)
    return {
        "embedding": jax.random.normal(ks[0], (output_size, hidden_size), jnp.float32),
        "w_ih": jax.random.uniform(ks[1], (3 * hidden_size, hidden_size), jnp.float32,
                                   -scale, scale),
        "w_hh": jax.random.uniform(ks[2], (3 * hidden_size, hidden_size), jnp.float32,
                                   -scale, scale),
        "b_ih": jax.random.uniform(ks[3], (3 * hidden_size,), jnp.float32, -scale, scale),
        "b_hh": jax.random.uniform(ks[4], (3 * hidden_size,), jnp.float32, -scale, scale),
        "w_out": jax.random.uniform(ks[5], (output_size, hidden_size), jnp.float32,
                                    -scale, scale),
        "b_out": jax.random.uniform(ks[6], (output_size,), jnp.float32, -scale, scale),
    }


def reference_forward(token, hidden, params):
    """Pure-JAX single-step reference mirroring the PyTorch module (gate order r,z,n),
    with matmul operands in bf16 / f32 accumulation exactly as the kernel does."""
    H = params["embedding"].shape[1]
    x = jnp.maximum(params["embedding"][token].reshape(1, H), 0.0).astype(jnp.bfloat16)
    h = hidden.reshape(1, H)
    w_ih_t = params["w_ih"].T.astype(jnp.bfloat16)   # (H, 3H)
    w_hh_t = params["w_hh"].T.astype(jnp.bfloat16)
    gi = jnp.dot(x, w_ih_t, preferred_element_type=jnp.float32) + params["b_ih"]
    gh = jnp.dot(h.astype(jnp.bfloat16), w_hh_t,
                 preferred_element_type=jnp.float32) + params["b_hh"]
    r = jax.nn.sigmoid(gi[:, :H] + gh[:, :H])
    z = jax.nn.sigmoid(gi[:, H:2 * H] + gh[:, H:2 * H])
    n = jnp.tanh(gi[:, 2 * H:] + r * gh[:, 2 * H:])
    h_new = (1.0 - z) * n + z * h
    logits = jnp.dot(h_new.astype(jnp.bfloat16), params["w_out"].T.astype(jnp.bfloat16),
                     preferred_element_type=jnp.float32) + params["b_out"]
    return jax.nn.log_softmax(logits, axis=1), h_new.reshape(1, 1, H)


if __name__ == "__main__":
    hidden_size = 32
    output_size = 64
    T = 8                                    # fused decode steps

    key = jax.random.PRNGKey(0)
    pkey, hkey, tkey = jax.random.split(key, 3)
    params = init_params(pkey, hidden_size, output_size)
    prep = prepare_decoder_params(params)    # one-time pack / transpose / pad / bf16 cast

    tokens = jax.random.randint(tkey, (T,), 0, output_size, dtype=jnp.int32)
    hidden = jax.random.normal(hkey, (1, 1, hidden_size), jnp.float32)

    y, h_final = decoder_rnn_decode(tokens, hidden, prep)
    jax.block_until_ready((y, h_final))

    # Reference: apply the PyTorch-equivalent single step T times.
    y_rows = []
    h_ref = hidden
    for t in range(T):
        yt, h_ref = reference_forward(tokens[t], h_ref, params)
        y_rows.append(yt[0])
    y_ref = jnp.stack(y_rows)                # (T, O)

    assert jnp.allclose(y, y_ref, atol=5e-4, rtol=5e-4), "log-softmax mismatch"
    assert jnp.allclose(h_final, h_ref, atol=5e-4, rtol=5e-4), "hidden mismatch"

    print("KERNEL_OK")
</pallas_src>

<mosaic_0001>
module attributes {stable_mosaic.version = 11 : i64} {
  func.func @fused_decoder_kernel(%arg0: memref<8xi32, #tpu.memory_space<smem>>, %arg1: memref<64x128xf32, #tpu.memory_space<vmem>>, %arg2: memref<1x128xf32, #tpu.memory_space<vmem>>, %arg3: memref<128x384xbf16, #tpu.memory_space<vmem>>, %arg4: memref<128x384xbf16, #tpu.memory_space<vmem>>, %arg5: memref<1x384xf32, #tpu.memory_space<vmem>>, %arg6: memref<1x384xf32, #tpu.memory_space<vmem>>, %arg7: memref<128x128xbf16, #tpu.memory_space<vmem>>, %arg8: memref<1x128xf32, #tpu.memory_space<vmem>>, %arg9: memref<8x128xf32, #tpu.memory_space<vmem>>, %arg10: memref<1x128xf32, #tpu.memory_space<vmem>>) attributes {dimension_semantics = [], scalar_prefetch = 0 : i64, scratch_operands = 0 : i64, tpu.core_type = #tpu.core_type<tc>} {
    %c0 = arith.constant 0 : index
    %c0_0 = arith.constant 0 : index
    %0 = vector.load %arg2[%c0, %c0_0] : memref<1x128xf32, #tpu.memory_space<vmem>>, vector<1x128xf32>
    %c0_i32 = arith.constant 0 : i32
    %1 = arith.index_cast %c0_i32 : i32 to index
    %2 = memref.load %arg0[%1] : memref<8xi32, #tpu.memory_space<smem>>
    %3 = arith.index_cast %2 : i32 to index
    %c0_1 = arith.constant 0 : index
    %4 = vector.load %arg1[%3, %c0_1] : memref<64x128xf32, #tpu.memory_space<vmem>>, vector<1x128xf32>
    %cst = arith.constant 0.000000e+00 : f32
    %5 = vector.broadcast %cst : f32 to vector<1x128xf32>
    %6 = arith.maximumf %4, %5 : vector<1x128xf32>
    %7 = arith.truncf %6 : vector<1x128xf32> to vector<1x128xbf16>
    %8 = arith.truncf %0 : vector<1x128xf32> to vector<1x128xbf16>
    %c0_2 = arith.constant 0 : index
    %c0_3 = arith.constant 0 : index
    %9 = vector.load %arg3[%c0_2, %c0_3] : memref<128x384xbf16, #tpu.memory_space<vmem>>, vector<128x384xbf16>
    %cst_4 = arith.constant dense<0.000000e+00> : vector<1x384xf32>
    %10 = tpu.matmul %7, %9, %cst_4 {dimension_numbers = #tpu.dot_dimension_numbers<[1], [0], [0], [1], [0, 0, 1, 1], [], []>} : vector<1x128xbf16>, vector<128x384xbf16>, vector<1x384xf32> -> vector<1x384xf32>
    %c0_5 = arith.constant 0 : index
    %c0_6 = arith.constant 0 : index
    %11 = vector.load %arg5[%c0_5, %c0_6] : memref<1x384xf32, #tpu.memory_space<vmem>>, vector<1x384xf32>
    %12 = arith.addf %10, %11 : vector<1x384xf32>
    %c0_7 = arith.constant 0 : index
    %c0_8 = arith.constant 0 : index
    %13 = vector.load %arg4[%c0_7, %c0_8] : memref<128x384xbf16, #tpu.memory_space<vmem>>, vector<128x384xbf16>
    %cst_9 = arith.constant dense<0.000000e+00> : vector<1x384xf32>
    %14 = tpu.matmul %8, %13, %cst_9 {dimension_numbers = #tpu.dot_dimension_numbers<[1], [0], [0], [1], [0, 0, 1, 1], [], []>} : vector<1x128xbf16>, vector<128x384xbf16>, vector<1x384xf32> -> vector<1x384xf32>
    %c0_10 = arith.constant 0 : index
    %c0_11 = arith.constant 0 : index
    %15 = vector.load %arg6[%c0_10, %c0_11] : memref<1x384xf32, #tpu.memory_space<vmem>>, vector<1x384xf32>
    %16 = arith.addf %14, %15 : vector<1x384xf32>
    %17 = vector.extract_strided_slice %12 {offsets = [0, 0], sizes = [1, 128], strides = [1, 1]} : vector<1x384xf32> to vector<1x128xf32>
    %18 = vector.extract_strided_slice %16 {offsets = [0, 0], sizes = [1, 128], strides = [1, 1]} : vector<1x384xf32> to vector<1x128xf32>
    %19 = arith.addf %17, %18 : vector<1x128xf32>
    %20 = arith.negf %19 : vector<1x128xf32>
    %21 = math.exp %20 : vector<1x128xf32>
    %cst_12 = arith.constant 1.000000e+00 : f32
    %22 = vector.broadcast %cst_12 : f32 to vector<1x128xf32>
    %23 = arith.addf %22, %21 : vector<1x128xf32>
    %24 = arith.divf %22, %23 : vector<1x128xf32>
    %25 = vector.extract_strided_slice %12 {offsets = [0, 128], sizes = [1, 128], strides = [1, 1]} : vector<1x384xf32> to vector<1x128xf32>
    %26 = vector.extract_strided_slice %16 {offsets = [0, 128], sizes = [1, 128], strides = [1, 1]} : vector<1x384xf32> to vector<1x128xf32>
    %27 = arith.addf %25, %26 : vector<1x128xf32>
    %28 = arith.negf %27 : vector<1x128xf32>
    %29 = math.exp %28 : vector<1x128xf32>
    %cst_13 = arith.constant 1.000000e+00 : f32
    %30 = vector.broadcast %cst_13 : f32 to vector<1x128xf32>
    %31 = arith.addf %30, %29 : vector<1x128xf32>
    %32 = arith.divf %30, %31 : vector<1x128xf32>
    %33 = vector.extract_strided_slice %12 {offsets = [0, 256], sizes = [1, 128], strides = [1, 1]} : vector<1x384xf32> to vector<1x128xf32>
    %34 = vector.extract_strided_slice %16 {offsets = [0, 256], sizes = [1, 128], strides = [1, 1]} : vector<1x384xf32> to vector<1x128xf32>
    %35 = arith.mulf %24, %34 : vector<1x128xf32>
    %36 = arith.addf %33, %35 : vector<1x128xf32>
    %37 = math.tanh %36 : vector<1x128xf32>
    %cst_14 = arith.constant 1.000000e+00 : f32
    %38 = vector.broadcast %cst_14 : f32 to vector<1x128xf32>
    %39 = arith.subf %38, %32 : vector<1x128xf32>
    %40 = arith.mulf %39, %37 : vector<1x128xf32>
    %41 = arith.mulf %32, %0 : vector<1x128xf32>
    %42 = arith.addf %40, %41 : vector<1x128xf32>
    %43 = arith.truncf %42 : vector<1x128xf32> to vector<1x128xbf16>
    %c0_15 = arith.constant 0 : index
    %c0_16 = arith.constant 0 : index
    %44 = vector.load %arg7[%c0_15, %c0_16] : memref<128x128xbf16, #tpu.memory_space<vmem>>, vector<128x128xbf16>
    %cst_17 = arith.constant dense<0.000000e+00> : vector<1x128xf32>
    %45 = tpu.matmul %43, %44, %cst_17 {dimension_numbers = #tpu.dot_dimension_numbers<[1], [0], [0], [1], [0, 0, 1, 1], [], []>} : vector<1x128xbf16>, vector<128x128xbf16>, vector<1x128xf32> -> vector<1x128xf32>
    %c0_18 = arith.constant 0 : index
    %c0_19 = arith.constant 0 : index
    %46 = vector.load %arg8[%c0_18, %c0_19] : memref<1x128xf32, #tpu.memory_space<vmem>>, vector<1x128xf32>
    %47 = arith.addf %45, %46 : vector<1x128xf32>
    %cst_20 = arith.constant dense<0xFF800000> : vector<1xf32>
    %48 = vector.multi_reduction <maximumf>, %47, %cst_20 [1] : vector<1x128xf32> to vector<1xf32>
    %49 = vector.shape_cast %48 : vector<1xf32> to vector<1x1xf32>
    %50 = vector.broadcast %49 : vector<1x1xf32> to vector<1x128xf32>
    %51 = arith.subf %47, %50 : vector<1x128xf32>
    %52 = math.exp %51 : vector<1x128xf32>
    %cst_21 = arith.constant dense<0.000000e+00> : vector<1xf32>
    %53 = vector.multi_reduction <add>, %52, %cst_21 [1] : vector<1x128xf32> to vector<1xf32>
    %54 = vector.shape_cast %53 : vector<1xf32> to vector<1x1xf32>
    %55 = math.log %54 : vector<1x1xf32>
    %56 = arith.addf %55, %49 : vector<1x1xf32>
    %57 = vector.broadcast %56 : vector<1x1xf32> to vector<1x128xf32>
    %58 = arith.subf %47, %57 : vector<1x128xf32>
    %59 = arith.index_cast %c0_i32 : i32 to index
    %c0_22 = arith.constant 0 : index
    %60 = vector.load %arg9[%59, %c0_22] : memref<8x128xf32, #tpu.memory_space<vmem>>, vector<1x128xf32>
    tpu.vector_store %arg9[%59, %c0_22], %58 {strides = array<i32>} : memref<8x128xf32, #tpu.memory_space<vmem>>, vector<1x128xf32>,
    %c1_i32 = arith.constant 1 : i32
    %61 = arith.index_cast %c1_i32 : i32 to index
    %62 = memref.load %arg0[%61] : memref<8xi32, #tpu.memory_space<smem>>
    %63 = arith.index_cast %62 : i32 to index
    %c0_23 = arith.constant 0 : index
    %64 = vector.load %arg1[%63, %c0_23] : memref<64x128xf32, #tpu.memory_space<vmem>>, vector<1x128xf32>
    %cst_24 = arith.constant 0.000000e+00 : f32
    %65 = vector.broadcast %cst_24 : f32 to vector<1x128xf32>
    %66 = arith.maximumf %64, %65 : vector<1x128xf32>
    %67 = arith.truncf %66 : vector<1x128xf32> to vector<1x128xbf16>
    %68 = arith.truncf %42 : vector<1x128xf32> to vector<1x128xbf16>
    %c0_25 = arith.constant 0 : index
    %c0_26 = arith.constant 0 : index
    %69 = vector.load %arg3[%c0_25, %c0_26] : memref<128x384xbf16, #tpu.memory_space<vmem>>, vector<128x384xbf16>
    %cst_27 = arith.constant dense<0.000000e+00> : vector<1x384xf32>
    %70 = tpu.matmul %67, %69, %cst_27 {dimension_numbers = #tpu.dot_dimension_numbers<[1], [0], [0], [1], [0, 0, 1, 1], [], []>} : vector<1x128xbf16>, vector<128x384xbf16>, vector<1x384xf32> -> vector<1x384xf32>
    %c0_28 = arith.constant 0 : index
    %c0_29 = arith.constant 0 : index
    %71 = vector.load %arg5[%c0_28, %c0_29] : memref<1x384xf32, #tpu.memory_space<vmem>>, vector<1x384xf32>
    %72 = arith.addf %70, %71 : vector<1x384xf32>
    %c0_30 = arith.constant 0 : index
    %c0_31 = arith.constant 0 : index
    %73 = vector.load %arg4[%c0_30, %c0_31] : memref<128x384xbf16, #tpu.memory_space<vmem>>, vector<128x384xbf16>
    %cst_32 = arith.constant dense<0.000000e+00> : vector<1x384xf32>
    %74 = tpu.matmul %68, %73, %cst_32 {dimension_numbers = #tpu.dot_dimension_numbers<[1], [0], [0], [1], [0, 0, 1, 1], [], []>} : vector<1x128xbf16>, vector<128x384xbf16>, vector<1x384xf32> -> vector<1x384xf32>
    %c0_33 = arith.constant 0 : index
    %c0_34 = arith.constant 0 : index
    %75 = vector.load %arg6[%c0_33, %c0_34] : memref<1x384xf32, #tpu.memory_space<vmem>>, vector<1x384xf32>
    %76 = arith.addf %74, %75 : vector<1x384xf32>
    %77 = vector.extract_strided_slice %72 {offsets = [0, 0], sizes = [1, 128], strides = [1, 1]} : vector<1x384xf32> to vector<1x128xf32>
    %78 = vector.extract_strided_slice %76 {offsets = [0, 0], sizes = [1, 128], strides = [1, 1]} : vector<1x384xf32> to vector<1x128xf32>
    %79 = arith.addf %77, %78 : vector<1x128xf32>
    %80 = arith.negf %79 : vector<1x128xf32>
    %81 = math.exp %80 : vector<1x128xf32>
    %cst_35 = arith.constant 1.000000e+00 : f32
    %82 = vector.broadcast %cst_35 : f32 to vector<1x128xf32>
    %83 = arith.addf %82, %81 : vector<1x128xf32>
    %84 = arith.divf %82, %83 : vector<1x128xf32>
    %85 = vector.extract_strided_slice %72 {offsets = [0, 128], sizes = [1, 128], strides = [1, 1]} : vector<1x384xf32> to vector<1x128xf32>
    %86 = vector.extract_strided_slice %76 {offsets = [0, 128], sizes = [1, 128], strides = [1, 1]} : vector<1x384xf32> to vector<1x128xf32>
    %87 = arith.addf %85, %86 : vector<1x128xf32>
    %88 = arith.negf %87 : vector<1x128xf32>
    %89 = math.exp %88 : vector<1x128xf32>
    %cst_36 = arith.constant 1.000000e+00 : f32
    %90 = vector.broadcast %cst_36 : f32 to vector<1x128xf32>
    %91 = arith.addf %90, %89 : vector<1x128xf32>
    %92 = arith.divf %90, %91 : vector<1x128xf32>
    %93 = vector.extract_strided_slice %72 {offsets = [0, 256], sizes = [1, 128], strides = [1, 1]} : vector<1x384xf32> to vector<1x128xf32>
    %94 = vector.extract_strided_slice %76 {offsets = [0, 256], sizes = [1, 128], strides = [1, 1]} : vector<1x384xf32> to vector<1x128xf32>
    %95 = arith.mulf %84, %94 : vector<1x128xf32>
    %96 = arith.addf %93, %95 : vector<1x128xf32>
    %97 = math.tanh %96 : vector<1x128xf32>
    %cst_37 = arith.constant 1.000000e+00 : f32
    %98 = vector.broadcast %cst_37 : f32 to vector<1x128xf32>
    %99 = arith.subf %98, %92 : vector<1x128xf32>
    %100 = arith.mulf %99, %97 : vector<1x128xf32>
    %101 = arith.mulf %92, %42 : vector<1x128xf32>
    %102 = arith.addf %100, %101 : vector<1x128xf32>
    %103 = arith.truncf %102 : vector<1x128xf32> to vector<1x128xbf16>
    %c0_38 = arith.constant 0 : index
    %c0_39 = arith.constant 0 : index
    %104 = vector.load %arg7[%c0_38, %c0_39] : memref<128x128xbf16, #tpu.memory_space<vmem>>, vector<128x128xbf16>
    %cst_40 = arith.constant dense<0.000000e+00> : vector<1x128xf32>
    %105 = tpu.matmul %103, %104, %cst_40 {dimension_numbers = #tpu.dot_dimension_numbers<[1], [0], [0], [1], [0, 0, 1, 1], [], []>} : vector<1x128xbf16>, vector<128x128xbf16>, vector<1x128xf32> -> vector<1x128xf32>
    %c0_41 = arith.constant 0 : index
    %c0_42 = arith.constant 0 : index
    %106 = vector.load %arg8[%c0_41, %c0_42] : memref<1x128xf32, #tpu.memory_space<vmem>>, vector<1x128xf32>
    %107 = arith.addf %105, %106 : vector<1x128xf32>
    %cst_43 = arith.constant dense<0xFF800000> : vector<1xf32>
    %108 = vector.multi_reduction <maximumf>, %107, %cst_43 [1] : vector<1x128xf32> to vector<1xf32>
    %109 = vector.shape_cast %108 : vector<1xf32> to vector<1x1xf32>
    %110 = vector.broadcast %109 : vector<1x1xf32> to vector<1x128xf32>
    %111 = arith.subf %107, %110 : vector<1x128xf32>
    %112 = math.exp %111 : vector<1x128xf32>
    %cst_44 = arith.constant dense<0.000000e+00> : vector<1xf32>
    %113 = vector.multi_reduction <add>, %112, %cst_44 [1] : vector<1x128xf32> to vector<1xf32>
    %114 = vector.shape_cast %113 : vector<1xf32> to vector<1x1xf32>
    %115 = math.log %114 : vector<1x1xf32>
    %116 = arith.addf %115, %109 : vector<1x1xf32>
    %117 = vector.broadcast %116 : vector<1x1xf32> to vector<1x128xf32>
    %118 = arith.subf %107, %117 : vector<1x128xf32>
    %119 = arith.index_cast %c1_i32 : i32 to index
    %c0_45 = arith.constant 0 : index
    %120 = vector.load %arg9[%119, %c0_45] : memref<8x128xf32, #tpu.memory_space<vmem>>, vector<1x128xf32>
    tpu.vector_store %arg9[%119, %c0_45], %118 {strides = array<i32>} : memref<8x128xf32, #tpu.memory_space<vmem>>, vector<1x128xf32>,
    %c2_i32 = arith.constant 2 : i32
    %121 = arith.index_cast %c2_i32 : i32 to index
    %122 = memref.load %arg0[%121] : memref<8xi32, #tpu.memory_space<smem>>
    %123 = arith.index_cast %122 : i32 to index
    %c0_46 = arith.constant 0 : index
    %124 = vector.load %arg1[%123, %c0_46] : memref<64x128xf32, #tpu.memory_space<vmem>>, vector<1x128xf32>
    %cst_47 = arith.constant 0.000000e+00 : f32
    %125 = vector.broadcast %cst_47 : f32 to vector<1x128xf32>
    %126 = arith.maximumf %124, %125 : vector<1x128xf32>
    %127 = arith.truncf %126 : vector<1x128xf32> to vector<1x128xbf16>
    %128 = arith.truncf %102 : vector<1x128xf32> to vector<1x128xbf16>
    %c0_48 = arith.constant 0 : index
    %c0_49 = arith.constant 0 : index
    %129 = vector.load %arg3[%c0_48, %c0_49] : memref<128x384xbf16, #tpu.memory_space<vmem>>, vector<128x384xbf16>
    %cst_50 = arith.constant dense<0.000000e+00> : vector<1x384xf32>
    %130 = tpu.matmul %127, %129, %cst_50 {dimension_numbers = #tpu.dot_dimension_numbers<[1], [0], [0], [1], [0, 0, 1, 1], [], []>} : vector<1x128xbf16>, vector<128x384xbf16>, vector<1x384xf32> -> vector<1x384xf32>
    %c0_51 = arith.constant 0 : index
    %c0_52 = arith.constant 0 : index
    %131 = vector.load %arg5[%c0_51, %c0_52] : memref<1x384xf32, #tpu.memory_space<vmem>>, vector<1x384xf32>
    %132 = arith.addf %130, %131 : vector<1x384xf32>
    %c0_53 = arith.constant 0 : index
    %c0_54 = arith.constant 0 : index
    %133 = vector.load %arg4[%c0_53, %c0_54] : memref<128x384xbf16, #tpu.memory_space<vmem>>, vector<128x384xbf16>
    %cst_55 = arith.constant dense<0.000000e+00> : vector<1x384xf32>
    %134 = tpu.matmul %128, %133, %cst_55 {dimension_numbers = #tpu.dot_dimension_numbers<[1], [0], [0], [1], [0, 0, 1, 1], [], []>} : vector<1x128xbf16>, vector<128x384xbf16>, vector<1x384xf32> -> vector<1x384xf32>
    %c0_56 = arith.constant 0 : index
    %c0_57 = arith.constant 0 : index
    %135 = vector.load %arg6[%c0_56, %c0_57] : memref<1x384xf32, #tpu.memory_space<vmem>>, vector<1x384xf32>
    %136 = arith.addf %134, %135 : vector<1x384xf32>
    %137 = vector.extract_strided_slice %132 {offsets = [0, 0], sizes = [1, 128], strides = [1, 1]} : vector<1x384xf32> to vector<1x128xf32>
    %138 = vector.extract_strided_slice %136 {offsets = [0, 0], sizes = [1, 128], strides = [1, 1]} : vector<1x384xf32> to vector<1x128xf32>
    %139 = arith.addf %137, %138 : vector<1x128xf32>
    %140 = arith.negf %139 : vector<1x128xf32>
    %141 = math.exp %140 : vector<1x128xf32>
    %cst_58 = arith.constant 1.000000e+00 : f32
    %142 = vector.broadcast %cst_58 : f32 to vector<1x128xf32>
    %143 = arith.addf %142, %141 : vector<1x128xf32>
    %144 = arith.divf %142, %143 : vector<1x128xf32>
    %145 = vector.extract_strided_slice %132 {offsets = [0, 128], sizes = [1, 128], strides = [1, 1]} : vector<1x384xf32> to vector<1x128xf32>
    %146 = vector.extract_strided_slice %136 {offsets = [0, 128], sizes = [1, 128], strides = [1, 1]} : vector<1x384xf32> to vector<1x128xf32>
    %147 = arith.addf %145, %146 : vector<1x128xf32>
    %148 = arith.negf %147 : vector<1x128xf32>
    %149 = math.exp %148 : vector<1x128xf32>
    %cst_59 = arith.constant 1.000000e+00 : f32
    %150 = vector.broadcast %cst_59 : f32 to vector<1x128xf32>
    %151 = arith.addf %150, %149 : vector<1x128xf32>
    %152 = arith.divf %150, %151 : vector<1x128xf32>
    %153 = vector.extract_strided_slice %132 {offsets = [0, 256], sizes = [1, 128], strides = [1, 1]} : vector<1x384xf32> to vector<1x128xf32>
    %154 = vector.extract_strided_slice %136 {offsets = [0, 256], sizes = [1, 128], strides = [1, 1]} : vector<1x384xf32> to vector<1x128xf32>
    %155 = arith.mulf %144, %154 : vector<1x128xf32>
    %156 = arith.addf %153, %155 : vector<1x128xf32>
    %157 = math.tanh %156 : vector<1x128xf32>
    %cst_60 = arith.constant 1.000000e+00 : f32
    %158 = vector.broadcast %cst_60 : f32 to vector<1x128xf32>
    %159 = arith.subf %158, %152 : vector<1x128xf32>
    %160 = arith.mulf %159, %157 : vector<1x128xf32>
    %161 = arith.mulf %152, %102 : vector<1x128xf32>
    %162 = arith.addf %160, %161 : vector<1x128xf32>
    %163 = arith.truncf %162 : vector<1x128xf32> to vector<1x128xbf16>
    %c0_61 = arith.constant 0 : index
    %c0_62 = arith.constant 0 : index
    %164 = vector.load %arg7[%c0_61, %c0_62] : memref<128x128xbf16, #tpu.memory_space<vmem>>, vector<128x128xbf16>
    %cst_63 = arith.constant dense<0.000000e+00> : vector<1x128xf32>
    %165 = tpu.matmul %163, %164, %cst_63 {dimension_numbers = #tpu.dot_dimension_numbers<[1], [0], [0], [1], [0, 0, 1, 1], [], []>} : vector<1x128xbf16>, vector<128x128xbf16>, vector<1x128xf32> -> vector<1x128xf32>
    %c0_64 = arith.constant 0 : index
    %c0_65 = arith.constant 0 : index
    %166 = vector.load %arg8[%c0_64, %c0_65] : memref<1x128xf32, #tpu.memory_space<vmem>>, vector<1x128xf32>
    %167 = arith.addf %165, %166 : vector<1x128xf32>
    %cst_66 = arith.constant dense<0xFF800000> : vector<1xf32>
    %168 = vector.multi_reduction <maximumf>, %167, %cst_66 [1] : vector<1x128xf32> to vector<1xf32>
    %169 = vector.shape_cast %168 : vector<1xf32> to vector<1x1xf32>
    %170 = vector.broadcast %169 : vector<1x1xf32> to vector<1x128xf32>
    %171 = arith.subf %167, %170 : vector<1x128xf32>
    %172 = math.exp %171 : vector<1x128xf32>
    %cst_67 = arith.constant dense<0.000000e+00> : vector<1xf32>
    %173 = vector.multi_reduction <add>, %172, %cst_67 [1] : vector<1x128xf32> to vector<1xf32>
    %174 = vector.shape_cast %173 : vector<1xf32> to vector<1x1xf32>
    %175 = math.log %174 : vector<1x1xf32>
    %176 = arith.addf %175, %169 : vector<1x1xf32>
    %177 = vector.broadcast %176 : vector<1x1xf32> to vector<1x128xf32>
    %178 = arith.subf %167, %177 : vector<1x128xf32>
    %179 = arith.index_cast %c2_i32 : i32 to index
    %c0_68 = arith.constant 0 : index
    %180 = vector.load %arg9[%179, %c0_68] : memref<8x128xf32, #tpu.memory_space<vmem>>, vector<1x128xf32>
    tpu.vector_store %arg9[%179, %c0_68], %178 {strides = array<i32>} : memref<8x128xf32, #tpu.memory_space<vmem>>, vector<1x128xf32>,
    %c3_i32 = arith.constant 3 : i32
    %181 = arith.index_cast %c3_i32 : i32 to index
    %182 = memref.load %arg0[%181] : memref<8xi32, #tpu.memory_space<smem>>
    %183 = arith.index_cast %182 : i32 to index
    %c0_69 = arith.constant 0 : index
    %184 = vector.load %arg1[%183, %c0_69] : memref<64x128xf32, #tpu.memory_space<vmem>>, vector<1x128xf32>
    %cst_70 = arith.constant 0.000000e+00 : f32
    %185 = vector.broadcast %cst_70 : f32 to vector<1x128xf32>
    %186 = arith.maximumf %184, %185 : vector<1x128xf32>
    %187 = arith.truncf %186 : vector<1x128xf32> to vector<1x128xbf16>
    %188 = arith.truncf %162 : vector<1x128xf32> to vector<1x128xbf16>
    %c0_71 = arith.constant 0 : index
    %c0_72 = arith.constant 0 : index
    %189 = vector.load %arg3[%c0_71, %c0_72] : memref<128x384xbf16, #tpu.memory_space<vmem>>, vector<128x384xbf16>
    %cst_73 = arith.constant dense<0.000000e+00> : vector<1x384xf32>
    %190 = tpu.matmul %187, %189, %cst_73 {dimension_numbers = #tpu.dot_dimension_numbers<[1], [0], [0], [1], [0, 0, 1, 1], [], []>} : vector<1x128xbf16>, vector<128x384xbf16>, vector<1x384xf32> -> vector<1x384xf32>
    %c0_74 = arith.constant 0 : index
    %c0_75 = arith.constant 0 : index
    %191 = vector.load %arg5[%c0_74, %c0_75] : memref<1x384xf32, #tpu.memory_space<vmem>>, vector<1x384xf32>
    %192 = arith.addf %190, %191 : vector<1x384xf32>
    %c0_76 = arith.constant 0 : index
    %c0_77 = arith.constant 0 : index
    %193 = vector.load %arg4[%c0_76, %c0_77] : memref<128x384xbf16, #tpu.memory_space<vmem>>, vector<128x384xbf16>
    %cst_78 = arith.constant dense<0.000000e+00> : vector<1x384xf32>
    %194 = tpu.matmul %188, %193, %cst_78 {dimension_numbers = #tpu.dot_dimension_numbers<[1], [0], [0], [1], [0, 0, 1, 1], [], []>} : vector<1x128xbf16>, vector<128x384xbf16>, vector<1x384xf32> -> vector<1x384xf32>
    %c0_79 = arith.constant 0 : index
    %c0_80 = arith.constant 0 : index
    %195 = vector.load %arg6[%c0_79, %c0_80] : memref<1x384xf32, #tpu.memory_space<vmem>>, vector<1x384xf32>
    %196 = arith.addf %194, %195 : vector<1x384xf32>
    %197 = vector.extract_strided_slice %192 {offsets = [0, 0], sizes = [1, 128], strides = [1, 1]} : vector<1x384xf32> to vector<1x128xf32>
    %198 = vector.extract_strided_slice %196 {offsets = [0, 0], sizes = [1, 128], strides = [1, 1]} : vector<1x384xf32> to vector<1x128xf32>
    %199 = arith.addf %197, %198 : vector<1x128xf32>
    %200 = arith.negf %199 : vector<1x128xf32>
    %201 = math.exp %200 : vector<1x128xf32>
    %cst_81 = arith.constant 1.000000e+00 : f32
    %202 = vector.broadcast %cst_81 : f32 to vector<1x128xf32>
    %203 = arith.addf %202, %201 : vector<1x128xf32>
    %204 = arith.divf %202, %203 : vector<1x128xf32>
    %205 = vector.extract_strided_slice %192 {offsets = [0, 128], sizes = [1, 128], strides = [1, 1]} : vector<1x384xf32> to vector<1x128xf32>
    %206 = vector.extract_strided_slice %196 {offsets = [0, 128], sizes = [1, 128], strides = [1, 1]} : vector<1x384xf32> to vector<1x128xf32>
    %207 = arith.addf %205, %206 : vector<1x128xf32>
    %208 = arith.negf %207 : vector<1x128xf32>
    %209 = math.exp %208 : vector<1x128xf32>
    %cst_82 = arith.constant 1.000000e+00 : f32
    %210 = vector.broadcast %cst_82 : f32 to vector<1x128xf32>
    %211 = arith.addf %210, %209 : vector<1x128xf32>
    %212 = arith.divf %210, %211 : vector<1x128xf32>
    %213 = vector.extract_strided_slice %192 {offsets = [0, 256], sizes = [1, 128], strides = [1, 1]} : vector<1x384xf32> to vector<1x128xf32>
    %214 = vector.extract_strided_slice %196 {offsets = [0, 256], sizes = [1, 128], strides = [1, 1]} : vector<1x384xf32> to vector<1x128xf32>
    %215 = arith.mulf %204, %214 : vector<1x128xf32>
    %216 = arith.addf %213, %215 : vector<1x128xf32>
    %217 = math.tanh %216 : vector<1x128xf32>
    %cst_83 = arith.constant 1.000000e+00 : f32
    %218 = vector.broadcast %cst_83 : f32 to vector<1x128xf32>
    %219 = arith.subf %218, %212 : vector<1x128xf32>
    %220 = arith.mulf %219, %217 : vector<1x128xf32>
    %221 = arith.mulf %212, %162 : vector<1x128xf32>
    %222 = arith.addf %220, %221 : vector<1x128xf32>
    %223 = arith.truncf %222 : vector<1x128xf32> to vector<1x128xbf16>
    %c0_84 = arith.constant 0 : index
    %c0_85 = arith.constant 0 : index
    %224 = vector.load %arg7[%c0_84, %c0_85] : memref<128x128xbf16, #tpu.memory_space<vmem>>, vector<128x128xbf16>
    %cst_86 = arith.constant dense<0.000000e+00> : vector<1x128xf32>
    %225 = tpu.matmul %223, %224, %cst_86 {dimension_numbers = #tpu.dot_dimension_numbers<[1], [0], [0], [1], [0, 0, 1, 1], [], []>} : vector<1x128xbf16>, vector<128x128xbf16>, vector<1x128xf32> -> vector<1x128xf32>
    %c0_87 = arith.constant 0 : index
    %c0_88 = arith.constant 0 : index
    %226 = vector.load %arg8[%c0_87, %c0_88] : memref<1x128xf32, #tpu.memory_space<vmem>>, vector<1x128xf32>
    %227 = arith.addf %225, %226 : vector<1x128xf32>
    %cst_89 = arith.constant dense<0xFF800000> : vector<1xf32>
    %228 = vector.multi_reduction <maximumf>, %227, %cst_89 [1] : vector<1x128xf32> to vector<1xf32>
    %229 = vector.shape_cast %228 : vector<1xf32> to vector<1x1xf32>
    %230 = vector.broadcast %229 : vector<1x1xf32> to vector<1x128xf32>
    %231 = arith.subf %227, %230 : vector<1x128xf32>
    %232 = math.exp %231 : vector<1x128xf32>
    %cst_90 = arith.constant dense<0.000000e+00> : vector<1xf32>
    %233 = vector.multi_reduction <add>, %232, %cst_90 [1] : vector<1x128xf32> to vector<1xf32>
    %234 = vector.shape_cast %233 : vector<1xf32> to vector<1x1xf32>
    %235 = math.log %234 : vector<1x1xf32>
    %236 = arith.addf %235, %229 : vector<1x1xf32>
    %237 = vector.broadcast %236 : vector<1x1xf32> to vector<1x128xf32>
    %238 = arith.subf %227, %237 : vector<1x128xf32>
    %239 = arith.index_cast %c3_i32 : i32 to index
    %c0_91 = arith.constant 0 : index
    %240 = vector.load %arg9[%239, %c0_91] : memref<8x128xf32, #tpu.memory_space<vmem>>, vector<1x128xf32>
    tpu.vector_store %arg9[%239, %c0_91], %238 {strides = array<i32>} : memref<8x128xf32, #tpu.memory_space<vmem>>, vector<1x128xf32>,
    %c4_i32 = arith.constant 4 : i32
    %241 = arith.index_cast %c4_i32 : i32 to index
    %242 = memref.load %arg0[%241] : memref<8xi32, #tpu.memory_space<smem>>
    %243 = arith.index_cast %242 : i32 to index
    %c0_92 = arith.constant 0 : index
    %244 = vector.load %arg1[%243, %c0_92] : memref<64x128xf32, #tpu.memory_space<vmem>>, vector<1x128xf32>
    %cst_93 = arith.constant 0.000000e+00 : f32
    %245 = vector.broadcast %cst_93 : f32 to vector<1x128xf32>
    %246 = arith.maximumf %244, %245 : vector<1x128xf32>
    %247 = arith.truncf %246 : vector<1x128xf32> to vector<1x128xbf16>
    %248 = arith.truncf %222 : vector<1x128xf32> to vector<1x128xbf16>
    %c0_94 = arith.constant 0 : index
    %c0_95 = arith.constant 0 : index
    %249 = vector.load %arg3[%c0_94, %c0_95] : memref<128x384xbf16, #tpu.memory_space<vmem>>, vector<128x384xbf16>
    %cst_96 = arith.constant dense<0.000000e+00> : vector<1x384xf32>
    %250 = tpu.matmul %247, %249, %cst_96 {dimension_numbers = #tpu.dot_dimension_numbers<[1], [0], [0], [1], [0, 0, 1, 1], [], []>} : vector<1x128xbf16>, vector<128x384xbf16>, vector<1x384xf32> -> vector<1x384xf32>
    %c0_97 = arith.constant 0 : index
    %c0_98 = arith.constant 0 : index
    %251 = vector.load %arg5[%c0_97, %c0_98] : memref<1x384xf32, #tpu.memory_space<vmem>>, vector<1x384xf32>
    %252 = arith.addf %250, %251 : vector<1x384xf32>
    %c0_99 = arith.constant 0 : index
    %c0_100 = arith.constant 0 : index
    %253 = vector.load %arg4[%c0_99, %c0_100] : memref<128x384xbf16, #tpu.memory_space<vmem>>, vector<128x384xbf16>
    %cst_101 = arith.constant dense<0.000000e+00> : vector<1x384xf32>
    %254 = tpu.matmul %248, %253, %cst_101 {dimension_numbers = #tpu.dot_dimension_numbers<[1], [0], [0], [1], [0, 0, 1, 1], [], []>} : vector<1x128xbf16>, vector<128x384xbf16>, vector<1x384xf32> -> vector<1x384xf32>
    %c0_102 = arith.constant 0 : index
    %c0_103 = arith.constant 0 : index
    %255 = vector.load %arg6[%c0_102, %c0_103] : memref<1x384xf32, #tpu.memory_space<vmem>>, vector<1x384xf32>
    %256 = arith.addf %254, %255 : vector<1x384xf32>
    %257 = vector.extract_strided_slice %252 {offsets = [0, 0], sizes = [1, 128], strides = [1, 1]} : vector<1x384xf32> to vector<1x128xf32>
    %258 = vector.extract_strided_slice %256 {offsets = [0, 0], sizes = [1, 128], strides = [1, 1]} : vector<1x384xf32> to vector<1x128xf32>
    %259 = arith.addf %257, %258 : vector<1x128xf32>
    %260 = arith.negf %259 : vector<1x128xf32>
    %261 = math.exp %260 : vector<1x128xf32>
    %cst_104 = arith.constant 1.000000e+00 : f32
    %262 = vector.broadcast %cst_104 : f32 to vector<1x128xf32>
    %263 = arith.addf %262, %261 : vector<1x128xf32>
    %264 = arith.divf %262, %263 : vector<1x128xf32>
    %265 = vector.extract_strided_slice %252 {offsets = [0, 128], sizes = [1, 128], strides = [1, 1]} : vector<1x384xf32> to vector<1x128xf32>
    %266 = vector.extract_strided_slice %256 {offsets = [0, 128], sizes = [1, 128], strides = [1, 1]} : vector<1x384xf32> to vector<1x128xf32>
    %267 = arith.addf %265, %266 : vector<1x128xf32>
    %268 = arith.negf %267 : vector<1x128xf32>
    %269 = math.exp %268 : vector<1x128xf32>
    %cst_105 = arith.constant 1.000000e+00 : f32
    %270 = vector.broadcast %cst_105 : f32 to vector<1x128xf32>
    %271 = arith.addf %270, %269 : vector<1x128xf32>
    %272 = arith.divf %270, %271 : vector<1x128xf32>
    %273 = vector.extract_strided_slice %252 {offsets = [0, 256], sizes = [1, 128], strides = [1, 1]} : vector<1x384xf32> to vector<1x128xf32>
    %274 = vector.extract_strided_slice %256 {offsets = [0, 256], sizes = [1, 128], strides = [1, 1]} : vector<1x384xf32> to vector<1x128xf32>
    %275 = arith.mulf %264, %274 : vector<1x128xf32>
    %276 = arith.addf %273, %275 : vector<1x128xf32>
    %277 = math.tanh %276 : vector<1x128xf32>
    %cst_106 = arith.constant 1.000000e+00 : f32
    %278 = vector.broadcast %cst_106 : f32 to vector<1x128xf32>
    %279 = arith.subf %278, %272 : vector<1x128xf32>
    %280 = arith.mulf %279, %277 : vector<1x128xf32>
    %281 = arith.mulf %272, %222 : vector<1x128xf32>
    %282 = arith.addf %280, %281 : vector<1x128xf32>
    %283 = arith.truncf %282 : vector<1x128xf32> to vector<1x128xbf16>
    %c0_107 = arith.constant 0 : index
    %c0_108 = arith.constant 0 : index
    %284 = vector.load %arg7[%c0_107, %c0_108] : memref<128x128xbf16, #tpu.memory_space<vmem>>, vector<128x128xbf16>
    %cst_109 = arith.constant dense<0.000000e+00> : vector<1x128xf32>
    %285 = tpu.matmul %283, %284, %cst_109 {dimension_numbers = #tpu.dot_dimension_numbers<[1], [0], [0], [1], [0, 0, 1, 1], [], []>} : vector<1x128xbf16>, vector<128x128xbf16>, vector<1x128xf32> -> vector<1x128xf32>
    %c0_110 = arith.constant 0 : index
    %c0_111 = arith.constant 0 : index
    %286 = vector.load %arg8[%c0_110, %c0_111] : memref<1x128xf32, #tpu.memory_space<vmem>>, vector<1x128xf32>
    %287 = arith.addf %285, %286 : vector<1x128xf32>
    %cst_112 = arith.constant dense<0xFF800000> : vector<1xf32>
    %288 = vector.multi_reduction <maximumf>, %287, %cst_112 [1] : vector<1x128xf32> to vector<1xf32>
    %289 = vector.shape_cast %288 : vector<1xf32> to vector<1x1xf32>
    %290 = vector.broadcast %289 : vector<1x1xf32> to vector<1x128xf32>
    %291 = arith.subf %287, %290 : vector<1x128xf32>
    %292 = math.exp %291 : vector<1x128xf32>
    %cst_113 = arith.constant dense<0.000000e+00> : vector<1xf32>
    %293 = vector.multi_reduction <add>, %292, %cst_113 [1] : vector<1x128xf32> to vector<1xf32>
    %294 = vector.shape_cast %293 : vector<1xf32> to vector<1x1xf32>
    %295 = math.log %294 : vector<1x1xf32>
    %296 = arith.addf %295, %289 : vector<1x1xf32>
    %297 = vector.broadcast %296 : vector<1x1xf32> to vector<1x128xf32>
    %298 = arith.subf %287, %297 : vector<1x128xf32>
    %299 = arith.index_cast %c4_i32 : i32 to index
    %c0_114 = arith.constant 0 : index
    %300 = vector.load %arg9[%299, %c0_114] : memref<8x128xf32, #tpu.memory_space<vmem>>, vector<1x128xf32>
    tpu.vector_store %arg9[%299, %c0_114], %298 {strides = array<i32>} : memref<8x128xf32, #tpu.memory_space<vmem>>, vector<1x128xf32>,
    %c5_i32 = arith.constant 5 : i32
    %301 = arith.index_cast %c5_i32 : i32 to index
    %302 = memref.load %arg0[%301] : memref<8xi32, #tpu.memory_space<smem>>
    %303 = arith.index_cast %302 : i32 to index
    %c0_115 = arith.constant 0 : index
    %304 = vector.load %arg1[%303, %c0_115] : memref<64x128xf32, #tpu.memory_space<vmem>>, vector<1x128xf32>
    %cst_116 = arith.constant 0.000000e+00 : f32
    %305 = vector.broadcast %cst_116 : f32 to vector<1x128xf32>
    %306 = arith.maximumf %304, %305 : vector<1x128xf32>
    %307 = arith.truncf %306 : vector<1x128xf32> to vector<1x128xbf16>
    %308 = arith.truncf %282 : vector<1x128xf32> to vector<1x128xbf16>
    %c0_117 = arith.constant 0 : index
    %c0_118 = arith.constant 0 : index
    %309 = vector.load %arg3[%c0_117, %c0_118] : memref<128x384xbf16, #tpu.memory_space<vmem>>, vector<128x384xbf16>
    %cst_119 = arith.constant dense<0.000000e+00> : vector<1x384xf32>
    %310 = tpu.matmul %307, %309, %cst_119 {dimension_numbers = #tpu.dot_dimension_numbers<[1], [0], [0], [1], [0, 0, 1, 1], [], []>} : vector<1x128xbf16>, vector<128x384xbf16>, vector<1x384xf32> -> vector<1x384xf32>
    %c0_120 = arith.constant 0 : index
    %c0_121 = arith.constant 0 : index
    %311 = vector.load %arg5[%c0_120, %c0_121] : memref<1x384xf32, #tpu.memory_space<vmem>>, vector<1x384xf32>
    %312 = arith.addf %310, %311 : vector<1x384xf32>
    %c0_122 = arith.constant 0 : index
    %c0_123 = arith.constant 0 : index
    %313 = vector.load %arg4[%c0_122, %c0_123] : memref<128x384xbf16, #tpu.memory_space<vmem>>, vector<128x384xbf16>
    %cst_124 = arith.constant dense<0.000000e+00> : vector<1x384xf32>
    %314 = tpu.matmul %308, %313, %cst_124 {dimension_numbers = #tpu.dot_dimension_numbers<[1], [0], [0], [1], [0, 0, 1, 1], [], []>} : vector<1x128xbf16>, vector<128x384xbf16>, vector<1x384xf32> -> vector<1x384xf32>
    %c0_125 = arith.constant 0 : index
    %c0_126 = arith.constant 0 : index
    %315 = vector.load %arg6[%c0_125, %c0_126] : memref<1x384xf32, #tpu.memory_space<vmem>>, vector<1x384xf32>
    %316 = arith.addf %314, %315 : vector<1x384xf32>
    %317 = vector.extract_strided_slice %312 {offsets = [0, 0], sizes = [1, 128], strides = [1, 1]} : vector<1x384xf32> to vector<1x128xf32>
    %318 = vector.extract_strided_slice %316 {offsets = [0, 0], sizes = [1, 128], strides = [1, 1]} : vector<1x384xf32> to vector<1x128xf32>
    %319 = arith.addf %317, %318 : vector<1x128xf32>
    %320 = arith.negf %319 : vector<1x128xf32>
    %321 = math.exp %320 : vector<1x128xf32>
    %cst_127 = arith.constant 1.000000e+00 : f32
    %322 = vector.broadcast %cst_127 : f32 to vector<1x128xf32>
    %323 = arith.addf %322, %321 : vector<1x128xf32>
    %324 = arith.divf %322, %323 : vector<1x128xf32>
    %325 = vector.extract_strided_slice %312 {offsets = [0, 128], sizes = [1, 128], strides = [1, 1]} : vector<1x384xf32> to vector<1x128xf32>
    %326 = vector.extract_strided_slice %316 {offsets = [0, 128], sizes = [1, 128], strides = [1, 1]} : vector<1x384xf32> to vector<1x128xf32>
    %327 = arith.addf %325, %326 : vector<1x128xf32>
    %328 = arith.negf %327 : vector<1x128xf32>
    %329 = math.exp %328 : vector<1x128xf32>
    %cst_128 = arith.constant 1.000000e+00 : f32
    %330 = vector.broadcast %cst_128 : f32 to vector<1x128xf32>
    %331 = arith.addf %330, %329 : vector<1x128xf32>
    %332 = arith.divf %330, %331 : vector<1x128xf32>
    %333 = vector.extract_strided_slice %312 {offsets = [0, 256], sizes = [1, 128], strides = [1, 1]} : vector<1x384xf32> to vector<1x128xf32>
    %334 = vector.extract_strided_slice %316 {offsets = [0, 256], sizes = [1, 128], strides = [1, 1]} : vector<1x384xf32> to vector<1x128xf32>
    %335 = arith.mulf %324, %334 : vector<1x128xf32>
    %336 = arith.addf %333, %335 : vector<1x128xf32>
    %337 = math.tanh %336 : vector<1x128xf32>
    %cst_129 = arith.constant 1.000000e+00 : f32
    %338 = vector.broadcast %cst_129 : f32 to vector<1x128xf32>
    %339 = arith.subf %338, %332 : vector<1x128xf32>
    %340 = arith.mulf %339, %337 : vector<1x128xf32>
    %341 = arith.mulf %332, %282 : vector<1x128xf32>
    %342 = arith.addf %340, %341 : vector<1x128xf32>
    %343 = arith.truncf %342 : vector<1x128xf32> to vector<1x128xbf16>
    %c0_130 = arith.constant 0 : index
    %c0_131 = arith.constant 0 : index
    %344 = vector.load %arg7[%c0_130, %c0_131] : memref<128x128xbf16, #tpu.memory_space<vmem>>, vector<128x128xbf16>
    %cst_132 = arith.constant dense<0.000000e+00> : vector<1x128xf32>
    %345 = tpu.matmul %343, %344, %cst_132 {dimension_numbers = #tpu.dot_dimension_numbers<[1], [0], [0], [1], [0, 0, 1, 1], [], []>} : vector<1x128xbf16>, vector<128x128xbf16>, vector<1x128xf32> -> vector<1x128xf32>
    %c0_133 = arith.constant 0 : index
    %c0_134 = arith.constant 0 : index
    %346 = vector.load %arg8[%c0_133, %c0_134] : memref<1x128xf32, #tpu.memory_space<vmem>>, vector<1x128xf32>
    %347 = arith.addf %345, %346 : vector<1x128xf32>
    %cst_135 = arith.constant dense<0xFF800000> : vector<1xf32>
    %348 = vector.multi_reduction <maximumf>, %347, %cst_135 [1] : vector<1x128xf32> to vector<1xf32>
    %349 = vector.shape_cast %348 : vector<1xf32> to vector<1x1xf32>
    %350 = vector.broadcast %349 : vector<1x1xf32> to vector<1x128xf32>
    %351 = arith.subf %347, %350 : vector<1x128xf32>
    %352 = math.exp %351 : vector<1x128xf32>
    %cst_136 = arith.constant dense<0.000000e+00> : vector<1xf32>
    %353 = vector.multi_reduction <add>, %352, %cst_136 [1] : vector<1x128xf32> to vector<1xf32>
    %354 = vector.shape_cast %353 : vector<1xf32> to vector<1x1xf32>
    %355 = math.log %354 : vector<1x1xf32>
    %356 = arith.addf %355, %349 : vector<1x1xf32>
    %357 = vector.broadcast %356 : vector<1x1xf32> to vector<1x128xf32>
    %358 = arith.subf %347, %357 : vector<1x128xf32>
    %359 = arith.index_cast %c5_i32 : i32 to index
    %c0_137 = arith.constant 0 : index
    %360 = vector.load %arg9[%359, %c0_137] : memref<8x128xf32, #tpu.memory_space<vmem>>, vector<1x128xf32>
    tpu.vector_store %arg9[%359, %c0_137], %358 {strides = array<i32>} : memref<8x128xf32, #tpu.memory_space<vmem>>, vector<1x128xf32>,
    %c6_i32 = arith.constant 6 : i32
    %361 = arith.index_cast %c6_i32 : i32 to index
    %362 = memref.load %arg0[%361] : memref<8xi32, #tpu.memory_space<smem>>
    %363 = arith.index_cast %362 : i32 to index
    %c0_138 = arith.constant 0 : index
    %364 = vector.load %arg1[%363, %c0_138] : memref<64x128xf32, #tpu.memory_space<vmem>>, vector<1x128xf32>
    %cst_139 = arith.constant 0.000000e+00 : f32
    %365 = vector.broadcast %cst_139 : f32 to vector<1x128xf32>
    %366 = arith.maximumf %364, %365 : vector<1x128xf32>
    %367 = arith.truncf %366 : vector<1x128xf32> to vector<1x128xbf16>
    %368 = arith.truncf %342 : vector<1x128xf32> to vector<1x128xbf16>
    %c0_140 = arith.constant 0 : index
    %c0_141 = arith.constant 0 : index
    %369 = vector.load %arg3[%c0_140, %c0_141] : memref<128x384xbf16, #tpu.memory_space<vmem>>, vector<128x384xbf16>
    %cst_142 = arith.constant dense<0.000000e+00> : vector<1x384xf32>
    %370 = tpu.matmul %367, %369, %cst_142 {dimension_numbers = #tpu.dot_dimension_numbers<[1], [0], [0], [1], [0, 0, 1, 1], [], []>} : vector<1x128xbf16>, vector<128x384xbf16>, vector<1x384xf32> -> vector<1x384xf32>
    %c0_143 = arith.constant 0 : index
    %c0_144 = arith.constant 0 : index
    %371 = vector.load %arg5[%c0_143, %c0_144] : memref<1x384xf32, #tpu.memory_space<vmem>>, vector<1x384xf32>
    %372 = arith.addf %370, %371 : vector<1x384xf32>
    %c0_145 = arith.constant 0 : index
    %c0_146 = arith.constant 0 : index
    %373 = vector.load %arg4[%c0_145, %c0_146] : memref<128x384xbf16, #tpu.memory_space<vmem>>, vector<128x384xbf16>
    %cst_147 = arith.constant dense<0.000000e+00> : vector<1x384xf32>
    %374 = tpu.matmul %368, %373, %cst_147 {dimension_numbers = #tpu.dot_dimension_numbers<[1], [0], [0], [1], [0, 0, 1, 1], [], []>} : vector<1x128xbf16>, vector<128x384xbf16>, vector<1x384xf32> -> vector<1x384xf32>
    %c0_148 = arith.constant 0 : index
    %c0_149 = arith.constant 0 : index
    %375 = vector.load %arg6[%c0_148, %c0_149] : memref<1x384xf32, #tpu.memory_space<vmem>>, vector<1x384xf32>
    %376 = arith.addf %374, %375 : vector<1x384xf32>
    %377 = vector.extract_strided_slice %372 {offsets = [0, 0], sizes = [1, 128], strides = [1, 1]} : vector<1x384xf32> to vector<1x128xf32>
    %378 = vector.extract_strided_slice %376 {offsets = [0, 0], sizes = [1, 128], strides = [1, 1]} : vector<1x384xf32> to vector<1x128xf32>
    %379 = arith.addf %377, %378 : vector<1x128xf32>
    %380 = arith.negf %379 : vector<1x128xf32>
    %381 = math.exp %380 : vector<1x128xf32>
    %cst_150 = arith.constant 1.000000e+00 : f32
    %382 = vector.broadcast %cst_150 : f32 to vector<1x128xf32>
    %383 = arith.addf %382, %381 : vector<1x128xf32>
    %384 = arith.divf %382, %383 : vector<1x128xf32>
    %385 = vector.extract_strided_slice %372 {offsets = [0, 128], sizes = [1, 128], strides = [1, 1]} : vector<1x384xf32> to vector<1x128xf32>
    %386 = vector.extract_strided_slice %376 {offsets = [0, 128], sizes = [1, 128], strides = [1, 1]} : vector<1x384xf32> to vector<1x128xf32>
    %387 = arith.addf %385, %386 : vector<1x128xf32>
    %388 = arith.negf %387 : vector<1x128xf32>
    %389 = math.exp %388 : vector<1x128xf32>
    %cst_151 = arith.constant 1.000000e+00 : f32
    %390 = vector.broadcast %cst_151 : f32 to vector<1x128xf32>
    %391 = arith.addf %390, %389 : vector<1x128xf32>
    %392 = arith.divf %390, %391 : vector<1x128xf32>
    %393 = vector.extract_strided_slice %372 {offsets = [0, 256], sizes = [1, 128], strides = [1, 1]} : vector<1x384xf32> to vector<1x128xf32>
    %394 = vector.extract_strided_slice %376 {offsets = [0, 256], sizes = [1, 128], strides = [1, 1]} : vector<1x384xf32> to vector<1x128xf32>
    %395 = arith.mulf %384, %394 : vector<1x128xf32>
    %396 = arith.addf %393, %395 : vector<1x128xf32>
    %397 = math.tanh %396 : vector<1x128xf32>
    %cst_152 = arith.constant 1.000000e+00 : f32
    %398 = vector.broadcast %cst_152 : f32 to vector<1x128xf32>
    %399 = arith.subf %398, %392 : vector<1x128xf32>
    %400 = arith.mulf %399, %397 : vector<1x128xf32>
    %401 = arith.mulf %392, %342 : vector<1x128xf32>
    %402 = arith.addf %400, %401 : vector<1x128xf32>
    %403 = arith.truncf %402 : vector<1x128xf32> to vector<1x128xbf16>
    %c0_153 = arith.constant 0 : index
    %c0_154 = arith.constant 0 : index
    %404 = vector.load %arg7[%c0_153, %c0_154] : memref<128x128xbf16, #tpu.memory_space<vmem>>, vector<128x128xbf16>
    %cst_155 = arith.constant dense<0.000000e+00> : vector<1x128xf32>
    %405 = tpu.matmul %403, %404, %cst_155 {dimension_numbers = #tpu.dot_dimension_numbers<[1], [0], [0], [1], [0, 0, 1, 1], [], []>} : vector<1x128xbf16>, vector<128x128xbf16>, vector<1x128xf32> -> vector<1x128xf32>
    %c0_156 = arith.constant 0 : index
    %c0_157 = arith.constant 0 : index
    %406 = vector.load %arg8[%c0_156, %c0_157] : memref<1x128xf32, #tpu.memory_space<vmem>>, vector<1x128xf32>
    %407 = arith.addf %405, %406 : vector<1x128xf32>
    %cst_158 = arith.constant dense<0xFF800000> : vector<1xf32>
    %408 = vector.multi_reduction <maximumf>, %407, %cst_158 [1] : vector<1x128xf32> to vector<1xf32>
    %409 = vector.shape_cast %408 : vector<1xf32> to vector<1x1xf32>
    %410 = vector.broadcast %409 : vector<1x1xf32> to vector<1x128xf32>
    %411 = arith.subf %407, %410 : vector<1x128xf32>
    %412 = math.exp %411 : vector<1x128xf32>
    %cst_159 = arith.constant dense<0.000000e+00> : vector<1xf32>
    %413 = vector.multi_reduction <add>, %412, %cst_159 [1] : vector<1x128xf32> to vector<1xf32>
    %414 = vector.shape_cast %413 : vector<1xf32> to vector<1x1xf32>
    %415 = math.log %414 : vector<1x1xf32>
    %416 = arith.addf %415, %409 : vector<1x1xf32>
    %417 = vector.broadcast %416 : vector<1x1xf32> to vector<1x128xf32>
    %418 = arith.subf %407, %417 : vector<1x128xf32>
    %419 = arith.index_cast %c6_i32 : i32 to index
    %c0_160 = arith.constant 0 : index
    %420 = vector.load %arg9[%419, %c0_160] : memref<8x128xf32, #tpu.memory_space<vmem>>, vector<1x128xf32>
    tpu.vector_store %arg9[%419, %c0_160], %418 {strides = array<i32>} : memref<8x128xf32, #tpu.memory_space<vmem>>, vector<1x128xf32>,
    %c7_i32 = arith.constant 7 : i32
    %421 = arith.index_cast %c7_i32 : i32 to index
    %422 = memref.load %arg0[%421] : memref<8xi32, #tpu.memory_space<smem>>
    %423 = arith.index_cast %422 : i32 to index
    %c0_161 = arith.constant 0 : index
    %424 = vector.load %arg1[%423, %c0_161] : memref<64x128xf32, #tpu.memory_space<vmem>>, vector<1x128xf32>
    %cst_162 = arith.constant 0.000000e+00 : f32
    %425 = vector.broadcast %cst_162 : f32 to vector<1x128xf32>
    %426 = arith.maximumf %424, %425 : vector<1x128xf32>
    %427 = arith.truncf %426 : vector<1x128xf32> to vector<1x128xbf16>
    %428 = arith.truncf %402 : vector<1x128xf32> to vector<1x128xbf16>
    %c0_163 = arith.constant 0 : index
    %c0_164 = arith.constant 0 : index
    %429 = vector.load %arg3[%c0_163, %c0_164] : memref<128x384xbf16, #tpu.memory_space<vmem>>, vector<128x384xbf16>
    %cst_165 = arith.constant dense<0.000000e+00> : vector<1x384xf32>
    %430 = tpu.matmul %427, %429, %cst_165 {dimension_numbers = #tpu.dot_dimension_numbers<[1], [0], [0], [1], [0, 0, 1, 1], [], []>} : vector<1x128xbf16>, vector<128x384xbf16>, vector<1x384xf32> -> vector<1x384xf32>
    %c0_166 = arith.constant 0 : index
    %c0_167 = arith.constant 0 : index
    %431 = vector.load %arg5[%c0_166, %c0_167] : memref<1x384xf32, #tpu.memory_space<vmem>>, vector<1x384xf32>
    %432 = arith.addf %430, %431 : vector<1x384xf32>
    %c0_168 = arith.constant 0 : index
    %c0_169 = arith.constant 0 : index
    %433 = vector.load %arg4[%c0_168, %c0_169] : memref<128x384xbf16, #tpu.memory_space<vmem>>, vector<128x384xbf16>
    %cst_170 = arith.constant dense<0.000000e+00> : vector<1x384xf32>
    %434 = tpu.matmul %428, %433, %cst_170 {dimension_numbers = #tpu.dot_dimension_numbers<[1], [0], [0], [1], [0, 0, 1, 1], [], []>} : vector<1x128xbf16>, vector<128x384xbf16>, vector<1x384xf32> -> vector<1x384xf32>
    %c0_171 = arith.constant 0 : index
    %c0_172 = arith.constant 0 : index
    %435 = vector.load %arg6[%c0_171, %c0_172] : memref<1x384xf32, #tpu.memory_space<vmem>>, vector<1x384xf32>
    %436 = arith.addf %434, %435 : vector<1x384xf32>
    %437 = vector.extract_strided_slice %432 {offsets = [0, 0], sizes = [1, 128], strides = [1, 1]} : vector<1x384xf32> to vector<1x128xf32>
    %438 = vector.extract_strided_slice %436 {offsets = [0, 0], sizes = [1, 128], strides = [1, 1]} : vector<1x384xf32> to vector<1x128xf32>
    %439 = arith.addf %437, %438 : vector<1x128xf32>
    %440 = arith.negf %439 : vector<1x128xf32>
    %441 = math.exp %440 : vector<1x128xf32>
    %cst_173 = arith.constant 1.000000e+00 : f32
    %442 = vector.broadcast %cst_173 : f32 to vector<1x128xf32>
    %443 = arith.addf %442, %441 : vector<1x128xf32>
    %444 = arith.divf %442, %443 : vector<1x128xf32>
    %445 = vector.extract_strided_slice %432 {offsets = [0, 128], sizes = [1, 128], strides = [1, 1]} : vector<1x384xf32> to vector<1x128xf32>
    %446 = vector.extract_strided_slice %436 {offsets = [0, 128], sizes = [1, 128], strides = [1, 1]} : vector<1x384xf32> to vector<1x128xf32>
    %447 = arith.addf %445, %446 : vector<1x128xf32>
    %448 = arith.negf %447 : vector<1x128xf32>
    %449 = math.exp %448 : vector<1x128xf32>
    %cst_174 = arith.constant 1.000000e+00 : f32
    %450 = vector.broadcast %cst_174 : f32 to vector<1x128xf32>
    %451 = arith.addf %450, %449 : vector<1x128xf32>
    %452 = arith.divf %450, %451 : vector<1x128xf32>
    %453 = vector.extract_strided_slice %432 {offsets = [0, 256], sizes = [1, 128], strides = [1, 1]} : vector<1x384xf32> to vector<1x128xf32>
    %454 = vector.extract_strided_slice %436 {offsets = [0, 256], sizes = [1, 128], strides = [1, 1]} : vector<1x384xf32> to vector<1x128xf32>
    %455 = arith.mulf %444, %454 : vector<1x128xf32>
    %456 = arith.addf %453, %455 : vector<1x128xf32>
    %457 = math.tanh %456 : vector<1x128xf32>
    %cst_175 = arith.constant 1.000000e+00 : f32
    %458 = vector.broadcast %cst_175 : f32 to vector<1x128xf32>
    %459 = arith.subf %458, %452 : vector<1x128xf32>
    %460 = arith.mulf %459, %457 : vector<1x128xf32>
    %461 = arith.mulf %452, %402 : vector<1x128xf32>
    %462 = arith.addf %460, %461 : vector<1x128xf32>
    %463 = arith.truncf %462 : vector<1x128xf32> to vector<1x128xbf16>
    %c0_176 = arith.constant 0 : index
    %c0_177 = arith.constant 0 : index
    %464 = vector.load %arg7[%c0_176, %c0_177] : memref<128x128xbf16, #tpu.memory_space<vmem>>, vector<128x128xbf16>
    %cst_178 = arith.constant dense<0.000000e+00> : vector<1x128xf32>
    %465 = tpu.matmul %463, %464, %cst_178 {dimension_numbers = #tpu.dot_dimension_numbers<[1], [0], [0], [1], [0, 0, 1, 1], [], []>} : vector<1x128xbf16>, vector<128x128xbf16>, vector<1x128xf32> -> vector<1x128xf32>
    %c0_179 = arith.constant 0 : index
    %c0_180 = arith.constant 0 : index
    %466 = vector.load %arg8[%c0_179, %c0_180] : memref<1x128xf32, #tpu.memory_space<vmem>>, vector<1x128xf32>
    %467 = arith.addf %465, %466 : vector<1x128xf32>
    %cst_181 = arith.constant dense<0xFF800000> : vector<1xf32>
    %468 = vector.multi_reduction <maximumf>, %467, %cst_181 [1] : vector<1x128xf32> to vector<1xf32>
    %469 = vector.shape_cast %468 : vector<1xf32> to vector<1x1xf32>
    %470 = vector.broadcast %469 : vector<1x1xf32> to vector<1x128xf32>
    %471 = arith.subf %467, %470 : vector<1x128xf32>
    %472 = math.exp %471 : vector<1x128xf32>
    %cst_182 = arith.constant dense<0.000000e+00> : vector<1xf32>
    %473 = vector.multi_reduction <add>, %472, %cst_182 [1] : vector<1x128xf32> to vector<1xf32>
    %474 = vector.shape_cast %473 : vector<1xf32> to vector<1x1xf32>
    %475 = math.log %474 : vector<1x1xf32>
    %476 = arith.addf %475, %469 : vector<1x1xf32>
    %477 = vector.broadcast %476 : vector<1x1xf32> to vector<1x128xf32>
    %478 = arith.subf %467, %477 : vector<1x128xf32>
    %479 = arith.index_cast %c7_i32 : i32 to index
    %c0_183 = arith.constant 0 : index
    %480 = vector.load %arg9[%479, %c0_183] : memref<8x128xf32, #tpu.memory_space<vmem>>, vector<1x128xf32>
    tpu.vector_store %arg9[%479, %c0_183], %478 {strides = array<i32>} : memref<8x128xf32, #tpu.memory_space<vmem>>, vector<1x128xf32>,
    %c8_i32 = arith.constant 8 : i32
    %c0_184 = arith.constant 0 : index
    %c0_185 = arith.constant 0 : index
    %481 = vector.load %arg10[%c0_184, %c0_185] : memref<1x128xf32, #tpu.memory_space<vmem>>, vector<1x128xf32>
    tpu.vector_store %arg10[%c0_184, %c0_185], %462 {strides = array<i32>} : memref<1x128xf32, #tpu.memory_space<vmem>>, vector<1x128xf32>,
    return
  }
}

</mosaic_0001>

<llo_original>
// kernel: tpu_custom_call.1
$region0: #{tpu_custom_call.1}
  #allocation0 [shape = 'u32[]', space=smem, size = 0x4, offset = 0x4, fixed_abs, tag = 'smem constant byte address 0x4 - core index']
  #allocation1 [shape = 'u32[144,128]{1,0:T(1,128)}', space=vmem, size = 0x12000, scoped, tag = 'internal scratch']
  %s0 = inlined_call_operand.hbm [shape: s32[8], index: 0, kind: input, shape index: {}]
  %s1 = inlined_call_operand.hbm [shape: f32[64,128], index: 1, kind: input, shape index: {}]
  %s2 = inlined_call_operand.vmem [shape: f32[1,128], index: 2, kind: input, shape index: {}]
  %s3 = inlined_call_operand.hbm [shape: bf16[128,384], index: 3, kind: input, shape index: {}]
  %s4 = inlined_call_operand.hbm [shape: bf16[128,384], index: 4, kind: input, shape index: {}]
  %s5 = inlined_call_operand.vmem [shape: f32[1,384], index: 5, kind: input, shape index: {}]
  %s6 = inlined_call_operand.vmem [shape: f32[1,384], index: 6, kind: input, shape index: {}]
  %s7 = inlined_call_operand.hbm [shape: bf16[128,128], index: 7, kind: input, shape index: {}]
  %s8 = inlined_call_operand.vmem [shape: f32[1,128], index: 8, kind: input, shape index: {}]
  %s9 = inlined_call_operand.hbm [shape: f32[8,128], index: 9, kind: output, shape index: {0}]
  %s10 = inlined_call_operand.hbm [shape: f32[1,128], index: 10, kind: output, shape index: {1}]
  %11 = xla_tuple %s9, %s10
  %s12 = sld [smem:[#allocation0]]
  $region74: #{tpu_custom_call.1} parent=0
    _
  %s14 = ssub.s32 1, %s12
  %s15 = scalar_select 0, %s14, %s12
  $region1: #{tpu_custom_call.1} parent=0
    #allocation2 [shape = 'u8[512]{0}', space=smem, size = 0x200, scoped, tag = 'input window, operand 0, single buffered']
    #allocation3 [shape = 's32[1]{0}', space=sflag, size = 0x4, scoped, tag = 'scoped memory for tpu_custom_call.1']
    #allocation4 [shape = 's32[1]{0}', space=sflag, size = 0x4, scoped, tag = 'scoped memory for tpu_custom_call.1']
    #allocation5 [shape = 's32[1]{0}', space=sflag, size = 0x4, scoped, tag = 'scoped memory for tpu_custom_call.1']
    #allocation6 [shape = 'u8[32768]{0}', space=vmem, size = 0x8000, scoped, tag = 'input window, operand 1, single buffered']
    #allocation7 [shape = 'u8[98304]{0}', space=vmem, size = 0x18000, scoped, tag = 'input window, operand 3, single buffered']
    #allocation8 [shape = 's32[1]{0}', space=sflag, size = 0x4, scoped, tag = 'scoped memory for tpu_custom_call.1']
    #allocation9 [shape = 'u8[98304]{0}', space=vmem, size = 0x18000, scoped, tag = 'input window, operand 4, single buffered']
    #allocation10 [shape = 'u8[32768]{0}', space=vmem, size = 0x8000, scoped, tag = 'input window, operand 7, single buffered']
    #allocation11 [shape = 's32[1]{0}', space=sflag, size = 0x4, scoped, tag = 'scoped memory for tpu_custom_call.1']
    #allocation12 [shape = 'u8[4096]{0}', space=vmem, size = 0x1000, scoped, tag = 'output window, operand 0, single buffered']
    #allocation13 [shape = 'u8[512]{0}', space=vmem, size = 0x400, scoped, tag = 'output window, operand 1, single buffered']
    #allocation14 [shape = 's32[1]{0}', space=sflag, size = 0x4, scoped, tag = 'scoped memory for tpu_custom_call.1']
    %16 = vsyncpa [#allocation5], 0
    %17 = vsyncpa [#allocation3], 0
    %18 = vsyncpa [#allocation8], 0
    %19 = vsyncpa [#allocation11], 0
    %20 = vsyncpa [#allocation4], 0
    %21 = vsyncpa [#allocation14], 0
    // Predicated region
    $region2: #{tpu_custom_call.1} parent=1 // pred_check
      _
    $region3: #{tpu_custom_call.1} parent=1 // pred_check_branch
      %23 = sbr.rel (0) target = $region5
    $region4: #{tpu_custom_call.1} parent=1 // pred_region
      %s25 = ssub.s32 16, 16
      %26 = vsyncadd [#allocation5], %s25
      %29 = dma.hbm_to_smem %s0, 16, [#allocation2], [#allocation5]
    $region5: #{tpu_custom_call.1} parent=1 // pred_fallthru
      _
    // Predicated region
    $region6: #{tpu_custom_call.1} parent=1 // pred_check
      _
    $region7: #{tpu_custom_call.1} parent=1 // pred_check_branch
      %31 = sbr.rel (0) target = $region9
    $region8: #{tpu_custom_call.1} parent=1 // pred_region
      %s33 = ssub.s32 1024, 1024
      %34 = vsyncadd [#allocation3], %s33
      %s35 = sshll.u32 [#allocation6], 4
      %s36 = int_to_ptr.vmem [resolvable:$true] %s35
      %41 = dma.hbm_to_vmem [thread:$0]  %s1, 1024, %s36, [#allocation3], 128, 128, 8
    $region9: #{tpu_custom_call.1} parent=1 // pred_fallthru
      _
    // Predicated region
    $region10: #{tpu_custom_call.1} parent=1 // pred_check
      _
    $region11: #{tpu_custom_call.1} parent=1 // pred_check_branch
      %43 = sbr.rel (0) target = $region13
    $region12: #{tpu_custom_call.1} parent=1 // pred_region
      _
    $region13: #{tpu_custom_call.1} parent=1 // pred_fallthru
      _
    // Predicated region
    $region14: #{tpu_custom_call.1} parent=1 // pred_check
      _
    $region15: #{tpu_custom_call.1} parent=1 // pred_check_branch
      %45 = sbr.rel (0) target = $region17
    $region16: #{tpu_custom_call.1} parent=1 // pred_region
      %s47 = ssub.s32 3072, 3072
      %48 = vsyncadd [#allocation8], %s47
      %s49 = sshll.u32 [#allocation7], 4
      %s50 = int_to_ptr.vmem [resolvable:$true] %s49
      %55 = dma.hbm_to_vmem [thread:$0]  %s3, 3072, %s50, [#allocation8], 192, 192, 12
    $region17: #{tpu_custom_call.1} parent=1 // pred_fallthru
      _
    // Predicated region
    $region18: #{tpu_custom_call.1} parent=1 // pred_check
      _
    $region19: #{tpu_custom_call.1} parent=1 // pred_check_branch
      %57 = sbr.rel (0) target = $region21
    $region20: #{tpu_custom_call.1} parent=1 // pred_region
      %s59 = ssub.s32 3072, 3072
      %60 = vsyncadd [#allocation8], %s59
      %s61 = sshll.u32 [#allocation9], 4
      %s62 = int_to_ptr.vmem [resolvable:$true] %s61
      %67 = dma.hbm_to_vmem [thread:$0]  %s4, 3072, %s62, [#allocation8], 192, 192, 12
    $region21: #{tpu_custom_call.1} parent=1 // pred_fallthru
      _
    // Predicated region
    $region22: #{tpu_custom_call.1} parent=1 // pred_check
      _
    $region23: #{tpu_custom_call.1} parent=1 // pred_check_branch
      %69 = sbr.rel (0) target = $region25
    $region24: #{tpu_custom_call.1} parent=1 // pred_region
      _
    $region25: #{tpu_custom_call.1} parent=1 // pred_fallthru
      _
    // Predicated region
    $region26: #{tpu_custom_call.1} parent=1 // pred_check
      _
    $region27: #{tpu_custom_call.1} parent=1 // pred_check_branch
      %71 = sbr.rel (0) target = $region29
    $region28: #{tpu_custom_call.1} parent=1 // pred_region
      _
    $region29: #{tpu_custom_call.1} parent=1 // pred_fallthru
      _
    // Predicated region
    $region30: #{tpu_custom_call.1} parent=1 // pred_check
      _
    $region31: #{tpu_custom_call.1} parent=1 // pred_check_branch
      %73 = sbr.rel (0) target = $region33
    $region32: #{tpu_custom_call.1} parent=1 // pred_region
      %s75 = ssub.s32 1024, 1024
      %76 = vsyncadd [#allocation11], %s75
      %s77 = sshll.u32 [#allocation10], 4
      %s78 = int_to_ptr.vmem [resolvable:$true] %s77
      %83 = dma.hbm_to_vmem [thread:$0]  %s7, 1024, %s78, [#allocation11], 64, 64, 4
    $region33: #{tpu_custom_call.1} parent=1 // pred_fallthru
      _
    // Predicated region
    $region34: #{tpu_custom_call.1} parent=1 // pred_check
      _
    $region35: #{tpu_custom_call.1} parent=1 // pred_check_branch
      %85 = sbr.rel (0) target = $region37
    $region36: #{tpu_custom_call.1} parent=1 // pred_region
      _
    $region37: #{tpu_custom_call.1} parent=1 // pred_fallthru
      _
    // Predicated region
    $region38: #{tpu_custom_call.1} parent=1 // pred_check
      _
    $region39: #{tpu_custom_call.1} parent=1 // pred_check_branch
      %87 = sbr.rel (0) target = $region41
    $region40: #{tpu_custom_call.1} parent=1 // pred_region
      %88 = dma.done [#allocation5], 16
    $region41: #{tpu_custom_call.1} parent=1 // pred_fallthru
      _
    // Predicated region
    $region42: #{tpu_custom_call.1} parent=1 // pred_check
      _
    $region43: #{tpu_custom_call.1} parent=1 // pred_check_branch
      %90 = sbr.rel (0) target = $region45
    $region44: #{tpu_custom_call.1} parent=1 // pred_region
      %91 = dma.done [#allocation3], 1024
    $region45: #{tpu_custom_call.1} parent=1 // pred_fallthru
      _
    // Predicated region
    $region46: #{tpu_custom_call.1} parent=1 // pred_check
      _
    $region47: #{tpu_custom_call.1} parent=1 // pred_check_branch
      %93 = sbr.rel (0) target = $region49
    $region48: #{tpu_custom_call.1} parent=1 // pred_region
      %94 = dma.done [#allocation8], 3072
    $region49: #{tpu_custom_call.1} parent=1 // pred_fallthru
      _
    // Predicated region
    $region50: #{tpu_custom_call.1} parent=1 // pred_check
      _
    $region51: #{tpu_custom_call.1} parent=1 // pred_check_branch
      %96 = sbr.rel (0) target = $region53
    $region52: #{tpu_custom_call.1} parent=1 // pred_region
      %97 = dma.done [#allocation8], 3072
    $region53: #{tpu_custom_call.1} parent=1 // pred_fallthru
      _
    // Predicated region
    $region54: #{tpu_custom_call.1} parent=1 // pred_check
      _
    $region55: #{tpu_custom_call.1} parent=1 // pred_check_branch
      %99 = sbr.rel (0) target = $region57
    $region56: #{tpu_custom_call.1} parent=1 // pred_region
      %100 = dma.done [#allocation11], 1024
    $region57: #{tpu_custom_call.1} parent=1 // pred_fallthru
      _
    %101 = sfence
    %v103 = vld [vmem:[%s2] sm:$0x1]
    %s104 = sld [smem:[#allocation2]]
    %s105 = scalar_lea.vmem [#allocation6], %s104
    %v106 = vld [vmem:[%s105] sm:$0x1]
    %v107 = vmax.f32 %v106, 0.0
    %v108 = vpack.c.bf16 %v107, %v107
    %v109 = vpack.c.bf16 %v103, %v103
    %v110 = vld [vmem:[#allocation7] sm:$0xff]
    %v111 = vld [vmem:[#allocation7 + $0x8] sm:$0xf]
    %v112 = vld [vmem:[#allocation7 + $0xc] sm:$0xff]
    %v113 = vld [vmem:[#allocation7 + $0x14] sm:$0xf]
    %v114 = vld [vmem:[#allocation7 + $0x18] sm:$0xff]
    %v115 = vld [vmem:[#allocation7 + $0x20] sm:$0xf]
    %v116 = vld [vmem:[#allocation7 + $0x24] sm:$0xff]
    %v117 = vld [vmem:[#allocation7 + $0x2c] sm:$0xf]
    %v118 = vld [vmem:[#allocation7 + $0x30] sm:$0xff]
    %v119 = vld [vmem:[#allocation7 + $0x38] sm:$0xf]
    %v120 = vld [vmem:[#allocation7 + $0x3c] sm:$0xff]
    %v121 = vld [vmem:[#allocation7 + $0x44] sm:$0xf]
    %v122 = vld [vmem:[#allocation7 + $0x48] sm:$0xff]
    %v123 = vld [vmem:[#allocation7 + $0x50] sm:$0xf]
    %v124 = vld [vmem:[#allocation7 + $0x54] sm:$0xff]
    %v125 = vld [vmem:[#allocation7 + $0x5c] sm:$0xf]
    %v126 = vld [vmem:[#allocation7 + $0x60] sm:$0xff]
    %v127 = vld [vmem:[#allocation7 + $0x68] sm:$0xf]
    %v128 = vld [vmem:[#allocation7 + $0x6c] sm:$0xff]
    %v129 = vld [vmem:[#allocation7 + $0x74] sm:$0xf]
    %v130 = vld [vmem:[#allocation7 + $0x78] sm:$0xff]
    %v131 = vld [vmem:[#allocation7 + $0x80] sm:$0xf]
    %v132 = vld [vmem:[#allocation7 + $0x84] sm:$0xff]
    %v133 = vld [vmem:[#allocation7 + $0x8c] sm:$0xf]
    %v134 = vld [vmem:[#allocation7 + $0x90] sm:$0xff]
    %v135 = vld [vmem:[#allocation7 + $0x98] sm:$0xf]
    %v136 = vld [vmem:[#allocation7 + $0x9c] sm:$0xff]
    %v137 = vld [vmem:[#allocation7 + $0xa4] sm:$0xf]
    %v138 = vld [vmem:[#allocation7 + $0xa8] sm:$0xff]
    %v139 = vld [vmem:[#allocation7 + $0xb0] sm:$0xf]
    %v140 = vld [vmem:[#allocation7 + $0xb4] sm:$0xff]
    %v141 = vld [vmem:[#allocation7 + $0xbc] sm:$0xf]
    %v142 = vld [vmem:[%s5] sm:$0x7]
    %v175 = vunpack.c.l.b16 %v110
    %v176 = vunpack.c.h.b16 %v110
    %v177 = vunpack.c.l.b16 %v111
    %v178 = vunpack.c.l.b16 %v112
    %v179 = vunpack.c.h.b16 %v112
    %v180 = vunpack.c.l.b16 %v113
    %v181 = vunpack.c.l.b16 %v114
    %v182 = vunpack.c.h.b16 %v114
    %v183 = vunpack.c.l.b16 %v115
    %v184 = vunpack.c.l.b16 %v116
    %v185 = vunpack.c.h.b16 %v116
    %v186 = vunpack.c.l.b16 %v117
    %v187 = vunpack.c.l.b16 %v118
    %v188 = vunpack.c.h.b16 %v118
    %v189 = vunpack.c.l.b16 %v119
    %v190 = vunpack.c.l.b16 %v120
    %v191 = vunpack.c.h.b16 %v120
    %v192 = vunpack.c.l.b16 %v121
    %v193 = vunpack.c.l.b16 %v122
    %v194 = vunpack.c.h.b16 %v122
    %v195 = vunpack.c.l.b16 %v123
    %v196 = vunpack.c.l.b16 %v124
    %v197 = vunpack.c.h.b16 %v124
    %v198 = vunpack.c.l.b16 %v125
    %v199 = vunpack.c.l.b16 %v126
    %v200 = vunpack.c.h.b16 %v126
    %v201 = vunpack.c.l.b16 %v127
    %v202 = vunpack.c.l.b16 %v128
    %v203 = vunpack.c.h.b16 %v128
    %v204 = vunpack.c.l.b16 %v129
    %v205 = vunpack.c.l.b16 %v130
    %v206 = vunpack.c.h.b16 %v130
    %v207 = vunpack.c.l.b16 %v131
    %v208 = vunpack.c.l.b16 %v132
    %v209 = vunpack.c.h.b16 %v132
    %v210 = vunpack.c.l.b16 %v133
    %v211 = vunpack.c.l.b16 %v134
    %v212 = vunpack.c.h.b16 %v134
    %v213 = vunpack.c.l.b16 %v135
    %v214 = vunpack.c.l.b16 %v136
    %v215 = vunpack.c.h.b16 %v136
    %v216 = vunpack.c.l.b16 %v137
    %v217 = vunpack.c.l.b16 %v138
    %v218 = vunpack.c.h.b16 %v138
    %v219 = vunpack.c.l.b16 %v139
    %v220 = vunpack.c.l.b16 %v140
    %v221 = vunpack.c.h.b16 %v140
    %v222 = vunpack.c.l.b16 %v141
    %v223 = vpack.c.b16 %v178, %v175
    %v224 = vpack.c.b16 %v179, %v176
    %v225 = vpack.c.b16 %v180, %v177
    %v226 = vpack.c.b16 %v184, %v181
    %v227 = vpack.c.b16 %v185, %v182
    %v228 = vpack.c.b16 %v186, %v183
    %v229 = vpack.c.b16 %v190, %v187
    %v230 = vpack.c.b16 %v191, %v188
    %v231 = vpack.c.b16 %v192, %v189
    %v232 = vpack.c.b16 %v196, %v193
    %v233 = vpack.c.b16 %v197, %v194
    %v234 = vpack.c.b16 %v198, %v195
    %v235 = vpack.c.b16 %v202, %v199
    %v236 = vpack.c.b16 %v203, %v200
    %v237 = vpack.c.b16 %v204, %v201
    %v238 = vpack.c.b16 %v208, %v205
    %v239 = vpack.c.b16 %v209, %v206
    %v240 = vpack.c.b16 %v210, %v207
    %v241 = vpack.c.b16 %v214, %v211
    %v242 = vpack.c.b16 %v215, %v212
    %v243 = vpack.c.b16 %v216, %v213
    %v244 = vpack.c.b16 %v220, %v217
    %v245 = vpack.c.b16 %v221, %v218
    %v246 = vpack.c.b16 %v222, %v219
    %v272 = vlaneseq
    %v273 = vshrl.u32 %v272, 7
    %v274 = vsub.s32 0, %v273
    %v275 = vrot.slane %v142, %v274
    %v276 = vlaneseq
    %v277 = vshrl.u32 %v276, 7
    %v278 = vsub.s32 1, %v277
    %v279 = vrot.slane %v142, %v278
    %v280 = vlaneseq
    %v281 = vshrl.u32 %v280, 7
    %v282 = vsub.s32 2, %v281
    %v283 = vrot.slane %v142, %v282
    %287 = vmatprep.subr.bf16.mxu0 %v224
    %288 = vmatpush1.bf16.msra.mxu0 %v223
    %289 = vmatprep.subr.bf16.mxu0 %v227
    %290 = vmatpush1.bf16.msra.mxu0 %v226
    %291 = vmatprep.subr.bf16.mxu0 %v230
    %292 = vmatpush1.bf16.msra.mxu0 %v229
    %293 = vmatprep.subr.bf16.mxu0 %v233
    %294 = vmatpush1.bf16.msra.mxu0 %v232
    %295 = vmatprep.subr.bf16.mxu0 %v236
    %296 = vmatpush1.bf16.msra.mxu0 %v235
    %297 = vmatprep.subr.bf16.mxu0 %v239
    %298 = vmatpush1.bf16.msra.mxu0 %v238
    %299 = vmatprep.subr.bf16.mxu0 %v242
    %300 = vmatpush1.bf16.msra.mxu0 %v241
    %301 = vmatprep.subr.bf16.mxu0 %v245
    %302 = vmatpush1.bf16.msra.mxu0 %v244
    %303 = vmatprep.subr.bf16.mxu0 0
    %304 = vmatpush1.bf16.msra.mxu0 0
    %305 = vmatprep.subr.bf16.mxu0 0
    %306 = vmatpush1.bf16.msra.mxu0 0
    %307 = vmatprep.subr.bf16.mxu0 0
    %308 = vmatpush1.bf16.msra.mxu0 0
    %309 = vmatprep.subr.bf16.mxu0 0
    %310 = vmatpush1.bf16.msra.mxu0 0
    %311 = vmatprep.subr.bf16.mxu0 0
    %312 = vmatpush1.bf16.msra.mxu0 0
    %313 = vmatprep.subr.bf16.mxu0 0
    %314 = vmatpush1.bf16.msra.mxu0 0
    %315 = vmatprep.subr.bf16.mxu0 0
    %316 = vmatpush1.bf16.msra.mxu0 0
    %317 = vmatprep.subr.bf16.mxu0 0
    %318 = vmatpush1.bf16.msra.mxu0 0
    %319 = vmatprep.mubr.bf16.mxu0 0
    %320 = vmatmul.mubr.bf16.gmra.mrb[0].mxu0 %v108
    %v321 = vpop.f32.mrb[0].mxu0
    %v322 = vadd.f32 %v275, %v321
    %v323 = vpop.f32.mrb[0].mxu0
    %v324 = vadd.f32 %v279, %v323
    %v325 = vpop.f32.mrb[0].mxu0
    %v326 = vpop.f32.mrb[0].mxu0
    %327 = vdwg.mxu0
    %328 = vmatprep.subr.bf16.mxu0 0
    %329 = vmatpush1.bf16.msra.mxu0 %v225
    %330 = vmatprep.subr.bf16.mxu0 0
    %331 = vmatpush1.bf16.msra.mxu0 %v228
    %332 = vmatprep.subr.bf16.mxu0 0
    %333 = vmatpush1.bf16.msra.mxu0 %v231
    %334 = vmatprep.subr.bf16.mxu0 0
    %335 = vmatpush1.bf16.msra.mxu0 %v234
    %336 = vmatprep.subr.bf16.mxu0 0
    %337 = vmatpush1.bf16.msra.mxu0 %v237
    %338 = vmatprep.subr.bf16.mxu0 0
    %339 = vmatpush1.bf16.msra.mxu0 %v240
    %340 = vmatprep.subr.bf16.mxu0 0
    %341 = vmatpush1.bf16.msra.mxu0 %v243
    %342 = vmatprep.subr.bf16.mxu0 0
    %343 = vmatpush1.bf16.msra.mxu0 %v246
    %344 = vmatprep.subr.bf16.mxu0 0
    %345 = vmatpush1.bf16.msra.mxu0 0
    %346 = vmatprep.subr.bf16.mxu0 0
    %347 = vmatpush1.bf16.msra.mxu0 0
    %348 = vmatprep.subr.bf16.mxu0 0
    %349 = vmatpush1.bf16.msra.mxu0 0
    %350 = vmatprep.subr.bf16.mxu0 0
    %351 = vmatpush1.bf16.msra.mxu0 0
    %352 = vmatprep.subr.bf16.mxu0 0
    %353 = vmatpush1.bf16.msra.mxu0 0
    %354 = vmatprep.subr.bf16.mxu0 0
    %355 = vmatpush1.bf16.msra.mxu0 0
    %356 = vmatprep.subr.bf16.mxu0 0
    %357 = vmatpush1.bf16.msra.mxu0 0
    %358 = vmatprep.subr.bf16.mxu0 0
    %359 = vmatpush1.bf16.msra.mxu0 0
    %360 = vmatprep.mubr.bf16.mxu0 0
    %361 = vmatmul.mubr.bf16.gmra.mrb[0].mxu0 %v108
    %v362 = vpop.f32.mrb[0].mxu0
    %v363 = vadd.f32 %v283, %v362
    %v364 = vpop.f32.mrb[0].mxu0
    %v365 = vpop.f32.mrb[0].mxu0
    %v366 = vpop.f32.mrb[0].mxu0
    %367 = vdwg.mxu0
    %v368 = vld [vmem:[#allocation9] sm:$0xff]
    %v369 = vld [vmem:[#allocation9 + $0x8] sm:$0xf]
    %v370 = vld [vmem:[#allocation9 + $0xc] sm:$0xff]
    %v371 = vld [vmem:[#allocation9 + $0x14] sm:$0xf]
    %v372 = vld [vmem:[#allocation9 + $0x18] sm:$0xff]
    %v373 = vld [vmem:[#allocation9 + $0x20] sm:$0xf]
    %v374 = vld [vmem:[#allocation9 + $0x24] sm:$0xff]
    %v375 = vld [vmem:[#allocation9 + $0x2c] sm:$0xf]
    %v376 = vld [vmem:[#allocation9 + $0x30] sm:$0xff]
    %v377 = vld [vmem:[#allocation9 + $0x38] sm:$0xf]
    %v378 = vld [vmem:[#allocation9 + $0x3c] sm:$0xff]
    %v379 = vld [vmem:[#allocation9 + $0x44] sm:$0xf]
    %v380 = vld [vmem:[#allocation9 + $0x48] sm:$0xff]
    %v381 = vld [vmem:[#allocation9 + $0x50] sm:$0xf]
    %v382 = vld [vmem:[#allocation9 + $0x54] sm:$0xff]
    %v383 = vld [vmem:[#allocation9 + $0x5c] sm:$0xf]
    %v384 = vld [vmem:[#allocation9 + $0x60] sm:$0xff]
    %v385 = vld [vmem:[#allocation9 + $0x68] sm:$0xf]
    %v386 = vld [vmem:[#allocation9 + $0x6c] sm:$0xff]
    %v387 = vld [vmem:[#allocation9 + $0x74] sm:$0xf]
    %v388 = vld [vmem:[#allocation9 + $0x78] sm:$0xff]
    %v389 = vld [vmem:[#allocation9 + $0x80] sm:$0xf]
    %v390 = vld [vmem:[#allocation9 + $0x84] sm:$0xff]
    %v391 = vld [vmem:[#allocation9 + $0x8c] sm:$0xf]
    %v392 = vld [vmem:[#allocation9 + $0x90] sm:$0xff]
    %v393 = vld [vmem:[#allocation9 + $0x98] sm:$0xf]
    %v394 = vld [vmem:[#allocation9 + $0x9c] sm:$0xff]
    %v395 = vld [vmem:[#allocation9 + $0xa4] sm:$0xf]
    %v396 = vld [vmem:[#allocation9 + $0xa8] sm:$0xff]
    %v397 = vld [vmem:[#allocation9 + $0xb0] sm:$0xf]
    %v398 = vld [vmem:[#allocation9 + $0xb4] sm:$0xff]
    %v399 = vld [vmem:[#allocation9 + $0xbc] sm:$0xf]
    %v400 = vld [vmem:[%s6] sm:$0x7]
    %v433 = vunpack.c.l.b16 %v368
    %v434 = vunpack.c.h.b16 %v368
    %v435 = vunpack.c.l.b16 %v369
    %v436 = vunpack.c.l.b16 %v370
    %v437 = vunpack.c.h.b16 %v370
    %v438 = vunpack.c.l.b16 %v371
    %v439 = vunpack.c.l.b16 %v372
    %v440 = vunpack.c.h.b16 %v372
    %v441 = vunpack.c.l.b16 %v373
    %v442 = vunpack.c.l.b16 %v374
    %v443 = vunpack.c.h.b16 %v374
    %v444 = vunpack.c.l.b16 %v375
    %v445 = vunpack.c.l.b16 %v376
    %v446 = vunpack.c.h.b16 %v376
    %v447 = vunpack.c.l.b16 %v377
    %v448 = vunpack.c.l.b16 %v378
    %v449 = vunpack.c.h.b16 %v378
    %v450 = vunpack.c.l.b16 %v379
    %v451 = vunpack.c.l.b16 %v380
    %v452 = vunpack.c.h.b16 %v380
    %v453 = vunpack.c.l.b16 %v381
    %v454 = vunpack.c.l.b16 %v382
    %v455 = vunpack.c.h.b16 %v382
    %v456 = vunpack.c.l.b16 %v383
    %v457 = vunpack.c.l.b16 %v384
    %v458 = vunpack.c.h.b16 %v384
    %v459 = vunpack.c.l.b16 %v385
    %v460 = vunpack.c.l.b16 %v386
    %v461 = vunpack.c.h.b16 %v386
    %v462 = vunpack.c.l.b16 %v387
    %v463 = vunpack.c.l.b16 %v388
    %v464 = vunpack.c.h.b16 %v388
    %v465 = vunpack.c.l.b16 %v389
    %v466 = vunpack.c.l.b16 %v390
    %v467 = vunpack.c.h.b16 %v390
    %v468 = vunpack.c.l.b16 %v391
    %v469 = vunpack.c.l.b16 %v392
    %v470 = vunpack.c.h.b16 %v392
    %v471 = vunpack.c.l.b16 %v393
    %v472 = vunpack.c.l.b16 %v394
    %v473 = vunpack.c.h.b16 %v394
    %v474 = vunpack.c.l.b16 %v395
    %v475 = vunpack.c.l.b16 %v396
    %v476 = vunpack.c.h.b16 %v396
    %v477 = vunpack.c.l.b16 %v397
    %v478 = vunpack.c.l.b16 %v398
    %v479 = vunpack.c.h.b16 %v398
    %v480 = vunpack.c.l.b16 %v399
    %v481 = vpack.c.b16 %v436, %v433
    %v482 = vpack.c.b16 %v437, %v434
    %v483 = vpack.c.b16 %v438, %v435
    %v484 = vpack.c.b16 %v442, %v439
    %v485 = vpack.c.b16 %v443, %v440
    %v486 = vpack.c.b16 %v444, %v441
    %v487 = vpack.c.b16 %v448, %v445
    %v488 = vpack.c.b16 %v449, %v446
    %v489 = vpack.c.b16 %v450, %v447
    %v490 = vpack.c.b16 %v454, %v451
    %v491 = vpack.c.b16 %v455, %v452
    %v492 = vpack.c.b16 %v456, %v453
    %v493 = vpack.c.b16 %v460, %v457
    %v494 = vpack.c.b16 %v461, %v458
    %v495 = vpack.c.b16 %v462, %v459
    %v496 = vpack.c.b16 %v466, %v463
    %v497 = vpack.c.b16 %v467, %v464
    %v498 = vpack.c.b16 %v468, %v465
    %v499 = vpack.c.b16 %v472, %v469
    %v500 = vpack.c.b16 %v473, %v470
    %v501 = vpack.c.b16 %v474, %v471
    %v502 = vpack.c.b16 %v478, %v475
    %v503 = vpack.c.b16 %v479, %v476
    %v504 = vpack.c.b16 %v480, %v477
    %v530 = vlaneseq
    %v531 = vshrl.u32 %v530, 7
    %v532 = vsub.s32 0, %v531
    %v533 = vrot.slane %v400, %v532
    %v534 = vlaneseq
    %v535 = vshrl.u32 %v534, 7
    %v536 = vsub.s32 1, %v535
    %v537 = vrot.slane %v400, %v536
    %v538 = vlaneseq
    %v539 = vshrl.u32 %v538, 7
    %v540 = vsub.s32 2, %v539
    %v541 = vrot.slane %v400, %v540
    %545 = vmatprep.subr.bf16.mxu0 %v482
    %546 = vmatpush1.bf16.msra.mxu0 %v481
    %547 = vmatprep.subr.bf16.mxu0 %v485
    %548 = vmatpush1.bf16.msra.mxu0 %v484
    %549 = vmatprep.subr.bf16.mxu0 %v488
    %550 = vmatpush1.bf16.msra.mxu0 %v487
    %551 = vmatprep.subr.bf16.mxu0 %v491
    %552 = vmatpush1.bf16.msra.mxu0 %v490
    %553 = vmatprep.subr.bf16.mxu0 %v494
    %554 = vmatpush1.bf16.msra.mxu0 %v493
    %555 = vmatprep.subr.bf16.mxu0 %v497
    %556 = vmatpush1.bf16.msra.mxu0 %v496
    %557 = vmatprep.subr.bf16.mxu0 %v500
    %558 = vmatpush1.bf16.msra.mxu0 %v499
    %559 = vmatprep.subr.bf16.mxu0 %v503
    %560 = vmatpush1.bf16.msra.mxu0 %v502
    %561 = vmatprep.subr.bf16.mxu0 0
    %562 = vmatpush1.bf16.msra.mxu0 0
    %563 = vmatprep.subr.bf16.mxu0 0
    %564 = vmatpush1.bf16.msra.mxu0 0
    %565 = vmatprep.subr.bf16.mxu0 0
    %566 = vmatpush1.bf16.msra.mxu0 0
    %567 = vmatprep.subr.bf16.mxu0 0
    %568 = vmatpush1.bf16.msra.mxu0 0
    %569 = vmatprep.subr.bf16.mxu0 0
    %570 = vmatpush1.bf16.msra.mxu0 0
    %571 = vmatprep.subr.bf16.mxu0 0
    %572 = vmatpush1.bf16.msra.mxu0 0
    %573 = vmatprep.subr.bf16.mxu0 0
    %574 = vmatpush1.bf16.msra.mxu0 0
    %575 = vmatprep.subr.bf16.mxu0 0
    %576 = vmatpush1.bf16.msra.mxu0 0
    %577 = vmatprep.mubr.bf16.mxu0 0
    %578 = vmatmul.mubr.bf16.gmra.mrb[0].mxu0 %v109
    %v579 = vpop.f32.mrb[0].mxu0
    %v580 = vadd.f32 %v533, %v579
    %v581 = vpop.f32.mrb[0].mxu0
    %v582 = vadd.f32 %v537, %v581
    %v583 = vpop.f32.mrb[0].mxu0
    %v584 = vpop.f32.mrb[0].mxu0
    %585 = vdwg.mxu0
    %586 = vmatprep.subr.bf16.mxu0 0
    %587 = vmatpush1.bf16.msra.mxu0 %v483
    %588 = vmatprep.subr.bf16.mxu0 0
    %589 = vmatpush1.bf16.msra.mxu0 %v486
    %590 = vmatprep.subr.bf16.mxu0 0
    %591 = vmatpush1.bf16.msra.mxu0 %v489
    %592 = vmatprep.subr.bf16.mxu0 0
    %593 = vmatpush1.bf16.msra.mxu0 %v492
    %594 = vmatprep.subr.bf16.mxu0 0
    %595 = vmatpush1.bf16.msra.mxu0 %v495
    %596 = vmatprep.subr.bf16.mxu0 0
    %597 = vmatpush1.bf16.msra.mxu0 %v498
    %598 = vmatprep.subr.bf16.mxu0 0
    %599 = vmatpush1.bf16.msra.mxu0 %v501
    %600 = vmatprep.subr.bf16.mxu0 0
    %601 = vmatpush1.bf16.msra.mxu0 %v504
    %602 = vmatprep.subr.bf16.mxu0 0
    %603 = vmatpush1.bf16.msra.mxu0 0
    %604 = vmatprep.subr.bf16.mxu0 0
    %605 = vmatpush1.bf16.msra.mxu0 0
    %606 = vmatprep.subr.bf16.mxu0 0
    %607 = vmatpush1.bf16.msra.mxu0 0
    %608 = vmatprep.subr.bf16.mxu0 0
    %609 = vmatpush1.bf16.msra.mxu0 0
    %610 = vmatprep.subr.bf16.mxu0 0
    %611 = vmatpush1.bf16.msra.mxu0 0
    %612 = vmatprep.subr.bf16.mxu0 0
    %613 = vmatpush1.bf16.msra.mxu0 0
    %614 = vmatprep.subr.bf16.mxu0 0
    %615 = vmatpush1.bf16.msra.mxu0 0
    %616 = vmatprep.subr.bf16.mxu0 0
    %617 = vmatpush1.bf16.msra.mxu0 0
    %618 = vmatprep.mubr.bf16.mxu0 0
    %619 = vmatmul.mubr.bf16.gmra.mrb[0].mxu0 %v109
    %v620 = vpop.f32.mrb[0].mxu0
    %v621 = vadd.f32 %v541, %v620
    %v622 = vpop.f32.mrb[0].mxu0
    %v623 = vpop.f32.mrb[0].mxu0
    %v624 = vpop.f32.mrb[0].mxu0
    %625 = vdwg.mxu0
    %v626 = vadd.f32 %v322, %v580
    %v627 = vxor.u32 %v626, 2147483648
    %v628 = vmul.f32 %v627, 1.442695
    %v629 = vpow.pop %v628
    %v630 = vadd.f32 %v629, 1.0
    %v631 = vrcp.pop %v630
    %v632 = vmul.f32 1.0, %v631
    %v633 = vadd.f32 %v324, %v582
    %v634 = vxor.u32 %v633, 2147483648
    %v635 = vmul.f32 %v634, 1.442695
    %v636 = vpow.pop %v635
    %v637 = vadd.f32 %v636, 1.0
    %v638 = vrcp.pop %v637
    %v639 = vmul.f32 1.0, %v638
    %v640 = vmul.f32 %v632, %v621
    %v641 = vadd.f32 %v363, %v640
    %v642 = vtanh.pop %v641
    %v643 = vsub.f32 1.0, %v639
    %v644 = vmul.f32 %v643, %v642
    %v645 = vmul.f32 %v639, %v103
    %v646 = vadd.f32 %v644, %v645
    %v647 = vpack.c.bf16 %v646, %v646
    %v648 = vld [vmem:[#allocation10] sm:$0xf]
    %v649 = vld [vmem:[#allocation10 + $0x4] sm:$0xf]
    %v650 = vld [vmem:[#allocation10 + $0x8] sm:$0xf]
    %v651 = vld [vmem:[#allocation10 + $0xc] sm:$0xf]
    %v652 = vld [vmem:[#allocation10 + $0x10] sm:$0xf]
    %v653 = vld [vmem:[#allocation10 + $0x14] sm:$0xf]
    %v654 = vld [vmem:[#allocation10 + $0x18] sm:$0xf]
    %v655 = vld [vmem:[#allocation10 + $0x1c] sm:$0xf]
    %v656 = vld [vmem:[#allocation10 + $0x20] sm:$0xf]
    %v657 = vld [vmem:[#allocation10 + $0x24] sm:$0xf]
    %v658 = vld [vmem:[#allocation10 + $0x28] sm:$0xf]
    %v659 = vld [vmem:[#allocation10 + $0x2c] sm:$0xf]
    %v660 = vld [vmem:[#allocation10 + $0x30] sm:$0xf]
    %v661 = vld [vmem:[#allocation10 + $0x34] sm:$0xf]
    %v662 = vld [vmem:[#allocation10 + $0x38] sm:$0xf]
    %v663 = vld [vmem:[#allocation10 + $0x3c] sm:$0xf]
    %v664 = vld [vmem:[%s8] sm:$0x1]
    %v681 = vunpack.c.l.b16 %v648
    %v682 = vunpack.c.l.b16 %v649
    %v683 = vunpack.c.l.b16 %v650
    %v684 = vunpack.c.l.b16 %v651
    %v685 = vunpack.c.l.b16 %v652
    %v686 = vunpack.c.l.b16 %v653
    %v687 = vunpack.c.l.b16 %v654
    %v688 = vunpack.c.l.b16 %v655
    %v689 = vunpack.c.l.b16 %v656
    %v690 = vunpack.c.l.b16 %v657
    %v691 = vunpack.c.l.b16 %v658
    %v692 = vunpack.c.l.b16 %v659
    %v693 = vunpack.c.l.b16 %v660
    %v694 = vunpack.c.l.b16 %v661
    %v695 = vunpack.c.l.b16 %v662
    %v696 = vunpack.c.l.b16 %v663
    %v697 = vpack.c.b16 %v682, %v681
    %v698 = vpack.c.b16 %v684, %v683
    %v699 = vpack.c.b16 %v686, %v685
    %v700 = vpack.c.b16 %v688, %v687
    %v701 = vpack.c.b16 %v690, %v689
    %v702 = vpack.c.b16 %v692, %v691
    %v703 = vpack.c.b16 %v694, %v693
    %v704 = vpack.c.b16 %v696, %v695
    %713 = vmatprep.subr.bf16.mxu0 0
    %714 = vmatpush1.bf16.msra.mxu0 %v697
    %715 = vmatprep.subr.bf16.mxu0 0
    %716 = vmatpush1.bf16.msra.mxu0 %v698
    %717 = vmatprep.subr.bf16.mxu0 0
    %718 = vmatpush1.bf16.msra.mxu0 %v699
    %719 = vmatprep.subr.bf16.mxu0 0
    %720 = vmatpush1.bf16.msra.mxu0 %v700
    %721 = vmatprep.subr.bf16.mxu0 0
    %722 = vmatpush1.bf16.msra.mxu0 %v701
    %723 = vmatprep.subr.bf16.mxu0 0
    %724 = vmatpush1.bf16.msra.mxu0 %v702
    %725 = vmatprep.subr.bf16.mxu0 0
    %726 = vmatpush1.bf16.msra.mxu0 %v703
    %727 = vmatprep.subr.bf16.mxu0 0
    %728 = vmatpush1.bf16.msra.mxu0 %v704
    %729 = vmatprep.subr.bf16.mxu0 0
    %730 = vmatpush1.bf16.msra.mxu0 0
    %731 = vmatprep.subr.bf16.mxu0 0
    %732 = vmatpush1.bf16.msra.mxu0 0
    %733 = vmatprep.subr.bf16.mxu0 0
    %734 = vmatpush1.bf16.msra.mxu0 0
    %735 = vmatprep.subr.bf16.mxu0 0
    %736 = vmatpush1.bf16.msra.mxu0 0
    %737 = vmatprep.subr.bf16.mxu0 0
    %738 = vmatpush1.bf16.msra.mxu0 0
    %739 = vmatprep.subr.bf16.mxu0 0
    %740 = vmatpush1.bf16.msra.mxu0 0
    %741 = vmatprep.subr.bf16.mxu0 0
    %742 = vmatpush1.bf16.msra.mxu0 0
    %743 = vmatprep.subr.bf16.mxu0 0
    %744 = vmatpush1.bf16.msra.mxu0 0
    %745 = vmatprep.mubr.bf16.mxu0 0
    %746 = vmatmul.mubr.bf16.gmra.mrb[0].mxu0 %v647
    %v747 = vpop.f32.mrb[0].mxu0
    %v748 = vadd.f32 %v664, %v747
    %v749 = vpop.f32.mrb[0].mxu0
    %v750 = vpop.f32.mrb[0].mxu0
    %v751 = vpop.f32.mrb[0].mxu0
    %752 = vdwg.mxu0
    %vm753 = vcmask 1040384
    %v754 = vsel %vm753, %v748, -inf
    %755 = vmax.xlane.f32.xlu0 %v754
    %v756 = vpop.xlane.xlu0 %755
    %v757 = vsub.f32 %v748, %v756
    %v758 = vmul.f32 %v757, 1.442695
    %v759 = vpow.pop %v758
    %v760 = vsel %vm753, %v759, 0.0
    %761 = vadd.xlane.f32.xlu0 %v760
    %v762 = vpop.xlane.xlu0 %761
    %v763 = vlog2.pop %v762
    %v764 = vmul.f32 %v763, 0.6931472
    %v765 = vadd.f32 %v764, %v756
    %v766 = vsub.f32 %v748, %v765
    %767 = vst [vmem:[#allocation12] sm:$0x1] %v766
    %s768 = sld [smem:[#allocation2 + $0x1]]
    %s769 = scalar_lea.vmem [#allocation6], %s768
    %v770 = vld [vmem:[%s769] sm:$0x1]
    %v771 = vmax.f32 %v770, 0.0
    %v772 = vpack.c.bf16 %v771, %v771
    %v773 = vld [vmem:[#allocation7] sm:$0xff]
    %v774 = vld [vmem:[#allocation7 + $0x8] sm:$0xf]
    %v775 = vld [vmem:[#allocation7 + $0xc] sm:$0xff]
    %v776 = vld [vmem:[#allocation7 + $0x14] sm:$0xf]
    %v777 = vld [vmem:[#allocation7 + $0x18] sm:$0xff]
    %v778 = vld [vmem:[#allocation7 + $0x20] sm:$0xf]
    %v779 = vld [vmem:[#allocation7 + $0x24] sm:$0xff]
    %v780 = vld [vmem:[#allocation7 + $0x2c] sm:$0xf]
    %v781 = vld [vmem:[#allocation7 + $0x30] sm:$0xff]
    %v782 = vld [vmem:[#allocation7 + $0x38] sm:$0xf]
    %v783 = vld [vmem:[#allocation7 + $0x3c] sm:$0xff]
    %v784 = vld [vmem:[#allocation7 + $0x44] sm:$0xf]
    %v785 = vld [vmem:[#allocation7 + $0x48] sm:$0xff]
    %v786 = vld [vmem:[#allocation7 + $0x50] sm:$0xf]
    %v787 = vld [vmem:[#allocation7 + $0x54] sm:$0xff]
    %v788 = vld [vmem:[#allocation7 + $0x5c] sm:$0xf]
    %v789 = vld [vmem:[#allocation7 + $0x60] sm:$0xff]
    %v790 = vld [vmem:[#allocation7 + $0x68] sm:$0xf]
    %v791 = vld [vmem:[#allocation7 + $0x6c] sm:$0xff]
    %v792 = vld [vmem:[#allocation7 + $0x74] sm:$0xf]
    %v793 = vld [vmem:[#allocation7 + $0x78] sm:$0xff]
    %v794 = vld [vmem:[#allocation7 + $0x80] sm:$0xf]
    %v795 = vld [vmem:[#allocation7 + $0x84] sm:$0xff]
    %v796 = vld [vmem:[#allocation7 + $0x8c] sm:$0xf]
    %v797 = vld [vmem:[#allocation7 + $0x90] sm:$0xff]
    %v798 = vld [vmem:[#allocation7 + $0x98] sm:$0xf]
    %v799 = vld [vmem:[#allocation7 + $0x9c] sm:$0xff]
    %v800 = vld [vmem:[#allocation7 + $0xa4] sm:$0xf]
    %v801 = vld [vmem:[#allocation7 + $0xa8] sm:$0xff]
    %v802 = vld [vmem:[#allocation7 + $0xb0] sm:$0xf]
    %v803 = vld [vmem:[#allocation7 + $0xb4] sm:$0xff]
    %v804 = vld [vmem:[#allocation7 + $0xbc] sm:$0xf]
    %v805 = vld [vmem:[%s5] sm:$0x7]
    %v838 = vunpack.c.l.b16 %v773
    %v839 = vunpack.c.h.b16 %v773
    %v840 = vunpack.c.l.b16 %v774
    %v841 = vunpack.c.l.b16 %v775
    %v842 = vunpack.c.h.b16 %v775
    %v843 = vunpack.c.l.b16 %v776
    %v844 = vunpack.c.l.b16 %v777
    %v845 = vunpack.c.h.b16 %v777
    %v846 = vunpack.c.l.b16 %v778
    %v847 = vunpack.c.l.b16 %v779
    %v848 = vunpack.c.h.b16 %v779
    %v849 = vunpack.c.l.b16 %v780
    %v850 = vunpack.c.l.b16 %v781
    %v851 = vunpack.c.h.b16 %v781
    %v852 = vunpack.c.l.b16 %v782
    %v853 = vunpack.c.l.b16 %v783
    %v854 = vunpack.c.h.b16 %v783
    %v855 = vunpack.c.l.b16 %v784
    %v856 = vunpack.c.l.b16 %v785
    %v857 = vunpack.c.h.b16 %v785
    %v858 = vunpack.c.l.b16 %v786
    %v859 = vunpack.c.l.b16 %v787
    %v860 = vunpack.c.h.b16 %v787
    %v861 = vunpack.c.l.b16 %v788
    %v862 = vunpack.c.l.b16 %v789
    %v863 = vunpack.c.h.b16 %v789
    %v864 = vunpack.c.l.b16 %v790
    %v865 = vunpack.c.l.b16 %v791
    %v866 = vunpack.c.h.b16 %v791
    %v867 = vunpack.c.l.b16 %v792
    %v868 = vunpack.c.l.b16 %v793
    %v869 = vunpack.c.h.b16 %v793
    %v870 = vunpack.c.l.b16 %v794
    %v871 = vunpack.c.l.b16 %v795
    %v872 = vunpack.c.h.b16 %v795
    %v873 = vunpack.c.l.b16 %v796
    %v874 = vunpack.c.l.b16 %v797
    %v875 = vunpack.c.h.b16 %v797
    %v876 = vunpack.c.l.b16 %v798
    %v877 = vunpack.c.l.b16 %v799
    %v878 = vunpack.c.h.b16 %v799
    %v879 = vunpack.c.l.b16 %v800
    %v880 = vunpack.c.l.b16 %v801
    %v881 = vunpack.c.h.b16 %v801
    %v882 = vunpack.c.l.b16 %v802
    %v883 = vunpack.c.l.b16 %v803
    %v884 = vunpack.c.h.b16 %v803
    %v885 = vunpack.c.l.b16 %v804
    %v886 = vpack.c.b16 %v841, %v838
    %v887 = vpack.c.b16 %v842, %v839
    %v888 = vpack.c.b16 %v843, %v840
    %v889 = vpack.c.b16 %v847, %v844
    %v890 = vpack.c.b16 %v848, %v845
    %v891 = vpack.c.b16 %v849, %v846
    %v892 = vpack.c.b16 %v853, %v850
    %v893 = vpack.c.b16 %v854, %v851
    %v894 = vpack.c.b16 %v855, %v852
    %v895 = vpack.c.b16 %v859, %v856
    %v896 = vpack.c.b16 %v860, %v857
    %v897 = vpack.c.b16 %v861, %v858
    %v898 = vpack.c.b16 %v865, %v862
    %v899 = vpack.c.b16 %v866, %v863
    %v900 = vpack.c.b16 %v867, %v864
    %v901 = vpack.c.b16 %v871, %v868
    %v902 = vpack.c.b16 %v872, %v869
    %v903 = vpack.c.b16 %v873, %v870
    %v904 = vpack.c.b16 %v877, %v874
    %v905 = vpack.c.b16 %v878, %v875
    %v906 = vpack.c.b16 %v879, %v876
    %v907 = vpack.c.b16 %v883, %v880
    %v908 = vpack.c.b16 %v884, %v881
    %v909 = vpack.c.b16 %v885, %v882
    %v935 = vlaneseq
    %v936 = vshrl.u32 %v935, 7
    %v937 = vsub.s32 0, %v936
    %v938 = vrot.slane %v805, %v937
    %v939 = vlaneseq
    %v940 = vshrl.u32 %v939, 7
    %v941 = vsub.s32 1, %v940
    %v942 = vrot.slane %v805, %v941
    %v943 = vlaneseq
    %v944 = vshrl.u32 %v943, 7
    %v945 = vsub.s32 2, %v944
    %v946 = vrot.slane %v805, %v945
    %950 = vmatprep.subr.bf16.mxu0 %v887
    %951 = vmatpush1.bf16.msra.mxu0 %v886
    %952 = vmatprep.subr.bf16.mxu0 %v890
    %953 = vmatpush1.bf16.msra.mxu0 %v889
    %954 = vmatprep.subr.bf16.mxu0 %v893
    %955 = vmatpush1.bf16.msra.mxu0 %v892
    %956 = vmatprep.subr.bf16.mxu0 %v896
    %957 = vmatpush1.bf16.msra.mxu0 %v895
    %958 = vmatprep.subr.bf16.mxu0 %v899
    %959 = vmatpush1.bf16.msra.mxu0 %v898
    %960 = vmatprep.subr.bf16.mxu0 %v902
    %961 = vmatpush1.bf16.msra.mxu0 %v901
    %962 = vmatprep.subr.bf16.mxu0 %v905
    %963 = vmatpush1.bf16.msra.mxu0 %v904
    %964 = vmatprep.subr.bf16.mxu0 %v908
    %965 = vmatpush1.bf16.msra.mxu0 %v907
    %966 = vmatprep.subr.bf16.mxu0 0
    %967 = vmatpush1.bf16.msra.mxu0 0
    %968 = vmatprep.subr.bf16.mxu0 0
    %969 = vmatpush1.bf16.msra.mxu0 0
    %970 = vmatprep.subr.bf16.mxu0 0
    %971 = vmatpush1.bf16.msra.mxu0 0
    %972 = vmatprep.subr.bf16.mxu0 0
    %973 = vmatpush1.bf16.msra.mxu0 0
    %974 = vmatprep.subr.bf16.mxu0 0
    %975 = vmatpush1.bf16.msra.mxu0 0
    %976 = vmatprep.subr.bf16.mxu0 0
    %977 = vmatpush1.bf16.msra.mxu0 0
    %978 = vmatprep.subr.bf16.mxu0 0
    %979 = vmatpush1.bf16.msra.mxu0 0
    %980 = vmatprep.subr.bf16.mxu0 0
    %981 = vmatpush1.bf16.msra.mxu0 0
    %982 = vmatprep.mubr.bf16.mxu0 0
    %983 = vmatmul.mubr.bf16.gmra.mrb[0].mxu0 %v772
    %v984 = vpop.f32.mrb[0].mxu0
    %v985 = vadd.f32 %v938, %v984
    %v986 = vpop.f32.mrb[0].mxu0
    %v987 = vadd.f32 %v942, %v986
    %v988 = vpop.f32.mrb[0].mxu0
    %v989 = vpop.f32.mrb[0].mxu0
    %990 = vdwg.mxu0
    %991 = vmatprep.subr.bf16.mxu0 0
    %992 = vmatpush1.bf16.msra.mxu0 %v888
    %993 = vmatprep.subr.bf16.mxu0 0
    %994 = vmatpush1.bf16.msra.mxu0 %v891
    %995 = vmatprep.subr.bf16.mxu0 0
    %996 = vmatpush1.bf16.msra.mxu0 %v894
    %997 = vmatprep.subr.bf16.mxu0 0
    %998 = vmatpush1.bf16.msra.mxu0 %v897
    %999 = vmatprep.subr.bf16.mxu0 0
    %1000 = vmatpush1.bf16.msra.mxu0 %v900
    %1001 = vmatprep.subr.bf16.mxu0 0
    %1002 = vmatpush1.bf16.msra.mxu0 %v903
    %1003 = vmatprep.subr.bf16.mxu0 0
    %1004 = vmatpush1.bf16.msra.mxu0 %v906
    %1005 = vmatprep.subr.bf16.mxu0 0
    %1006 = vmatpush1.bf16.msra.mxu0 %v909
    %1007 = vmatprep.subr.bf16.mxu0 0
    %1008 = vmatpush1.bf16.msra.mxu0 0
    %1009 = vmatprep.subr.bf16.mxu0 0
    %1010 = vmatpush1.bf16.msra.mxu0 0
    %1011 = vmatprep.subr.bf16.mxu0 0
    %1012 = vmatpush1.bf16.msra.mxu0 0
    %1013 = vmatprep.subr.bf16.mxu0 0
    %1014 = vmatpush1.bf16.msra.mxu0 0
    %1015 = vmatprep.subr.bf16.mxu0 0
    %1016 = vmatpush1.bf16.msra.mxu0 0
    %1017 = vmatprep.subr.bf16.mxu0 0
    %1018 = vmatpush1.bf16.msra.mxu0 0
    %1019 = vmatprep.subr.bf16.mxu0 0
    %1020 = vmatpush1.bf16.msra.mxu0 0
    %1021 = vmatprep.subr.bf16.mxu0 0
    %1022 = vmatpush1.bf16.msra.mxu0 0
    %1023 = vmatprep.mubr.bf16.mxu0 0
    %1024 = vmatmul.mubr.bf16.gmra.mrb[0].mxu0 %v772
    %v1025 = vpop.f32.mrb[0].mxu0
    %v1026 = vadd.f32 %v946, %v1025
    %v1027 = vpop.f32.mrb[0].mxu0
    %v1028 = vpop.f32.mrb[0].mxu0
    %v1029 = vpop.f32.mrb[0].mxu0
    %1030 = vdwg.mxu0
    %v1031 = vld [vmem:[#allocation9] sm:$0xff]
    %v1032 = vld [vmem:[#allocation9 + $0x8] sm:$0xf]
    %v1033 = vld [vmem:[#allocation9 + $0xc] sm:$0xff]
    %v1034 = vld [vmem:[#allocation9 + $0x14] sm:$0xf]
    %v1035 = vld [vmem:[#allocation9 + $0x18] sm:$0xff]
    %v1036 = vld [vmem:[#allocation9 + $0x20] sm:$0xf]
    %v1037 = vld [vmem:[#allocation9 + $0x24] sm:$0xff]
    %v1038 = vld [vmem:[#allocation9 + $0x2c] sm:$0xf]
    %v1039 = vld [vmem:[#allocation9 + $0x30] sm:$0xff]
    %v1040 = vld [vmem:[#allocation9 + $0x38] sm:$0xf]
    %v1041 = vld [vmem:[#allocation9 + $0x3c] sm:$0xff]
    %v1042 = vld [vmem:[#allocation9 + $0x44] sm:$0xf]
    %v1043 = vld [vmem:[#allocation9 + $0x48] sm:$0xff]
    %v1044 = vld [vmem:[#allocation9 + $0x50] sm:$0xf]
    %v1045 = vld [vmem:[#allocation9 + $0x54] sm:$0xff]
    %v1046 = vld [vmem:[#allocation9 + $0x5c] sm:$0xf]
    %v1047 = vld [vmem:[#allocation9 + $0x60] sm:$0xff]
    %v1048 = vld [vmem:[#allocation9 + $0x68] sm:$0xf]
    %v1049 = vld [vmem:[#allocation9 + $0x6c] sm:$0xff]
    %v1050 = vld [vmem:[#allocation9 + $0x74] sm:$0xf]
    %v1051 = vld [vmem:[#allocation9 + $0x78] sm:$0xff]
    %v1052 = vld [vmem:[#allocation9 + $0x80] sm:$0xf]
    %v1053 = vld [vmem:[#allocation9 + $0x84] sm:$0xff]
    %v1054 = vld [vmem:[#allocation9 + $0x8c] sm:$0xf]
    %v1055 = vld [vmem:[#allocation9 + $0x90] sm:$0xff]
    %v1056 = vld [vmem:[#allocation9 + $0x98] sm:$0xf]
    %v1057 = vld [vmem:[#allocation9 + $0x9c] sm:$0xff]
    %v1058 = vld [vmem:[#allocation9 + $0xa4] sm:$0xf]
    %v1059 = vld [vmem:[#allocation9 + $0xa8] sm:$0xff]
    %v1060 = vld [vmem:[#allocation9 + $0xb0] sm:$0xf]
    %v1061 = vld [vmem:[#allocation9 + $0xb4] sm:$0xff]
    %v1062 = vld [vmem:[#allocation9 + $0xbc] sm:$0xf]
    %v1063 = vld [vmem:[%s6] sm:$0x7]
    %v1096 = vunpack.c.l.b16 %v1031
    %v1097 = vunpack.c.h.b16 %v1031
    %v1098 = vunpack.c.l.b16 %v1032
    %v1099 = vunpack.c.l.b16 %v1033
    %v1100 = vunpack.c.h.b16 %v1033
    %v1101 = vunpack.c.l.b16 %v1034
    %v1102 = vunpack.c.l.b16 %v1035
    %v1103 = vunpack.c.h.b16 %v1035
    %v1104 = vunpack.c.l.b16 %v1036
    %v1105 = vunpack.c.l.b16 %v1037
    %v1106 = vunpack.c.h.b16 %v1037
    %v1107 = vunpack.c.l.b16 %v1038
    %v1108 = vunpack.c.l.b16 %v1039
    %v1109 = vunpack.c.h.b16 %v1039
    %v1110 = vunpack.c.l.b16 %v1040
    %v1111 = vunpack.c.l.b16 %v1041
    %v1112 = vunpack.c.h.b16 %v1041
    %v1113 = vunpack.c.l.b16 %v1042
    %v1114 = vunpack.c.l.b16 %v1043
    %v1115 = vunpack.c.h.b16 %v1043
    %v1116 = vunpack.c.l.b16 %v1044
    %v1117 = vunpack.c.l.b16 %v1045
    %v1118 = vunpack.c.h.b16 %v1045
    %v1119 = vunpack.c.l.b16 %v1046
    %v1120 = vunpack.c.l.b16 %v1047
    %v1121 = vunpack.c.h.b16 %v1047
    %v1122 = vunpack.c.l.b16 %v1048
    %v1123 = vunpack.c.l.b16 %v1049
    %v1124 = vunpack.c.h.b16 %v1049
    %v1125 = vunpack.c.l.b16 %v1050
    %v1126 = vunpack.c.l.b16 %v1051
    %v1127 = vunpack.c.h.b16 %v1051
    %v1128 = vunpack.c.l.b16 %v1052
    %v1129 = vunpack.c.l.b16 %v1053
    %v1130 = vunpack.c.h.b16 %v1053
    %v1131 = vunpack.c.l.b16 %v1054
    %v1132 = vunpack.c.l.b16 %v1055
    %v1133 = vunpack.c.h.b16 %v1055
    %v1134 = vunpack.c.l.b16 %v1056
    %v1135 = vunpack.c.l.b16 %v1057
    %v1136 = vunpack.c.h.b16 %v1057
    %v1137 = vunpack.c.l.b16 %v1058
    %v1138 = vunpack.c.l.b16 %v1059
    %v1139 = vunpack.c.h.b16 %v1059
    %v1140 = vunpack.c.l.b16 %v1060
    %v1141 = vunpack.c.l.b16 %v1061
    %v1142 = vunpack.c.h.b16 %v1061
    %v1143 = vunpack.c.l.b16 %v1062
    %v1144 = vpack.c.b16 %v1099, %v1096
    %v1145 = vpack.c.b16 %v1100, %v1097
    %v1146 = vpack.c.b16 %v1101, %v1098
    %v1147 = vpack.c.b16 %v1105, %v1102
    %v1148 = vpack.c.b16 %v1106, %v1103
    %v1149 = vpack.c.b16 %v1107, %v1104
    %v1150 = vpack.c.b16 %v1111, %v1108
    %v1151 = vpack.c.b16 %v1112, %v1109
    %v1152 = vpack.c.b16 %v1113, %v1110
    %v1153 = vpack.c.b16 %v1117, %v1114
    %v1154 = vpack.c.b16 %v1118, %v1115
    %v1155 = vpack.c.b16 %v1119, %v1116
    %v1156 = vpack.c.b16 %v1123, %v1120
    %v1157 = vpack.c.b16 %v1124, %v1121
    %v1158 = vpack.c.b16 %v1125, %v1122
    %v1159 = vpack.c.b16 %v1129, %v1126
    %v1160 = vpack.c.b16 %v1130, %v1127
    %v1161 = vpack.c.b16 %v1131, %v1128
    %v1162 = vpack.c.b16 %v1135, %v1132
    %v1163 = vpack.c.b16 %v1136, %v1133
    %v1164 = vpack.c.b16 %v1137, %v1134
    %v1165 = vpack.c.b16 %v1141, %v1138
    %v1166 = vpack.c.b16 %v1142, %v1139
    %v1167 = vpack.c.b16 %v1143, %v1140
    %v1193 = vlaneseq
    %v1194 = vshrl.u32 %v1193, 7
    %v1195 = vsub.s32 0, %v1194
    %v1196 = vrot.slane %v1063, %v1195
    %v1197 = vlaneseq
    %v1198 = vshrl.u32 %v1197, 7
    %v1199 = vsub.s32 1, %v1198
    %v1200 = vrot.slane %v1063, %v1199
    %v1201 = vlaneseq
    %v1202 = vshrl.u32 %v1201, 7
    %v1203 = vsub.s32 2, %v1202
    %v1204 = vrot.slane %v1063, %v1203
    %1208 = vmatprep.subr.bf16.mxu0 %v1145
    %1209 = vmatpush1.bf16.msra.mxu0 %v1144
    %1210 = vmatprep.subr.bf16.mxu0 %v1148
    %1211 = vmatpush1.bf16.msra.mxu0 %v1147
    %1212 = vmatprep.subr.bf16.mxu0 %v1151
    %1213 = vmatpush1.bf16.msra.mxu0 %v1150
    %1214 = vmatprep.subr.bf16.mxu0 %v1154
    %1215 = vmatpush1.bf16.msra.mxu0 %v1153
    %1216 = vmatprep.subr.bf16.mxu0 %v1157
    %1217 = vmatpush1.bf16.msra.mxu0 %v1156
    %1218 = vmatprep.subr.bf16.mxu0 %v1160
    %1219 = vmatpush1.bf16.msra.mxu0 %v1159
    %1220 = vmatprep.subr.bf16.mxu0 %v1163
    %1221 = vmatpush1.bf16.msra.mxu0 %v1162
    %1222 = vmatprep.subr.bf16.mxu0 %v1166
    %1223 = vmatpush1.bf16.msra.mxu0 %v1165
    %1224 = vmatprep.subr.bf16.mxu0 0
    %1225 = vmatpush1.bf16.msra.mxu0 0
    %1226 = vmatprep.subr.bf16.mxu0 0
    %1227 = vmatpush1.bf16.msra.mxu0 0
    %1228 = vmatprep.subr.bf16.mxu0 0
    %1229 = vmatpush1.bf16.msra.mxu0 0
    %1230 = vmatprep.subr.bf16.mxu0 0
    %1231 = vmatpush1.bf16.msra.mxu0 0
    %1232 = vmatprep.subr.bf16.mxu0 0
    %1233 = vmatpush1.bf16.msra.mxu0 0
    %1234 = vmatprep.subr.bf16.mxu0 0
    %1235 = vmatpush1.bf16.msra.mxu0 0
    %1236 = vmatprep.subr.bf16.mxu0 0
    %1237 = vmatpush1.bf16.msra.mxu0 0
    %1238 = vmatprep.subr.bf16.mxu0 0
    %1239 = vmatpush1.bf16.msra.mxu0 0
    %1240 = vmatprep.mubr.bf16.mxu0 0
    %1241 = vmatmul.mubr.bf16.gmra.mrb[0].mxu0 %v647
    %v1242 = vpop.f32.mrb[0].mxu0
    %v1243 = vadd.f32 %v1196, %v1242
    %v1244 = vpop.f32.mrb[0].mxu0
    %v1245 = vadd.f32 %v1200, %v1244
    %v1246 = vpop.f32.mrb[0].mxu0
    %v1247 = vpop.f32.mrb[0].mxu0
    %1248 = vdwg.mxu0
    %1249 = vmatprep.subr.bf16.mxu0 0
    %1250 = vmatpush1.bf16.msra.mxu0 %v1146
    %1251 = vmatprep.subr.bf16.mxu0 0
    %1252 = vmatpush1.bf16.msra.mxu0 %v1149
    %1253 = vmatprep.subr.bf16.mxu0 0
    %1254 = vmatpush1.bf16.msra.mxu0 %v1152
    %1255 = vmatprep.subr.bf16.mxu0 0
    %1256 = vmatpush1.bf16.msra.mxu0 %v1155
    %1257 = vmatprep.subr.bf16.mxu0 0
    %1258 = vmatpush1.bf16.msra.mxu0 %v1158
    %1259 = vmatprep.subr.bf16.mxu0 0
    %1260 = vmatpush1.bf16.msra.mxu0 %v1161
    %1261 = vmatprep.subr.bf16.mxu0 0
    %1262 = vmatpush1.bf16.msra.mxu0 %v1164
    %1263 = vmatprep.subr.bf16.mxu0 0
    %1264 = vmatpush1.bf16.msra.mxu0 %v1167
    %1265 = vmatprep.subr.bf16.mxu0 0
    %1266 = vmatpush1.bf16.msra.mxu0 0
    %1267 = vmatprep.subr.bf16.mxu0 0
    %1268 = vmatpush1.bf16.msra.mxu0 0
    %1269 = vmatprep.subr.bf16.mxu0 0
    %1270 = vmatpush1.bf16.msra.mxu0 0
    %1271 = vmatprep.subr.bf16.mxu0 0
    %1272 = vmatpush1.bf16.msra.mxu0 0
    %1273 = vmatprep.subr.bf16.mxu0 0
    %1274 = vmatpush1.bf16.msra.mxu0 0
    %1275 = vmatprep.subr.bf16.mxu0 0
    %1276 = vmatpush1.bf16.msra.mxu0 0
    %1277 = vmatprep.subr.bf16.mxu0 0
    %1278 = vmatpush1.bf16.msra.mxu0 0
    %1279 = vmatprep.subr.bf16.mxu0 0
    %1280 = vmatpush1.bf16.msra.mxu0 0
    %1281 = vmatprep.mubr.bf16.mxu0 0
    %1282 = vmatmul.mubr.bf16.gmra.mrb[0].mxu0 %v647
    %v1283 = vpop.f32.mrb[0].mxu0
    %v1284 = vadd.f32 %v1204, %v1283
    %v1285 = vpop.f32.mrb[0].mxu0
    %v1286 = vpop.f32.mrb[0].mxu0
    %v1287 = vpop.f32.mrb[0].mxu0
    %1288 = vdwg.mxu0
    %v1289 = vadd.f32 %v985, %v1243
    %v1290 = vxor.u32 %v1289, 2147483648
    %v1291 = vmul.f32 %v1290, 1.442695
    %v1292 = vpow.pop %v1291
    %v1293 = vadd.f32 %v1292, 1.0
    %v1294 = vrcp.pop %v1293
    %v1295 = vmul.f32 1.0, %v1294
    %v1296 = vadd.f32 %v987, %v1245
    %v1297 = vxor.u32 %v1296, 2147483648
    %v1298 = vmul.f32 %v1297, 1.442695
    %v1299 = vpow.pop %v1298
    %v1300 = vadd.f32 %v1299, 1.0
    %v1301 = vrcp.pop %v1300
    %v1302 = vmul.f32 1.0, %v1301
    %v1303 = vmul.f32 %v1295, %v1284
    %v1304 = vadd.f32 %v1026, %v1303
    %v1305 = vtanh.pop %v1304
    %v1306 = vsub.f32 1.0, %v1302
    %v1307 = vmul.f32 %v1306, %v1305
    %v1308 = vmul.f32 %v1302, %v646
    %v1309 = vadd.f32 %v1307, %v1308
    %v1310 = vpack.c.bf16 %v1309, %v1309
    %v1311 = vld [vmem:[#allocation10] sm:$0xf]
    %v1312 = vld [vmem:[#allocation10 + $0x4] sm:$0xf]
    %v1313 = vld [vmem:[#allocation10 + $0x8] sm:$0xf]
    %v1314 = vld [vmem:[#allocation10 + $0xc] sm:$0xf]
    %v1315 = vld [vmem:[#allocation10 + $0x10] sm:$0xf]
    %v1316 = vld [vmem:[#allocation10 + $0x14] sm:$0xf]
    %v1317 = vld [vmem:[#allocation10 + $0x18] sm:$0xf]
    %v1318 = vld [vmem:[#allocation10 + $0x1c] sm:$0xf]
    %v1319 = vld [vmem:[#allocation10 + $0x20] sm:$0xf]
    %v1320 = vld [vmem:[#allocation10 + $0x24] sm:$0xf]
    %v1321 = vld [vmem:[#allocation10 + $0x28] sm:$0xf]
    %v1322 = vld [vmem:[#allocation10 + $0x2c] sm:$0xf]
    %v1323 = vld [vmem:[#allocation10 + $0x30] sm:$0xf]
    %v1324 = vld [vmem:[#allocation10 + $0x34] sm:$0xf]
    %v1325 = vld [vmem:[#allocation10 + $0x38] sm:$0xf]
    %v1326 = vld [vmem:[#allocation10 + $0x3c] sm:$0xf]
    %v1327 = vld [vmem:[%s8] sm:$0x1]
    %v1344 = vunpack.c.l.b16 %v1311
    %v1345 = vunpack.c.l.b16 %v1312
    %v1346 = vunpack.c.l.b16 %v1313
    %v1347 = vunpack.c.l.b16 %v1314
    %v1348 = vunpack.c.l.b16 %v1315
    %v1349 = vunpack.c.l.b16 %v1316
    %v1350 = vunpack.c.l.b16 %v1317
    %v1351 = vunpack.c.l.b16 %v1318
    %v1352 = vunpack.c.l.b16 %v1319
    %v1353 = vunpack.c.l.b16 %v1320
    %v1354 = vunpack.c.l.b16 %v1321
    %v1355 = vunpack.c.l.b16 %v1322
    %v1356 = vunpack.c.l.b16 %v1323
    %v1357 = vunpack.c.l.b16 %v1324
    %v1358 = vunpack.c.l.b16 %v1325
    %v1359 = vunpack.c.l.b16 %v1326
    %v1360 = vpack.c.b16 %v1345, %v1344
    %v1361 = vpack.c.b16 %v1347, %v1346
    %v1362 = vpack.c.b16 %v1349, %v1348
    %v1363 = vpack.c.b16 %v1351, %v1350
    %v1364 = vpack.c.b16 %v1353, %v1352
    %v1365 = vpack.c.b16 %v1355, %v1354
    %v1366 = vpack.c.b16 %v1357, %v1356
    %v1367 = vpack.c.b16 %v1359, %v1358
    %1376 = vmatprep.subr.bf16.mxu0 0
    %1377 = vmatpush1.bf16.msra.mxu0 %v1360
    %1378 = vmatprep.subr.bf16.mxu0 0
    %1379 = vmatpush1.bf16.msra.mxu0 %v1361
    %1380 = vmatprep.subr.bf16.mxu0 0
    %1381 = vmatpush1.bf16.msra.mxu0 %v1362
    %1382 = vmatprep.subr.bf16.mxu0 0
    %1383 = vmatpush1.bf16.msra.mxu0 %v1363
    %1384 = vmatprep.subr.bf16.mxu0 0
    %1385 = vmatpush1.bf16.msra.mxu0 %v1364
    %1386 = vmatprep.subr.bf16.mxu0 0
    %1387 = vmatpush1.bf16.msra.mxu0 %v1365
    %1388 = vmatprep.subr.bf16.mxu0 0
    %1389 = vmatpush1.bf16.msra.mxu0 %v1366
    %1390 = vmatprep.subr.bf16.mxu0 0
    %1391 = vmatpush1.bf16.msra.mxu0 %v1367
    %1392 = vmatprep.subr.bf16.mxu0 0
    %1393 = vmatpush1.bf16.msra.mxu0 0
    %1394 = vmatprep.subr.bf16.mxu0 0
    %1395 = vmatpush1.bf16.msra.mxu0 0
    %1396 = vmatprep.subr.bf16.mxu0 0
    %1397 = vmatpush1.bf16.msra.mxu0 0
    %1398 = vmatprep.subr.bf16.mxu0 0
    %1399 = vmatpush1.bf16.msra.mxu0 0
    %1400 = vmatprep.subr.bf16.mxu0 0
    %1401 = vmatpush1.bf16.msra.mxu0 0
    %1402 = vmatprep.subr.bf16.mxu0 0
    %1403 = vmatpush1.bf16.msra.mxu0 0
    %1404 = vmatprep.subr.bf16.mxu0 0
    %1405 = vmatpush1.bf16.msra.mxu0 0
    %1406 = vmatprep.subr.bf16.mxu0 0
    %1407 = vmatpush1.bf16.msra.mxu0 0
    %1408 = vmatprep.mubr.bf16.mxu0 0
    %1409 = vmatmul.mubr.bf16.gmra.mrb[0].mxu0 %v1310
    %v1410 = vpop.f32.mrb[0].mxu0
    %v1411 = vadd.f32 %v1327, %v1410
    %v1412 = vpop.f32.mrb[0].mxu0
    %v1413 = vpop.f32.mrb[0].mxu0
    %v1414 = vpop.f32.mrb[0].mxu0
    %1415 = vdwg.mxu0
    %v1416 = vsel %vm753, %v1411, -inf
    %1417 = vmax.xlane.f32.xlu0 %v1416
    %v1418 = vpop.xlane.xlu0 %1417
    %v1419 = vsub.f32 %v1411, %v1418
    %v1420 = vmul.f32 %v1419, 1.442695
    %v1421 = vpow.pop %v1420
    %v1422 = vsel %vm753, %v1421, 0.0
    %1423 = vadd.xlane.f32.xlu0 %v1422
    %v1424 = vpop.xlane.xlu0 %1423
    %v1425 = vlog2.pop %v1424
    %v1426 = vmul.f32 %v1425, 0.6931472
    %v1427 = vadd.f32 %v1426, %v1418
    %v1428 = vsub.f32 %v1411, %v1427
    %1429 = vst [vmem:[#allocation12 + $0x1] sm:$0x1] %v1428
    %s1430 = sld [smem:[#allocation2 + $0x2]]
    %s1431 = scalar_lea.vmem [#allocation6], %s1430
    %v1432 = vld [vmem:[%s1431] sm:$0x1]
    %v1433 = vmax.f32 %v1432, 0.0
    %v1434 = vpack.c.bf16 %v1433, %v1433
    %v1435 = vld [vmem:[#allocation7] sm:$0xff]
    %v1436 = vld [vmem:[#allocation7 + $0x8] sm:$0xf]
    %v1437 = vld [vmem:[#allocation7 + $0xc] sm:$0xff]
    %v1438 = vld [vmem:[#allocation7 + $0x14] sm:$0xf]
    %v1439 = vld [vmem:[#allocation7 + $0x18] sm:$0xff]
    %v1440 = vld [vmem:[#allocation7 + $0x20] sm:$0xf]
    %v1441 = vld [vmem:[#allocation7 + $0x24] sm:$0xff]
    %v1442 = vld [vmem:[#allocation7 + $0x2c] sm:$0xf]
    %v1443 = vld [vmem:[#allocation7 + $0x30] sm:$0xff]
    %v1444 = vld [vmem:[#allocation7 + $0x38] sm:$0xf]
    %v1445 = vld [vmem:[#allocation7 + $0x3c] sm:$0xff]
    %v1446 = vld [vmem:[#allocation7 + $0x44] sm:$0xf]
    %v1447 = vld [vmem:[#allocation7 + $0x48] sm:$0xff]
    %v1448 = vld [vmem:[#allocation7 + $0x50] sm:$0xf]
    %v1449 = vld [vmem:[#allocation7 + $0x54] sm:$0xff]
    %v1450 = vld [vmem:[#allocation7 + $0x5c] sm:$0xf]
    %v1451 = vld [vmem:[#allocation7 + $0x60] sm:$0xff]
    %v1452 = vld [vmem:[#allocation7 + $0x68] sm:$0xf]
    %v1453 = vld [vmem:[#allocation7 + $0x6c] sm:$0xff]
    %v1454 = vld [vmem:[#allocation7 + $0x74] sm:$0xf]
    %v1455 = vld [vmem:[#allocation7 + $0x78] sm:$0xff]
    %v1456 = vld [vmem:[#allocation7 + $0x80] sm:$0xf]
    %v1457 = vld [vmem:[#allocation7 + $0x84] sm:$0xff]
    %v1458 = vld [vmem:[#allocation7 + $0x8c] sm:$0xf]
    %v1459 = vld [vmem:[#allocation7 + $0x90] sm:$0xff]
    %v1460 = vld [vmem:[#allocation7 + $0x98] sm:$0xf]
    %v1461 = vld [vmem:[#allocation7 + $0x9c] sm:$0xff]
    %v1462 = vld [vmem:[#allocation7 + $0xa4] sm:$0xf]
    %v1463 = vld [vmem:[#allocation7 + $0xa8] sm:$0xff]
    %v1464 = vld [vmem:[#allocation7 + $0xb0] sm:$0xf]
    %v1465 = vld [vmem:[#allocation7 + $0xb4] sm:$0xff]
    %v1466 = vld [vmem:[#allocation7 + $0xbc] sm:$0xf]
    %v1467 = vld [vmem:[%s5] sm:$0x7]
    %v1500 = vunpack.c.l.b16 %v1435
    %v1501 = vunpack.c.h.b16 %v1435
    %v1502 = vunpack.c.l.b16 %v1436
    %v1503 = vunpack.c.l.b16 %v1437
    %v1504 = vunpack.c.h.b16 %v1437
    %v1505 = vunpack.c.l.b16 %v1438
    %v1506 = vunpack.c.l.b16 %v1439
    %v1507 = vunpack.c.h.b16 %v1439
    %v1508 = vunpack.c.l.b16 %v1440
    %v1509 = vunpack.c.l.b16 %v1441
    %v1510 = vunpack.c.h.b16 %v1441
    %v1511 = vunpack.c.l.b16 %v1442
    %v1512 = vunpack.c.l.b16 %v1443
    %v1513 = vunpack.c.h.b16 %v1443
    %v1514 = vunpack.c.l.b16 %v1444
    %v1515 = vunpack.c.l.b16 %v1445
    %v1516 = vunpack.c.h.b16 %v1445
    %v1517 = vunpack.c.l.b16 %v1446
    %v1518 = vunpack.c.l.b16 %v1447
    %v1519 = vunpack.c.h.b16 %v1447
    %v1520 = vunpack.c.l.b16 %v1448
    %v1521 = vunpack.c.l.b16 %v1449
    %v1522 = vunpack.c.h.b16 %v1449
    %v1523 = vunpack.c.l.b16 %v1450
    %v1524 = vunpack.c.l.b16 %v1451
    %v1525 = vunpack.c.h.b16 %v1451
    %v1526 = vunpack.c.l.b16 %v1452
    %v1527 = vunpack.c.l.b16 %v1453
    %v1528 = vunpack.c.h.b16 %v1453
    %v1529 = vunpack.c.l.b16 %v1454
    %v1530 = vunpack.c.l.b16 %v1455
    %v1531 = vunpack.c.h.b16 %v1455
    %v1532 = vunpack.c.l.b16 %v1456
    %v1533 = vunpack.c.l.b16 %v1457
    %v1534 = vunpack.c.h.b16 %v1457
    %v1535 = vunpack.c.l.b16 %v1458
    %v1536 = vunpack.c.l.b16 %v1459
    %v1537 = vunpack.c.h.b16 %v1459
    %v1538 = vunpack.c.l.b16 %v1460
    %v1539 = vunpack.c.l.b16 %v1461
    %v1540 = vunpack.c.h.b16 %v1461
    %v1541 = vunpack.c.l.b16 %v1462
    %v1542 = vunpack.c.l.b16 %v1463
    %v1543 = vunpack.c.h.b16 %v1463
    %v1544 = vunpack.c.l.b16 %v1464
    %v1545 = vunpack.c.l.b16 %v1465
    %v1546 = vunpack.c.h.b16 %v1465
    %v1547 = vunpack.c.l.b16 %v1466
    %v1548 = vpack.c.b16 %v1503, %v1500
    %v1549 = vpack.c.b16 %v1504, %v1501
    %v1550 = vpack.c.b16 %v1505, %v1502
    %v1551 = vpack.c.b16 %v1509, %v1506
    %v1552 = vpack.c.b16 %v1510, %v1507
    %v1553 = vpack.c.b16 %v1511, %v1508
    %v1554 = vpack.c.b16 %v1515, %v1512
    %v1555 = vpack.c.b16 %v1516, %v1513
    %v1556 = vpack.c.b16 %v1517, %v1514
    %v1557 = vpack.c.b16 %v1521, %v1518
    %v1558 = vpack.c.b16 %v1522, %v1519
    %v1559 = vpack.c.b16 %v1523, %v1520
    %v1560 = vpack.c.b16 %v1527, %v1524
    %v1561 = vpack.c.b16 %v1528, %v1525
    %v1562 = vpack.c.b16 %v1529, %v1526
    %v1563 = vpack.c.b16 %v1533, %v1530
    %v1564 = vpack.c.b16 %v1534, %v1531
    %v1565 = vpack.c.b16 %v1535, %v1532
    %v1566 = vpack.c.b16 %v1539, %v1536
    %v1567 = vpack.c.b16 %v1540, %v1537
    %v1568 = vpack.c.b16 %v1541, %v1538
    %v1569 = vpack.c.b16 %v1545, %v1542
    %v1570 = vpack.c.b16 %v1546, %v1543
    %v1571 = vpack.c.b16 %v1547, %v1544
    %v1597 = vlaneseq
    %v1598 = vshrl.u32 %v1597, 7
    %v1599 = vsub.s32 0, %v1598
    %v1600 = vrot.slane %v1467, %v1599
    %v1601 = vlaneseq
    %v1602 = vshrl.u32 %v1601, 7
    %v1603 = vsub.s32 1, %v1602
    %v1604 = vrot.slane %v1467, %v1603
    %v1605 = vlaneseq
    %v1606 = vshrl.u32 %v1605, 7
    %v1607 = vsub.s32 2, %v1606
    %v1608 = vrot.slane %v1467, %v1607
    %1612 = vmatprep.subr.bf16.mxu0 %v1549
    %1613 = vmatpush1.bf16.msra.mxu0 %v1548
    %1614 = vmatprep.subr.bf16.mxu0 %v1552
    %1615 = vmatpush1.bf16.msra.mxu0 %v1551
    %1616 = vmatprep.subr.bf16.mxu0 %v1555
    %1617 = vmatpush1.bf16.msra.mxu0 %v1554
    %1618 = vmatprep.subr.bf16.mxu0 %v1558
    %1619 = vmatpush1.bf16.msra.mxu0 %v1557
    %1620 = vmatprep.subr.bf16.mxu0 %v1561
    %1621 = vmatpush1.bf16.msra.mxu0 %v1560
    %1622 = vmatprep.subr.bf16.mxu0 %v1564
    %1623 = vmatpush1.bf16.msra.mxu0 %v1563
    %1624 = vmatprep.subr.bf16.mxu0 %v1567
    %1625 = vmatpush1.bf16.msra.mxu0 %v1566
    %1626 = vmatprep.subr.bf16.mxu0 %v1570
    %1627 = vmatpush1.bf16.msra.mxu0 %v1569
    %1628 = vmatprep.subr.bf16.mxu0 0
    %1629 = vmatpush1.bf16.msra.mxu0 0
    %1630 = vmatprep.subr.bf16.mxu0 0
    %1631 = vmatpush1.bf16.msra.mxu0 0
    %1632 = vmatprep.subr.bf16.mxu0 0
    %1633 = vmatpush1.bf16.msra.mxu0 0
    %1634 = vmatprep.subr.bf16.mxu0 0
    %1635 = vmatpush1.bf16.msra.mxu0 0
    %1636 = vmatprep.subr.bf16.mxu0 0
    %1637 = vmatpush1.bf16.msra.mxu0 0
    %1638 = vmatprep.subr.bf16.mxu0 0
    %1639 = vmatpush1.bf16.msra.mxu0 0
    %1640 = vmatprep.subr.bf16.mxu0 0
    %1641 = vmatpush1.bf16.msra.mxu0 0
    %1642 = vmatprep.subr.bf16.mxu0 0
    %1643 = vmatpush1.bf16.msra.mxu0 0
    %1644 = vmatprep.mubr.bf16.mxu0 0
    %1645 = vmatmul.mubr.bf16.gmra.mrb[0].mxu0 %v1434
    %v1646 = vpop.f32.mrb[0].mxu0
    %v1647 = vadd.f32 %v1600, %v1646
    %v1648 = vpop.f32.mrb[0].mxu0
    %v1649 = vadd.f32 %v1604, %v1648
    %v1650 = vpop.f32.mrb[0].mxu0
    %v1651 = vpop.f32.mrb[0].mxu0
    %1652 = vdwg.mxu0
    %1653 = vmatprep.subr.bf16.mxu0 0
    %1654 = vmatpush1.bf16.msra.mxu0 %v1550
    %1655 = vmatprep.subr.bf16.mxu0 0
    %1656 = vmatpush1.bf16.msra.mxu0 %v1553
    %1657 = vmatprep.subr.bf16.mxu0 0
    %1658 = vmatpush1.bf16.msra.mxu0 %v1556
    %1659 = vmatprep.subr.bf16.mxu0 0
    %1660 = vmatpush1.bf16.msra.mxu0 %v1559
    %1661 = vmatprep.subr.bf16.mxu0 0
    %1662 = vmatpush1.bf16.msra.mxu0 %v1562
    %1663 = vmatprep.subr.bf16.mxu0 0
    %1664 = vmatpush1.bf16.msra.mxu0 %v1565
    %1665 = vmatprep.subr.bf16.mxu0 0
    %1666 = vmatpush1.bf16.msra.mxu0 %v1568
    %1667 = vmatprep.subr.bf16.mxu0 0
    %1668 = vmatpush1.bf16.msra.mxu0 %v1571
    %1669 = vmatprep.subr.bf16.mxu0 0
    %1670 = vmatpush1.bf16.msra.mxu0 0
    %1671 = vmatprep.subr.bf16.mxu0 0
    %1672 = vmatpush1.bf16.msra.mxu0 0
    %1673 = vmatprep.subr.bf16.mxu0 0
    %1674 = vmatpush1.bf16.msra.mxu0 0
    %1675 = vmatprep.subr.bf16.mxu0 0
    %1676 = vmatpush1.bf16.msra.mxu0 0
    %1677 = vmatprep.subr.bf16.mxu0 0
    %1678 = vmatpush1.bf16.msra.mxu0 0
    %1679 = vmatprep.subr.bf16.mxu0 0
    %1680 = vmatpush1.bf16.msra.mxu0 0
    %1681 = vmatprep.subr.bf16.mxu0 0
    %1682 = vmatpush1.bf16.msra.mxu0 0
    %1683 = vmatprep.subr.bf16.mxu0 0
    %1684 = vmatpush1.bf16.msra.mxu0 0
    %1685 = vmatprep.mubr.bf16.mxu0 0
    %1686 = vmatmul.mubr.bf16.gmra.mrb[0].mxu0 %v1434
    %v1687 = vpop.f32.mrb[0].mxu0
    %v1688 = vadd.f32 %v1608, %v1687
    %v1689 = vpop.f32.mrb[0].mxu0
    %v1690 = vpop.f32.mrb[0].mxu0
    %v1691 = vpop.f32.mrb[0].mxu0
    %1692 = vdwg.mxu0
    %v1693 = vld [vmem:[#allocation9] sm:$0xff]
    %v1694 = vld [vmem:[#allocation9 + $0x8] sm:$0xf]
    %v1695 = vld [vmem:[#allocation9 + $0xc] sm:$0xff]
    %v1696 = vld [vmem:[#allocation9 + $0x14] sm:$0xf]
    %v1697 = vld [vmem:[#allocation9 + $0x18] sm:$0xff]
    %v1698 = vld [vmem:[#allocation9 + $0x20] sm:$0xf]
    %v1699 = vld [vmem:[#allocation9 + $0x24] sm:$0xff]
    %v1700 = vld [vmem:[#allocation9 + $0x2c] sm:$0xf]
    %v1701 = vld [vmem:[#allocation9 + $0x30] sm:$0xff]
    %v1702 = vld [vmem:[#allocation9 + $0x38] sm:$0xf]
    %v1703 = vld [vmem:[#allocation9 + $0x3c] sm:$0xff]
    %v1704 = vld [vmem:[#allocation9 + $0x44] sm:$0xf]
    %v1705 = vld [vmem:[#allocation9 + $0x48] sm:$0xff]
    %v1706 = vld [vmem:[#allocation9 + $0x50] sm:$0xf]
    %v1707 = vld [vmem:[#allocation9 + $0x54] sm:$0xff]
    %v1708 = vld [vmem:[#allocation9 + $0x5c] sm:$0xf]
    %v1709 = vld [vmem:[#allocation9 + $0x60] sm:$0xff]
    %v1710 = vld [vmem:[#allocation9 + $0x68] sm:$0xf]
    %v1711 = vld [vmem:[#allocation9 + $0x6c] sm:$0xff]
    %v1712 = vld [vmem:[#allocation9 + $0x74] sm:$0xf]
    %v1713 = vld [vmem:[#allocation9 + $0x78] sm:$0xff]
    %v1714 = vld [vmem:[#allocation9 + $0x80] sm:$0xf]
    %v1715 = vld [vmem:[#allocation9 + $0x84] sm:$0xff]
    %v1716 = vld [vmem:[#allocation9 + $0x8c] sm:$0xf]
    %v1717 = vld [vmem:[#allocation9 + $0x90] sm:$0xff]
    %v1718 = vld [vmem:[#allocation9 + $0x98] sm:$0xf]
    %v1719 = vld [vmem:[#allocation9 + $0x9c] sm:$0xff]
    %v1720 = vld [vmem:[#allocation9 + $0xa4] sm:$0xf]
    %v1721 = vld [vmem:[#allocation9 + $0xa8] sm:$0xff]
    %v1722 = vld [vmem:[#allocation9 + $0xb0] sm:$0xf]
    %v1723 = vld [vmem:[#allocation9 + $0xb4] sm:$0xff]
    %v1724 = vld [vmem:[#allocation9 + $0xbc] sm:$0xf]
    %v1725 = vld [vmem:[%s6] sm:$0x7]
    %v1758 = vunpack.c.l.b16 %v1693
    %v1759 = vunpack.c.h.b16 %v1693
    %v1760 = vunpack.c.l.b16 %v1694
    %v1761 = vunpack.c.l.b16 %v1695
    %v1762 = vunpack.c.h.b16 %v1695
    %v1763 = vunpack.c.l.b16 %v1696
    %v1764 = vunpack.c.l.b16 %v1697
    %v1765 = vunpack.c.h.b16 %v1697
    %v1766 = vunpack.c.l.b16 %v1698
    %v1767 = vunpack.c.l.b16 %v1699
    %v1768 = vunpack.c.h.b16 %v1699
    %v1769 = vunpack.c.l.b16 %v1700
    %v1770 = vunpack.c.l.b16 %v1701
    %v1771 = vunpack.c.h.b16 %v1701
    %v1772 = vunpack.c.l.b16 %v1702
    %v1773 = vunpack.c.l.b16 %v1703
    %v1774 = vunpack.c.h.b16 %v1703
    %v1775 = vunpack.c.l.b16 %v1704
    %v1776 = vunpack.c.l.b16 %v1705
    %v1777 = vunpack.c.h.b16 %v1705
    %v1778 = vunpack.c.l.b16 %v1706
    %v1779 = vunpack.c.l.b16 %v1707
    %v1780 = vunpack.c.h.b16 %v1707
    %v1781 = vunpack.c.l.b16 %v1708
    %v1782 = vunpack.c.l.b16 %v1709
    %v1783 = vunpack.c.h.b16 %v1709
    %v1784 = vunpack.c.l.b16 %v1710
    %v1785 = vunpack.c.l.b16 %v1711
    %v1786 = vunpack.c.h.b16 %v1711
    %v1787 = vunpack.c.l.b16 %v1712
    %v1788 = vunpack.c.l.b16 %v1713
    %v1789 = vunpack.c.h.b16 %v1713
    %v1790 = vunpack.c.l.b16 %v1714
    %v1791 = vunpack.c.l.b16 %v1715
    %v1792 = vunpack.c.h.b16 %v1715
    %v1793 = vunpack.c.l.b16 %v1716
    %v1794 = vunpack.c.l.b16 %v1717
    %v1795 = vunpack.c.h.b16 %v1717
    %v1796 = vunpack.c.l.b16 %v1718
    %v1797 = vunpack.c.l.b16 %v1719
    %v1798 = vunpack.c.h.b16 %v1719
    %v1799 = vunpack.c.l.b16 %v1720
    %v1800 = vunpack.c.l.b16 %v1721
    %v1801 = vunpack.c.h.b16 %v1721
    %v1802 = vunpack.c.l.b16 %v1722
    %v1803 = vunpack.c.l.b16 %v1723
    %v1804 = vunpack.c.h.b16 %v1723
    %v1805 = vunpack.c.l.b16 %v1724
    %v1806 = vpack.c.b16 %v1761, %v1758
    %v1807 = vpack.c.b16 %v1762, %v1759
    %v1808 = vpack.c.b16 %v1763, %v1760
    %v1809 = vpack.c.b16 %v1767, %v1764
    %v1810 = vpack.c.b16 %v1768, %v1765
    %v1811 = vpack.c.b16 %v1769, %v1766
    %v1812 = vpack.c.b16 %v1773, %v1770
    %v1813 = vpack.c.b16 %v1774, %v1771
    %v1814 = vpack.c.b16 %v1775, %v1772
    %v1815 = vpack.c.b16 %v1779, %v1776
    %v1816 = vpack.c.b16 %v1780, %v1777
    %v1817 = vpack.c.b16 %v1781, %v1778
    %v1818 = vpack.c.b16 %v1785, %v1782
    %v1819 = vpack.c.b16 %v1786, %v1783
    %v1820 = vpack.c.b16 %v1787, %v1784
    %v1821 = vpack.c.b16 %v1791, %v1788
    %v1822 = vpack.c.b16 %v1792, %v1789
    %v1823 = vpack.c.b16 %v1793, %v1790
    %v1824 = vpack.c.b16 %v1797, %v1794
    %v1825 = vpack.c.b16 %v1798, %v1795
    %v1826 = vpack.c.b16 %v1799, %v1796
    %v1827 = vpack.c.b16 %v1803, %v1800
    %v1828 = vpack.c.b16 %v1804, %v1801
    %v1829 = vpack.c.b16 %v1805, %v1802
    %v1855 = vlaneseq
    %v1856 = vshrl.u32 %v1855, 7
    %v1857 = vsub.s32 0, %v1856
    %v1858 = vrot.slane %v1725, %v1857
    %v1859 = vlaneseq
    %v1860 = vshrl.u32 %v1859, 7
    %v1861 = vsub.s32 1, %v1860
    %v1862 = vrot.slane %v1725, %v1861
    %v1863 = vlaneseq
    %v1864 = vshrl.u32 %v1863, 7
    %v1865 = vsub.s32 2, %v1864
    %v1866 = vrot.slane %v1725, %v1865
    %1870 = vmatprep.subr.bf16.mxu0 %v1807
    %1871 = vmatpush1.bf16.msra.mxu0 %v1806
    %1872 = vmatprep.subr.bf16.mxu0 %v1810
    %1873 = vmatpush1.bf16.msra.mxu0 %v1809
    %1874 = vmatprep.subr.bf16.mxu0 %v1813
    %1875 = vmatpush1.bf16.msra.mxu0 %v1812
    %1876 = vmatprep.subr.bf16.mxu0 %v1816
    %1877 = vmatpush1.bf16.msra.mxu0 %v1815
    %1878 = vmatprep.subr.bf16.mxu0 %v1819
    %1879 = vmatpush1.bf16.msra.mxu0 %v1818
    %1880 = vmatprep.subr.bf16.mxu0 %v1822
    %1881 = vmatpush1.bf16.msra.mxu0 %v1821
    %1882 = vmatprep.subr.bf16.mxu0 %v1825
    %1883 = vmatpush1.bf16.msra.mxu0 %v1824
    %1884 = vmatprep.subr.bf16.mxu0 %v1828
    %1885 = vmatpush1.bf16.msra.mxu0 %v1827
    %1886 = vmatprep.subr.bf16.mxu0 0
    %1887 = vmatpush1.bf16.msra.mxu0 0
    %1888 = vmatprep.subr.bf16.mxu0 0
    %1889 = vmatpush1.bf16.msra.mxu0 0
    %1890 = vmatprep.subr.bf16.mxu0 0
    %1891 = vmatpush1.bf16.msra.mxu0 0
    %1892 = vmatprep.subr.bf16.mxu0 0
    %1893 = vmatpush1.bf16.msra.mxu0 0
    %1894 = vmatprep.subr.bf16.mxu0 0
    %1895 = vmatpush1.bf16.msra.mxu0 0
    %1896 = vmatprep.subr.bf16.mxu0 0
    %1897 = vmatpush1.bf16.msra.mxu0 0
    %1898 = vmatprep.subr.bf16.mxu0 0
    %1899 = vmatpush1.bf16.msra.mxu0 0
    %1900 = vmatprep.subr.bf16.mxu0 0
    %1901 = vmatpush1.bf16.msra.mxu0 0
    %1902 = vmatprep.mubr.bf16.mxu0 0
    %1903 = vmatmul.mubr.bf16.gmra.mrb[0].mxu0 %v1310
    %v1904 = vpop.f32.mrb[0].mxu0
    %v1905 = vadd.f32 %v1858, %v1904
    %v1906 = vpop.f32.mrb[0].mxu0
    %v1907 = vadd.f32 %v1862, %v1906
    %v1908 = vpop.f32.mrb[0].mxu0
    %v1909 = vpop.f32.mrb[0].mxu0
    %1910 = vdwg.mxu0
    %1911 = vmatprep.subr.bf16.mxu0 0
    %1912 = vmatpush1.bf16.msra.mxu0 %v1808
    %1913 = vmatprep.subr.bf16.mxu0 0
    %1914 = vmatpush1.bf16.msra.mxu0 %v1811
    %1915 = vmatprep.subr.bf16.mxu0 0
    %1916 = vmatpush1.bf16.msra.mxu0 %v1814
    %1917 = vmatprep.subr.bf16.mxu0 0
    %1918 = vmatpush1.bf16.msra.mxu0 %v1817
    %1919 = vmatprep.subr.bf16.mxu0 0
    %1920 = vmatpush1.bf16.msra.mxu0 %v1820
    %1921 = vmatprep.subr.bf16.mxu0 0
    %1922 = vmatpush1.bf16.msra.mxu0 %v1823
    %1923 = vmatprep.subr.bf16.mxu0 0
    %1924 = vmatpush1.bf16.msra.mxu0 %v1826
    %1925 = vmatprep.subr.bf16.mxu0 0
    %1926 = vmatpush1.bf16.msra.mxu0 %v1829
    %1927 = vmatprep.subr.bf16.mxu0 0
    %1928 = vmatpush1.bf16.msra.mxu0 0
    %1929 = vmatprep.subr.bf16.mxu0 0
    %1930 = vmatpush1.bf16.msra.mxu0 0
    %1931 = vmatprep.subr.bf16.mxu0 0
    %1932 = vmatpush1.bf16.msra.mxu0 0
    %1933 = vmatprep.subr.bf16.mxu0 0
    %1934 = vmatpush1.bf16.msra.mxu0 0
    %1935 = vmatprep.subr.bf16.mxu0 0
    %1936 = vmatpush1.bf16.msra.mxu0 0
    %1937 = vmatprep.subr.bf16.mxu0 0
    %1938 = vmatpush1.bf16.msra.mxu0 0
    %1939 = vmatprep.subr.bf16.mxu0 0
    %1940 = vmatpush1.bf16.msra.mxu0 0
    %1941 = vmatprep.subr.bf16.mxu0 0
    %1942 = vmatpush1.bf16.msra.mxu0 0
    %1943 = vmatprep.mubr.bf16.mxu0 0
    %1944 = vmatmul.mubr.bf16.gmra.mrb[0].mxu0 %v1310
    %v1945 = vpop.f32.mrb[0].mxu0
    %v1946 = vadd.f32 %v1866, %v1945
    %v1947 = vpop.f32.mrb[0].mxu0
    %v1948 = vpop.f32.mrb[0].mxu0
    %v1949 = vpop.f32.mrb[0].mxu0
    %1950 = vdwg.mxu0
    %v1951 = vadd.f32 %v1647, %v1905
    %v1952 = vxor.u32 %v1951, 2147483648
    %v1953 = vmul.f32 %v1952, 1.442695
    %v1954 = vpow.pop %v1953
    %v1955 = vadd.f32 %v1954, 1.0
    %v1956 = vrcp.pop %v1955
    %v1957 = vmul.f32 1.0, %v1956
    %v1958 = vadd.f32 %v1649, %v1907
    %v1959 = vxor.u32 %v1958, 2147483648
    %v1960 = vmul.f32 %v1959, 1.442695
    %v1961 = vpow.pop %v1960
    %v1962 = vadd.f32 %v1961, 1.0
    %v1963 = vrcp.pop %v1962
    %v1964 = vmul.f32 1.0, %v1963
    %v1965 = vmul.f32 %v1957, %v1946
    %v1966 = vadd.f32 %v1688, %v1965
    %v1967 = vtanh.pop %v1966
    %v1968 = vsub.f32 1.0, %v1964
    %v1969 = vmul.f32 %v1968, %v1967
    %v1970 = vmul.f32 %v1964, %v1309
    %v1971 = vadd.f32 %v1969, %v1970
    %v1972 = vpack.c.bf16 %v1971, %v1971
    %v1973 = vld [vmem:[#allocation10] sm:$0xf]
    %v1974 = vld [vmem:[#allocation10 + $0x4] sm:$0xf]
    %v1975 = vld [vmem:[#allocation10 + $0x8] sm:$0xf]
    %v1976 = vld [vmem:[#allocation10 + $0xc] sm:$0xf]
    %v1977 = vld [vmem:[#allocation10 + $0x10] sm:$0xf]
    %v1978 = vld [vmem:[#allocation10 + $0x14] sm:$0xf]
    %v1979 = vld [vmem:[#allocation10 + $0x18] sm:$0xf]
    %v1980 = vld [vmem:[#allocation10 + $0x1c] sm:$0xf]
    %v1981 = vld [vmem:[#allocation10 + $0x20] sm:$0xf]
    %v1982 = vld [vmem:[#allocation10 + $0x24] sm:$0xf]
    %v1983 = vld [vmem:[#allocation10 + $0x28] sm:$0xf]
    %v1984 = vld [vmem:[#allocation10 + $0x2c] sm:$0xf]
    %v1985 = vld [vmem:[#allocation10 + $0x30] sm:$0xf]
    %v1986 = vld [vmem:[#allocation10 + $0x34] sm:$0xf]
    %v1987 = vld [vmem:[#allocation10 + $0x38] sm:$0xf]
    %v1988 = vld [vmem:[#allocation10 + $0x3c] sm:$0xf]
    %v1989 = vld [vmem:[%s8] sm:$0x1]
    %v2006 = vunpack.c.l.b16 %v1973
    %v2007 = vunpack.c.l.b16 %v1974
    %v2008 = vunpack.c.l.b16 %v1975
    %v2009 = vunpack.c.l.b16 %v1976
    %v2010 = vunpack.c.l.b16 %v1977
    %v2011 = vunpack.c.l.b16 %v1978
    %v2012 = vunpack.c.l.b16 %v1979
    %v2013 = vunpack.c.l.b16 %v1980
    %v2014 = vunpack.c.l.b16 %v1981
    %v2015 = vunpack.c.l.b16 %v1982
    %v2016 = vunpack.c.l.b16 %v1983
    %v2017 = vunpack.c.l.b16 %v1984
    %v2018 = vunpack.c.l.b16 %v1985
    %v2019 = vunpack.c.l.b16 %v1986
    %v2020 = vunpack.c.l.b16 %v1987
    %v2021 = vunpack.c.l.b16 %v1988
    %v2022 = vpack.c.b16 %v2007, %v2006
    %v2023 = vpack.c.b16 %v2009, %v2008
    %v2024 = vpack.c.b16 %v2011, %v2010
    %v2025 = vpack.c.b16 %v2013, %v2012
    %v2026 = vpack.c.b16 %v2015, %v2014
    %v2027 = vpack.c.b16 %v2017, %v2016
    %v2028 = vpack.c.b16 %v2019, %v2018
    %v2029 = vpack.c.b16 %v2021, %v2020
    %2038 = vmatprep.subr.bf16.mxu0 0
    %2039 = vmatpush1.bf16.msra.mxu0 %v2022
    %2040 = vmatprep.subr.bf16.mxu0 0
    %2041 = vmatpush1.bf16.msra.mxu0 %v2023
    %2042 = vmatprep.subr.bf16.mxu0 0
    %2043 = vmatpush1.bf16.msra.mxu0 %v2024
    %2044 = vmatprep.subr.bf16.mxu0 0
    %2045 = vmatpush1.bf16.msra.mxu0 %v2025
    %2046 = vmatprep.subr.bf16.mxu0 0
    %2047 = vmatpush1.bf16.msra.mxu0 %v2026
    %2048 = vmatprep.subr.bf16.mxu0 0
    %2049 = vmatpush1.bf16.msra.mxu0 %v2027
    %2050 = vmatprep.subr.bf16.mxu0 0
    %2051 = vmatpush1.bf16.msra.mxu0 %v2028
    %2052 = vmatprep.subr.bf16.mxu0 0
    %2053 = vmatpush1.bf16.msra.mxu0 %v2029
    %2054 = vmatprep.subr.bf16.mxu0 0
    %2055 = vmatpush1.bf16.msra.mxu0 0
    %2056 = vmatprep.subr.bf16.mxu0 0
    %2057 = vmatpush1.bf16.msra.mxu0 0
    %2058 = vmatprep.subr.bf16.mxu0 0
    %2059 = vmatpush1.bf16.msra.mxu0 0
    %2060 = vmatprep.subr.bf16.mxu0 0
    %2061 = vmatpush1.bf16.msra.mxu0 0
    %2062 = vmatprep.subr.bf16.mxu0 0
    %2063 = vmatpush1.bf16.msra.mxu0 0
    %2064 = vmatprep.subr.bf16.mxu0 0
    %2065 = vmatpush1.bf16.msra.mxu0 0
    %2066 = vmatprep.subr.bf16.mxu0 0
    %2067 = vmatpush1.bf16.msra.mxu0 0
    %2068 = vmatprep.subr.bf16.mxu0 0
    %2069 = vmatpush1.bf16.msra.mxu0 0
    %2070 = vmatprep.mubr.bf16.mxu0 0
    %2071 = vmatmul.mubr.bf16.gmra.mrb[0].mxu0 %v1972
    %v2072 = vpop.f32.mrb[0].mxu0
    %v2073 = vadd.f32 %v1989, %v2072
    %v2074 = vpop.f32.mrb[0].mxu0
    %v2075 = vpop.f32.mrb[0].mxu0
    %v2076 = vpop.f32.mrb[0].mxu0
    %2077 = vdwg.mxu0
    %v2078 = vsel %vm753, %v2073, -inf
    %2079 = vmax.xlane.f32.xlu0 %v2078
    %v2080 = vpop.xlane.xlu0 %2079
    %v2081 = vsub.f32 %v2073, %v2080
    %v2082 = vmul.f32 %v2081, 1.442695
    %v2083 = vpow.pop %v2082
    %v2084 = vsel %vm753, %v2083, 0.0
    %2085 = vadd.xlane.f32.xlu0 %v2084
    %v2086 = vpop.xlane.xlu0 %2085
    %v2087 = vlog2.pop %v2086
    %v2088 = vmul.f32 %v2087, 0.6931472
    %v2089 = vadd.f32 %v2088, %v2080
    %v2090 = vsub.f32 %v2073, %v2089
    %2091 = vst [vmem:[#allocation12 + $0x2] sm:$0x1] %v2090
    %s2092 = sld [smem:[#allocation2 + $0x3]]
    %s2093 = scalar_lea.vmem [#allocation6], %s2092
    %v2094 = vld [vmem:[%s2093] sm:$0x1]
    %v2095 = vmax.f32 %v2094, 0.0
    %v2096 = vpack.c.bf16 %v2095, %v2095
    %v2097 = vld [vmem:[#allocation7] sm:$0xff]
    %v2098 = vld [vmem:[#allocation7 + $0x8] sm:$0xf]
    %v2099 = vld [vmem:[#allocation7 + $0xc] sm:$0xff]
    %v2100 = vld [vmem:[#allocation7 + $0x14] sm:$0xf]
    %v2101 = vld [vmem:[#allocation7 + $0x18] sm:$0xff]
    %v2102 = vld [vmem:[#allocation7 + $0x20] sm:$0xf]
    %v2103 = vld [vmem:[#allocation7 + $0x24] sm:$0xff]
    %v2104 = vld [vmem:[#allocation7 + $0x2c] sm:$0xf]
    %v2105 = vld [vmem:[#allocation7 + $0x30] sm:$0xff]
    %v2106 = vld [vmem:[#allocation7 + $0x38] sm:$0xf]
    %v2107 = vld [vmem:[#allocation7 + $0x3c] sm:$0xff]
    %v2108 = vld [vmem:[#allocation7 + $0x44] sm:$0xf]
    %v2109 = vld [vmem:[#allocation7 + $0x48] sm:$0xff]
    %v2110 = vld [vmem:[#allocation7 + $0x50] sm:$0xf]
    %v2111 = vld [vmem:[#allocation7 + $0x54] sm:$0xff]
    %v2112 = vld [vmem:[#allocation7 + $0x5c] sm:$0xf]
    %v2113 = vld [vmem:[#allocation7 + $0x60] sm:$0xff]
    %v2114 = vld [vmem:[#allocation7 + $0x68] sm:$0xf]
    %v2115 = vld [vmem:[#allocation7 + $0x6c] sm:$0xff]
    %v2116 = vld [vmem:[#allocation7 + $0x74] sm:$0xf]
    %v2117 = vld [vmem:[#allocation7 + $0x78] sm:$0xff]
    %v2118 = vld [vmem:[#allocation7 + $0x80] sm:$0xf]
    %v2119 = vld [vmem:[#allocation7 + $0x84] sm:$0xff]
    %v2120 = vld [vmem:[#allocation7 + $0x8c] sm:$0xf]
    %v2121 = vld [vmem:[#allocation7 + $0x90] sm:$0xff]
    %v2122 = vld [vmem:[#allocation7 + $0x98] sm:$0xf]
    %v2123 = vld [vmem:[#allocation7 + $0x9c] sm:$0xff]
    %v2124 = vld [vmem:[#allocation7 + $0xa4] sm:$0xf]
    %v2125 = vld [vmem:[#allocation7 + $0xa8] sm:$0xff]
    %v2126 = vld [vmem:[#allocation7 + $0xb0] sm:$0xf]
    %v2127 = vld [vmem:[#allocation7 + $0xb4] sm:$0xff]
    %v2128 = vld [vmem:[#allocation7 + $0xbc] sm:$0xf]
    %v2129 = vld [vmem:[%s5] sm:$0x7]
    %v2162 = vunpack.c.l.b16 %v2097
    %v2163 = vunpack.c.h.b16 %v2097
    %v2164 = vunpack.c.l.b16 %v2098
    %v2165 = vunpack.c.l.b16 %v2099
    %v2166 = vunpack.c.h.b16 %v2099
    %v2167 = vunpack.c.l.b16 %v2100
    %v2168 = vunpack.c.l.b16 %v2101
    %v2169 = vunpack.c.h.b16 %v2101
    %v2170 = vunpack.c.l.b16 %v2102
    %v2171 = vunpack.c.l.b16 %v2103
    %v2172 = vunpack.c.h.b16 %v2103
    %v2173 = vunpack.c.l.b16 %v2104
    %v2174 = vunpack.c.l.b16 %v2105
    %v2175 = vunpack.c.h.b16 %v2105
    %v2176 = vunpack.c.l.b16 %v2106
    %v2177 = vunpack.c.l.b16 %v2107
    %v2178 = vunpack.c.h.b16 %v2107
    %v2179 = vunpack.c.l.b16 %v2108
    %v2180 = vunpack.c.l.b16 %v2109
    %v2181 = vunpack.c.h.b16 %v2109
    %v2182 = vunpack.c.l.b16 %v2110
    %v2183 = vunpack.c.l.b16 %v2111
    %v2184 = vunpack.c.h.b16 %v2111
    %v2185 = vunpack.c.l.b16 %v2112
    %v2186 = vunpack.c.l.b16 %v2113
    %v2187 = vunpack.c.h.b16 %v2113
    %v2188 = vunpack.c.l.b16 %v2114
    %v2189 = vunpack.c.l.b16 %v2115
    %v2190 = vunpack.c.h.b16 %v2115
    %v2191 = vunpack.c.l.b16 %v2116
    %v2192 = vunpack.c.l.b16 %v2117
    %v2193 = vunpack.c.h.b16 %v2117
    %v2194 = vunpack.c.l.b16 %v2118
    %v2195 = vunpack.c.l.b16 %v2119
    %v2196 = vunpack.c.h.b16 %v2119
    %v2197 = vunpack.c.l.b16 %v2120
    %v2198 = vunpack.c.l.b16 %v2121
    %v2199 = vunpack.c.h.b16 %v2121
    %v2200 = vunpack.c.l.b16 %v2122
    %v2201 = vunpack.c.l.b16 %v2123
    %v2202 = vunpack.c.h.b16 %v2123
    %v2203 = vunpack.c.l.b16 %v2124
    %v2204 = vunpack.c.l.b16 %v2125
    %v2205 = vunpack.c.h.b16 %v2125
    %v2206 = vunpack.c.l.b16 %v2126
    %v2207 = vunpack.c.l.b16 %v2127
    %v2208 = vunpack.c.h.b16 %v2127
    %v2209 = vunpack.c.l.b16 %v2128
    %v2210 = vpack.c.b16 %v2165, %v2162
    %v2211 = vpack.c.b16 %v2166, %v2163
    %v2212 = vpack.c.b16 %v2167, %v2164
    %v2213 = vpack.c.b16 %v2171, %v2168
    %v2214 = vpack.c.b16 %v2172, %v2169
    %v2215 = vpack.c.b16 %v2173, %v2170
    %v2216 = vpack.c.b16 %v2177, %v2174
    %v2217 = vpack.c.b16 %v2178, %v2175
    %v2218 = vpack.c.b16 %v2179, %v2176
    %v2219 = vpack.c.b16 %v2183, %v2180
    %v2220 = vpack.c.b16 %v2184, %v2181
    %v2221 = vpack.c.b16 %v2185, %v2182
    %v2222 = vpack.c.b16 %v2189, %v2186
    %v2223 = vpack.c.b16 %v2190, %v2187
    %v2224 = vpack.c.b16 %v2191, %v2188
    %v2225 = vpack.c.b16 %v2195, %v2192
    %v2226 = vpack.c.b16 %v2196, %v2193
    %v2227 = vpack.c.b16 %v2197, %v2194
    %v2228 = vpack.c.b16 %v2201, %v2198
    %v2229 = vpack.c.b16 %v2202, %v2199
    %v2230 = vpack.c.b16 %v2203, %v2200
    %v2231 = vpack.c.b16 %v2207, %v2204
    %v2232 = vpack.c.b16 %v2208, %v2205
    %v2233 = vpack.c.b16 %v2209, %v2206
    %v2259 = vlaneseq
    %v2260 = vshrl.u32 %v2259, 7
    %v2261 = vsub.s32 0, %v2260
    %v2262 = vrot.slane %v2129, %v2261
    %v2263 = vlaneseq
    %v2264 = vshrl.u32 %v2263, 7
    %v2265 = vsub.s32 1, %v2264
    %v2266 = vrot.slane %v2129, %v2265
    %v2267 = vlaneseq
    %v2268 = vshrl.u32 %v2267, 7
    %v2269 = vsub.s32 2, %v2268
    %v2270 = vrot.slane %v2129, %v2269
    %2274 = vmatprep.subr.bf16.mxu0 %v2211
    %2275 = vmatpush1.bf16.msra.mxu0 %v2210
    %2276 = vmatprep.subr.bf16.mxu0 %v2214
    %2277 = vmatpush1.bf16.msra.mxu0 %v2213
    %2278 = vmatprep.subr.bf16.mxu0 %v2217
    %2279 = vmatpush1.bf16.msra.mxu0 %v2216
    %2280 = vmatprep.subr.bf16.mxu0 %v2220
    %2281 = vmatpush1.bf16.msra.mxu0 %v2219
    %2282 = vmatprep.subr.bf16.mxu0 %v2223
    %2283 = vmatpush1.bf16.msra.mxu0 %v2222
    %2284 = vmatprep.subr.bf16.mxu0 %v2226
    %2285 = vmatpush1.bf16.msra.mxu0 %v2225
    %2286 = vmatprep.subr.bf16.mxu0 %v2229
    %2287 = vmatpush1.bf16.msra.mxu0 %v2228
    %2288 = vmatprep.subr.bf16.mxu0 %v2232
    %2289 = vmatpush1.bf16.msra.mxu0 %v2231
    %2290 = vmatprep.subr.bf16.mxu0 0
    %2291 = vmatpush1.bf16.msra.mxu0 0
    %2292 = vmatprep.subr.bf16.mxu0 0
    %2293 = vmatpush1.bf16.msra.mxu0 0
    %2294 = vmatprep.subr.bf16.mxu0 0
    %2295 = vmatpush1.bf16.msra.mxu0 0
    %2296 = vmatprep.subr.bf16.mxu0 0
    %2297 = vmatpush1.bf16.msra.mxu0 0
    %2298 = vmatprep.subr.bf16.mxu0 0
    %2299 = vmatpush1.bf16.msra.mxu0 0
    %2300 = vmatprep.subr.bf16.mxu0 0
    %2301 = vmatpush1.bf16.msra.mxu0 0
    %2302 = vmatprep.subr.bf16.mxu0 0
    %2303 = vmatpush1.bf16.msra.mxu0 0
    %2304 = vmatprep.subr.bf16.mxu0 0
    %2305 = vmatpush1.bf16.msra.mxu0 0
    %2306 = vmatprep.mubr.bf16.mxu0 0
    %2307 = vmatmul.mubr.bf16.gmra.mrb[0].mxu0 %v2096
    %v2308 = vpop.f32.mrb[0].mxu0
    %v2309 = vadd.f32 %v2262, %v2308
    %v2310 = vpop.f32.mrb[0].mxu0
    %v2311 = vadd.f32 %v2266, %v2310
    %v2312 = vpop.f32.mrb[0].mxu0
    %v2313 = vpop.f32.mrb[0].mxu0
    %2314 = vdwg.mxu0
    %2315 = vmatprep.subr.bf16.mxu0 0
    %2316 = vmatpush1.bf16.msra.mxu0 %v2212
    %2317 = vmatprep.subr.bf16.mxu0 0
    %2318 = vmatpush1.bf16.msra.mxu0 %v2215
    %2319 = vmatprep.subr.bf16.mxu0 0
    %2320 = vmatpush1.bf16.msra.mxu0 %v2218
    %2321 = vmatprep.subr.bf16.mxu0 0
    %2322 = vmatpush1.bf16.msra.mxu0 %v2221
    %2323 = vmatprep.subr.bf16.mxu0 0
    %2324 = vmatpush1.bf16.msra.mxu0 %v2224
    %2325 = vmatprep.subr.bf16.mxu0 0
    %2326 = vmatpush1.bf16.msra.mxu0 %v2227
    %2327 = vmatprep.subr.bf16.mxu0 0
    %2328 = vmatpush1.bf16.msra.mxu0 %v2230
    %2329 = vmatprep.subr.bf16.mxu0 0
    %2330 = vmatpush1.bf16.msra.mxu0 %v2233
    %2331 = vmatprep.subr.bf16.mxu0 0
    %2332 = vmatpush1.bf16.msra.mxu0 0
    %2333 = vmatprep.subr.bf16.mxu0 0
    %2334 = vmatpush1.bf16.msra.mxu0 0
    %2335 = vmatprep.subr.bf16.mxu0 0
    %2336 = vmatpush1.bf16.msra.mxu0 0
    %2337 = vmatprep.subr.bf16.mxu0 0
    %2338 = vmatpush1.bf16.msra.mxu0 0
    %2339 = vmatprep.subr.bf16.mxu0 0
    %2340 = vmatpush1.bf16.msra.mxu0 0
    %2341 = vmatprep.subr.bf16.mxu0 0
    %2342 = vmatpush1.bf16.msra.mxu0 0
    %2343 = vmatprep.subr.bf16.mxu0 0
    %2344 = vmatpush1.bf16.msra.mxu0 0
    %2345 = vmatprep.subr.bf16.mxu0 0
    %2346 = vmatpush1.bf16.msra.mxu0 0
    %2347 = vmatprep.mubr.bf16.mxu0 0
    %2348 = vmatmul.mubr.bf16.gmra.mrb[0].mxu0 %v2096
    %v2349 = vpop.f32.mrb[0].mxu0
    %v2350 = vadd.f32 %v2270, %v2349
    %v2351 = vpop.f32.mrb[0].mxu0
    %v2352 = vpop.f32.mrb[0].mxu0
    %v2353 = vpop.f32.mrb[0].mxu0
    %2354 = vdwg.mxu0
    %v2355 = vld [vmem:[#allocation9] sm:$0xff]
    %v2356 = vld [vmem:[#allocation9 + $0x8] sm:$0xf]
    %v2357 = vld [vmem:[#allocation9 + $0xc] sm:$0xff]
    %v2358 = vld [vmem:[#allocation9 + $0x14] sm:$0xf]
    %v2359 = vld [vmem:[#allocation9 + $0x18] sm:$0xff]
    %v2360 = vld [vmem:[#allocation9 + $0x20] sm:$0xf]
    %v2361 = vld [vmem:[#allocation9 + $0x24] sm:$0xff]
    %v2362 = vld [vmem:[#allocation9 + $0x2c] sm:$0xf]
    %v2363 = vld [vmem:[#allocation9 + $0x30] sm:$0xff]
    %v2364 = vld [vmem:[#allocation9 + $0x38] sm:$0xf]
    %v2365 = vld [vmem:[#allocation9 + $0x3c] sm:$0xff]
    %v2366 = vld [vmem:[#allocation9 + $0x44] sm:$0xf]
    %v2367 = vld [vmem:[#allocation9 + $0x48] sm:$0xff]
    %v2368 = vld [vmem:[#allocation9 + $0x50] sm:$0xf]
    %v2369 = vld [vmem:[#allocation9 + $0x54] sm:$0xff]
    %v2370 = vld [vmem:[#allocation9 + $0x5c] sm:$0xf]
    %v2371 = vld [vmem:[#allocation9 + $0x60] sm:$0xff]
    %v2372 = vld [vmem:[#allocation9 + $0x68] sm:$0xf]
    %v2373 = vld [vmem:[#allocation9 + $0x6c] sm:$0xff]
    %v2374 = vld [vmem:[#allocation9 + $0x74] sm:$0xf]
    %v2375 = vld [vmem:[#allocation9 + $0x78] sm:$0xff]
    %v2376 = vld [vmem:[#allocation9 + $0x80] sm:$0xf]
    %v2377 = vld [vmem:[#allocation9 + $0x84] sm:$0xff]
    %v2378 = vld [vmem:[#allocation9 + $0x8c] sm:$0xf]
    %v2379 = vld [vmem:[#allocation9 + $0x90] sm:$0xff]
    %v2380 = vld [vmem:[#allocation9 + $0x98] sm:$0xf]
    %v2381 = vld [vmem:[#allocation9 + $0x9c] sm:$0xff]
    %v2382 = vld [vmem:[#allocation9 + $0xa4] sm:$0xf]
    %v2383 = vld [vmem:[#allocation9 + $0xa8] sm:$0xff]
    %v2384 = vld [vmem:[#allocation9 + $0xb0] sm:$0xf]
    %v2385 = vld [vmem:[#allocation9 + $0xb4] sm:$0xff]
    %v2386 = vld [vmem:[#allocation9 + $0xbc] sm:$0xf]
    %v2387 = vld [vmem:[%s6] sm:$0x7]
    %v2420 = vunpack.c.l.b16 %v2355
    %v2421 = vunpack.c.h.b16 %v2355
    %v2422 = vunpack.c.l.b16 %v2356
    %v2423 = vunpack.c.l.b16 %v2357
    %v2424 = vunpack.c.h.b16 %v2357
    %v2425 = vunpack.c.l.b16 %v2358
    %v2426 = vunpack.c.l.b16 %v2359
    %v2427 = vunpack.c.h.b16 %v2359
    %v2428 = vunpack.c.l.b16 %v2360
    %v2429 = vunpack.c.l.b16 %v2361
    %v2430 = vunpack.c.h.b16 %v2361
    %v2431 = vunpack.c.l.b16 %v2362
    %v2432 = vunpack.c.l.b16 %v2363
    %v2433 = vunpack.c.h.b16 %v2363
    %v2434 = vunpack.c.l.b16 %v2364
    %v2435 = vunpack.c.l.b16 %v2365
    %v2436 = vunpack.c.h.b16 %v2365
    %v2437 = vunpack.c.l.b16 %v2366
    %v2438 = vunpack.c.l.b16 %v2367
    %v2439 = vunpack.c.h.b16 %v2367
    %v2440 = vunpack.c.l.b16 %v2368
    %v2441 = vunpack.c.l.b16 %v2369
    %v2442 = vunpack.c.h.b16 %v2369
    %v2443 = vunpack.c.l.b16 %v2370
    %v2444 = vunpack.c.l.b16 %v2371
    %v2445 = vunpack.c.h.b16 %v2371
    %v2446 = vunpack.c.l.b16 %v2372
    %v2447 = vunpack.c.l.b16 %v2373
    %v2448 = vunpack.c.h.b16 %v2373
    %v2449 = vunpack.c.l.b16 %v2374
    %v2450 = vunpack.c.l.b16 %v2375
    %v2451 = vunpack.c.h.b16 %v2375
    %v2452 = vunpack.c.l.b16 %v2376
    %v2453 = vunpack.c.l.b16 %v2377
    %v2454 = vunpack.c.h.b16 %v2377
    %v2455 = vunpack.c.l.b16 %v2378
    %v2456 = vunpack.c.l.b16 %v2379
    %v2457 = vunpack.c.h.b16 %v2379
    %v2458 = vunpack.c.l.b16 %v2380
    %v2459 = vunpack.c.l.b16 %v2381
    %v2460 = vunpack.c.h.b16 %v2381
    %v2461 = vunpack.c.l.b16 %v2382
    %v2462 = vunpack.c.l.b16 %v2383
    %v2463 = vunpack.c.h.b16 %v2383
    %v2464 = vunpack.c.l.b16 %v2384
    %v2465 = vunpack.c.l.b16 %v2385
    %v2466 = vunpack.c.h.b16 %v2385
    %v2467 = vunpack.c.l.b16 %v2386
    %v2468 = vpack.c.b16 %v2423, %v2420
    %v2469 = vpack.c.b16 %v2424, %v2421
    %v2470 = vpack.c.b16 %v2425, %v2422
    %v2471 = vpack.c.b16 %v2429, %v2426
    %v2472 = vpack.c.b16 %v2430, %v2427
    %v2473 = vpack.c.b16 %v2431, %v2428
    %v2474 = vpack.c.b16 %v2435, %v2432
    %v2475 = vpack.c.b16 %v2436, %v2433
    %v2476 = vpack.c.b16 %v2437, %v2434
    %v2477 = vpack.c.b16 %v2441, %v2438
    %v2478 = vpack.c.b16 %v2442, %v2439
    %v2479 = vpack.c.b16 %v2443, %v2440
    %v2480 = vpack.c.b16 %v2447, %v2444
    %v2481 = vpack.c.b16 %v2448, %v2445
    %v2482 = vpack.c.b16 %v2449, %v2446
    %v2483 = vpack.c.b16 %v2453, %v2450
    %v2484 = vpack.c.b16 %v2454, %v2451
    %v2485 = vpack.c.b16 %v2455, %v2452
    %v2486 = vpack.c.b16 %v2459, %v2456
    %v2487 = vpack.c.b16 %v2460, %v2457
    %v2488 = vpack.c.b16 %v2461, %v2458
    %v2489 = vpack.c.b16 %v2465, %v2462
    %v2490 = vpack.c.b16 %v2466, %v2463
    %v2491 = vpack.c.b16 %v2467, %v2464
    %v2517 = vlaneseq
    %v2518 = vshrl.u32 %v2517, 7
    %v2519 = vsub.s32 0, %v2518
    %v2520 = vrot.slane %v2387, %v2519
    %v2521 = vlaneseq
    %v2522 = vshrl.u32 %v2521, 7
    %v2523 = vsub.s32 1, %v2522
    %v2524 = vrot.slane %v2387, %v2523
    %v2525 = vlaneseq
    %v2526 = vshrl.u32 %v2525, 7
    %v2527 = vsub.s32 2, %v2526
    %v2528 = vrot.slane %v2387, %v2527
    %2532 = vmatprep.subr.bf16.mxu0 %v2469
    %2533 = vmatpush1.bf16.msra.mxu0 %v2468
    %2534 = vmatprep.subr.bf16.mxu0 %v2472
    %2535 = vmatpush1.bf16.msra.mxu0 %v2471
    %2536 = vmatprep.subr.bf16.mxu0 %v2475
    %2537 = vmatpush1.bf16.msra.mxu0 %v2474
    %2538 = vmatprep.subr.bf16.mxu0 %v2478
    %2539 = vmatpush1.bf16.msra.mxu0 %v2477
    %2540 = vmatprep.subr.bf16.mxu0 %v2481
    %2541 = vmatpush1.bf16.msra.mxu0 %v2480
    %2542 = vmatprep.subr.bf16.mxu0 %v2484
    %2543 = vmatpush1.bf16.msra.mxu0 %v2483
    %2544 = vmatprep.subr.bf16.mxu0 %v2487
    %2545 = vmatpush1.bf16.msra.mxu0 %v2486
    %2546 = vmatprep.subr.bf16.mxu0 %v2490
    %2547 = vmatpush1.bf16.msra.mxu0 %v2489
    %2548 = vmatprep.subr.bf16.mxu0 0
    %2549 = vmatpush1.bf16.msra.mxu0 0
    %2550 = vmatprep.subr.bf16.mxu0 0
    %2551 = vmatpush1.bf16.msra.mxu0 0
    %2552 = vmatprep.subr.bf16.mxu0 0
    %2553 = vmatpush1.bf16.msra.mxu0 0
    %2554 = vmatprep.subr.bf16.mxu0 0
    %2555 = vmatpush1.bf16.msra.mxu0 0
    %2556 = vmatprep.subr.bf16.mxu0 0
    %2557 = vmatpush1.bf16.msra.mxu0 0
    %2558 = vmatprep.subr.bf16.mxu0 0
    %2559 = vmatpush1.bf16.msra.mxu0 0
    %2560 = vmatprep.subr.bf16.mxu0 0
    %2561 = vmatpush1.bf16.msra.mxu0 0
    %2562 = vmatprep.subr.bf16.mxu0 0
    %2563 = vmatpush1.bf16.msra.mxu0 0
    %2564 = vmatprep.mubr.bf16.mxu0 0
    %2565 = vmatmul.mubr.bf16.gmra.mrb[0].mxu0 %v1972
    %v2566 = vpop.f32.mrb[0].mxu0
    %v2567 = vadd.f32 %v2520, %v2566
    %v2568 = vpop.f32.mrb[0].mxu0
    %v2569 = vadd.f32 %v2524, %v2568
    %v2570 = vpop.f32.mrb[0].mxu0
    %v2571 = vpop.f32.mrb[0].mxu0
    %2572 = vdwg.mxu0
    %2573 = vmatprep.subr.bf16.mxu0 0
    %2574 = vmatpush1.bf16.msra.mxu0 %v2470
    %2575 = vmatprep.subr.bf16.mxu0 0
    %2576 = vmatpush1.bf16.msra.mxu0 %v2473
    %2577 = vmatprep.subr.bf16.mxu0 0
    %2578 = vmatpush1.bf16.msra.mxu0 %v2476
    %2579 = vmatprep.subr.bf16.mxu0 0
    %2580 = vmatpush1.bf16.msra.mxu0 %v2479
    %2581 = vmatprep.subr.bf16.mxu0 0
    %2582 = vmatpush1.bf16.msra.mxu0 %v2482
    %2583 = vmatprep.subr.bf16.mxu0 0
    %2584 = vmatpush1.bf16.msra.mxu0 %v2485
    %2585 = vmatprep.subr.bf16.mxu0 0
    %2586 = vmatpush1.bf16.msra.mxu0 %v2488
    %2587 = vmatprep.subr.bf16.mxu0 0
    %2588 = vmatpush1.bf16.msra.mxu0 %v2491
    %2589 = vmatprep.subr.bf16.mxu0 0
    %2590 = vmatpush1.bf16.msra.mxu0 0
    %2591 = vmatprep.subr.bf16.mxu0 0
    %2592 = vmatpush1.bf16.msra.mxu0 0
    %2593 = vmatprep.subr.bf16.mxu0 0
    %2594 = vmatpush1.bf16.msra.mxu0 0
    %2595 = vmatprep.subr.bf16.mxu0 0
    %2596 = vmatpush1.bf16.msra.mxu0 0
    %2597 = vmatprep.subr.bf16.mxu0 0
    %2598 = vmatpush1.bf16.msra.mxu0 0
    %2599 = vmatprep.subr.bf16.mxu0 0
    %2600 = vmatpush1.bf16.msra.mxu0 0
    %2601 = vmatprep.subr.bf16.mxu0 0
    %2602 = vmatpush1.bf16.msra.mxu0 0
    %2603 = vmatprep.subr.bf16.mxu0 0
    %2604 = vmatpush1.bf16.msra.mxu0 0
    %2605 = vmatprep.mubr.bf16.mxu0 0
    %2606 = vmatmul.mubr.bf16.gmra.mrb[0].mxu0 %v1972
    %v2607 = vpop.f32.mrb[0].mxu0
    %v2608 = vadd.f32 %v2528, %v2607
    %v2609 = vpop.f32.mrb[0].mxu0
    %v2610 = vpop.f32.mrb[0].mxu0
    %v2611 = vpop.f32.mrb[0].mxu0
    %2612 = vdwg.mxu0
    %v2613 = vadd.f32 %v2309, %v2567
    %v2614 = vxor.u32 %v2613, 2147483648
    %v2615 = vmul.f32 %v2614, 1.442695
    %v2616 = vpow.pop %v2615
    %v2617 = vadd.f32 %v2616, 1.0
    %v2618 = vrcp.pop %v2617
    %v2619 = vmul.f32 1.0, %v2618
    %v2620 = vadd.f32 %v2311, %v2569
    %v2621 = vxor.u32 %v2620, 2147483648
    %v2622 = vmul.f32 %v2621, 1.442695
    %v2623 = vpow.pop %v2622
    %v2624 = vadd.f32 %v2623, 1.0
    %v2625 = vrcp.pop %v2624
    %v2626 = vmul.f32 1.0, %v2625
    %v2627 = vmul.f32 %v2619, %v2608
    %v2628 = vadd.f32 %v2350, %v2627
    %v2629 = vtanh.pop %v2628
    %v2630 = vsub.f32 1.0, %v2626
    %v2631 = vmul.f32 %v2630, %v2629
    %v2632 = vmul.f32 %v2626, %v1971
    %v2633 = vadd.f32 %v2631, %v2632
    %v2634 = vpack.c.bf16 %v2633, %v2633
    %v2635 = vld [vmem:[#allocation10] sm:$0xf]
    %v2636 = vld [vmem:[#allocation10 + $0x4] sm:$0xf]
    %v2637 = vld [vmem:[#allocation10 + $0x8] sm:$0xf]
    %v2638 = vld [vmem:[#allocation10 + $0xc] sm:$0xf]
    %v2639 = vld [vmem:[#allocation10 + $0x10] sm:$0xf]
    %v2640 = vld [vmem:[#allocation10 + $0x14] sm:$0xf]
    %v2641 = vld [vmem:[#allocation10 + $0x18] sm:$0xf]
    %v2642 = vld [vmem:[#allocation10 + $0x1c] sm:$0xf]
    %v2643 = vld [vmem:[#allocation10 + $0x20] sm:$0xf]
    %v2644 = vld [vmem:[#allocation10 + $0x24] sm:$0xf]
    %v2645 = vld [vmem:[#allocation10 + $0x28] sm:$0xf]
    %v2646 = vld [vmem:[#allocation10 + $0x2c] sm:$0xf]
    %v2647 = vld [vmem:[#allocation10 + $0x30] sm:$0xf]
    %v2648 = vld [vmem:[#allocation10 + $0x34] sm:$0xf]
    %v2649 = vld [vmem:[#allocation10 + $0x38] sm:$0xf]
    %v2650 = vld [vmem:[#allocation10 + $0x3c] sm:$0xf]
    %v2651 = vld [vmem:[%s8] sm:$0x1]
    %v2668 = vunpack.c.l.b16 %v2635
    %v2669 = vunpack.c.l.b16 %v2636
    %v2670 = vunpack.c.l.b16 %v2637
    %v2671 = vunpack.c.l.b16 %v2638
    %v2672 = vunpack.c.l.b16 %v2639
    %v2673 = vunpack.c.l.b16 %v2640
    %v2674 = vunpack.c.l.b16 %v2641
    %v2675 = vunpack.c.l.b16 %v2642
    %v2676 = vunpack.c.l.b16 %v2643
    %v2677 = vunpack.c.l.b16 %v2644
    %v2678 = vunpack.c.l.b16 %v2645
    %v2679 = vunpack.c.l.b16 %v2646
    %v2680 = vunpack.c.l.b16 %v2647
    %v2681 = vunpack.c.l.b16 %v2648
    %v2682 = vunpack.c.l.b16 %v2649
    %v2683 = vunpack.c.l.b16 %v2650
    %v2684 = vpack.c.b16 %v2669, %v2668
    %v2685 = vpack.c.b16 %v2671, %v2670
    %v2686 = vpack.c.b16 %v2673, %v2672
    %v2687 = vpack.c.b16 %v2675, %v2674
    %v2688 = vpack.c.b16 %v2677, %v2676
    %v2689 = vpack.c.b16 %v2679, %v2678
    %v2690 = vpack.c.b16 %v2681, %v2680
    %v2691 = vpack.c.b16 %v2683, %v2682
    %2700 = vmatprep.subr.bf16.mxu0 0
    %2701 = vmatpush1.bf16.msra.mxu0 %v2684
    %2702 = vmatprep.subr.bf16.mxu0 0
    %2703 = vmatpush1.bf16.msra.mxu0 %v2685
    %2704 = vmatprep.subr.bf16.mxu0 0
    %2705 = vmatpush1.bf16.msra.mxu0 %v2686
    %2706 = vmatprep.subr.bf16.mxu0 0
    %2707 = vmatpush1.bf16.msra.mxu0 %v2687
    %2708 = vmatprep.subr.bf16.mxu0 0
    %2709 = vmatpush1.bf16.msra.mxu0 %v2688
    %2710 = vmatprep.subr.bf16.mxu0 0
    %2711 = vmatpush1.bf16.msra.mxu0 %v2689
    %2712 = vmatprep.subr.bf16.mxu0 0
    %2713 = vmatpush1.bf16.msra.mxu0 %v2690
    %2714 = vmatprep.subr.bf16.mxu0 0
    %2715 = vmatpush1.bf16.msra.mxu0 %v2691
    %2716 = vmatprep.subr.bf16.mxu0 0
    %2717 = vmatpush1.bf16.msra.mxu0 0
    %2718 = vmatprep.subr.bf16.mxu0 0
    %2719 = vmatpush1.bf16.msra.mxu0 0
    %2720 = vmatprep.subr.bf16.mxu0 0
    %2721 = vmatpush1.bf16.msra.mxu0 0
    %2722 = vmatprep.subr.bf16.mxu0 0
    %2723 = vmatpush1.bf16.msra.mxu0 0
    %2724 = vmatprep.subr.bf16.mxu0 0
    %2725 = vmatpush1.bf16.msra.mxu0 0
    %2726 = vmatprep.subr.bf16.mxu0 0
    %2727 = vmatpush1.bf16.msra.mxu0 0
    %2728 = vmatprep.subr.bf16.mxu0 0
    %2729 = vmatpush1.bf16.msra.mxu0 0
    %2730 = vmatprep.subr.bf16.mxu0 0
    %2731 = vmatpush1.bf16.msra.mxu0 0
    %2732 = vmatprep.mubr.bf16.mxu0 0
    %2733 = vmatmul.mubr.bf16.gmra.mrb[0].mxu0 %v2634
    %v2734 = vpop.f32.mrb[0].mxu0
    %v2735 = vadd.f32 %v2651, %v2734
    %v2736 = vpop.f32.mrb[0].mxu0
    %v2737 = vpop.f32.mrb[0].mxu0
    %v2738 = vpop.f32.mrb[0].mxu0
    %2739 = vdwg.mxu0
    %v2740 = vsel %vm753, %v2735, -inf
    %2741 = vmax.xlane.f32.xlu0 %v2740
    %v2742 = vpop.xlane.xlu0 %2741
    %v2743 = vsub.f32 %v2735, %v2742
    %v2744 = vmul.f32 %v2743, 1.442695
    %v2745 = vpow.pop %v2744
    %v2746 = vsel %vm753, %v2745, 0.0
    %2747 = vadd.xlane.f32.xlu0 %v2746
    %v2748 = vpop.xlane.xlu0 %2747
    %v2749 = vlog2.pop %v2748
    %v2750 = vmul.f32 %v2749, 0.6931472
    %v2751 = vadd.f32 %v2750, %v2742
    %v2752 = vsub.f32 %v2735, %v2751
    %2753 = vst [vmem:[#allocation12 + $0x3] sm:$0x1] %v2752
    %s2754 = sld [smem:[#allocation2 + $0x4]]
    %s2755 = scalar_lea.vmem [#allocation6], %s2754
    %v2756 = vld [vmem:[%s2755] sm:$0x1]
    %v2757 = vmax.f32 %v2756, 0.0
    %v2758 = vpack.c.bf16 %v2757, %v2757
    %v2759 = vld [vmem:[#allocation7] sm:$0xff]
    %v2760 = vld [vmem:[#allocation7 + $0x8] sm:$0xf]
    %v2761 = vld [vmem:[#allocation7 + $0xc] sm:$0xff]
    %v2762 = vld [vmem:[#allocation7 + $0x14] sm:$0xf]
    %v2763 = vld [vmem:[#allocation7 + $0x18] sm:$0xff]
    %v2764 = vld [vmem:[#allocation7 + $0x20] sm:$0xf]
    %v2765 = vld [vmem:[#allocation7 + $0x24] sm:$0xff]
    %v2766 = vld [vmem:[#allocation7 + $0x2c] sm:$0xf]
    %v2767 = vld [vmem:[#allocation7 + $0x30] sm:$0xff]
    %v2768 = vld [vmem:[#allocation7 + $0x38] sm:$0xf]
    %v2769 = vld [vmem:[#allocation7 + $0x3c] sm:$0xff]
    %v2770 = vld [vmem:[#allocation7 + $0x44] sm:$0xf]
    %v2771 = vld [vmem:[#allocation7 + $0x48] sm:$0xff]
    %v2772 = vld [vmem:[#allocation7 + $0x50] sm:$0xf]
    %v2773 = vld [vmem:[#allocation7 + $0x54] sm:$0xff]
    %v2774 = vld [vmem:[#allocation7 + $0x5c] sm:$0xf]
    %v2775 = vld [vmem:[#allocation7 + $0x60] sm:$0xff]
    %v2776 = vld [vmem:[#allocation7 + $0x68] sm:$0xf]
    %v2777 = vld [vmem:[#allocation7 + $0x6c] sm:$0xff]
    %v2778 = vld [vmem:[#allocation7 + $0x74] sm:$0xf]
    %v2779 = vld [vmem:[#allocation7 + $0x78] sm:$0xff]
    %v2780 = vld [vmem:[#allocation7 + $0x80] sm:$0xf]
    %v2781 = vld [vmem:[#allocation7 + $0x84] sm:$0xff]
    %v2782 = vld [vmem:[#allocation7 + $0x8c] sm:$0xf]
    %v2783 = vld [vmem:[#allocation7 + $0x90] sm:$0xff]
    %v2784 = vld [vmem:[#allocation7 + $0x98] sm:$0xf]
    %v2785 = vld [vmem:[#allocation7 + $0x9c] sm:$0xff]
    %v2786 = vld [vmem:[#allocation7 + $0xa4] sm:$0xf]
    %v2787 = vld [vmem:[#allocation7 + $0xa8] sm:$0xff]
    %v2788 = vld [vmem:[#allocation7 + $0xb0] sm:$0xf]
    %v2789 = vld [vmem:[#allocation7 + $0xb4] sm:$0xff]
    %v2790 = vld [vmem:[#allocation7 + $0xbc] sm:$0xf]
    %v2791 = vld [vmem:[%s5] sm:$0x7]
    %v2824 = vunpack.c.l.b16 %v2759
    %v2825 = vunpack.c.h.b16 %v2759
    %v2826 = vunpack.c.l.b16 %v2760
    %v2827 = vunpack.c.l.b16 %v2761
    %v2828 = vunpack.c.h.b16 %v2761
    %v2829 = vunpack.c.l.b16 %v2762
    %v2830 = vunpack.c.l.b16 %v2763
    %v2831 = vunpack.c.h.b16 %v2763
    %v2832 = vunpack.c.l.b16 %v2764
    %v2833 = vunpack.c.l.b16 %v2765
    %v2834 = vunpack.c.h.b16 %v2765
    %v2835 = vunpack.c.l.b16 %v2766
    %v2836 = vunpack.c.l.b16 %v2767
    %v2837 = vunpack.c.h.b16 %v2767
    %v2838 = vunpack.c.l.b16 %v2768
    %v2839 = vunpack.c.l.b16 %v2769
    %v2840 = vunpack.c.h.b16 %v2769
    %v2841 = vunpack.c.l.b16 %v2770
    %v2842 = vunpack.c.l.b16 %v2771
    %v2843 = vunpack.c.h.b16 %v2771
    %v2844 = vunpack.c.l.b16 %v2772
    %v2845 = vunpack.c.l.b16 %v2773
    %v2846 = vunpack.c.h.b16 %v2773
    %v2847 = vunpack.c.l.b16 %v2774
    %v2848 = vunpack.c.l.b16 %v2775
    %v2849 = vunpack.c.h.b16 %v2775
    %v2850 = vunpack.c.l.b16 %v2776
    %v2851 = vunpack.c.l.b16 %v2777
    %v2852 = vunpack.c.h.b16 %v2777
    %v2853 = vunpack.c.l.b16 %v2778
    %v2854 = vunpack.c.l.b16 %v2779
    %v2855 = vunpack.c.h.b16 %v2779
    %v2856 = vunpack.c.l.b16 %v2780
    %v2857 = vunpack.c.l.b16 %v2781
    %v2858 = vunpack.c.h.b16 %v2781
    %v2859 = vunpack.c.l.b16 %v2782
    %v2860 = vunpack.c.l.b16 %v2783
    %v2861 = vunpack.c.h.b16 %v2783
    %v2862 = vunpack.c.l.b16 %v2784
    %v2863 = vunpack.c.l.b16 %v2785
    %v2864 = vunpack.c.h.b16 %v2785
    %v2865 = vunpack.c.l.b16 %v2786
    %v2866 = vunpack.c.l.b16 %v2787
    %v2867 = vunpack.c.h.b16 %v2787
    %v2868 = vunpack.c.l.b16 %v2788
    %v2869 = vunpack.c.l.b16 %v2789
    %v2870 = vunpack.c.h.b16 %v2789
    %v2871 = vunpack.c.l.b16 %v2790
    %v2872 = vpack.c.b16 %v2827, %v2824
    %v2873 = vpack.c.b16 %v2828, %v2825
    %v2874 = vpack.c.b16 %v2829, %v2826
    %v2875 = vpack.c.b16 %v2833, %v2830
    %v2876 = vpack.c.b16 %v2834, %v2831
    %v2877 = vpack.c.b16 %v2835, %v2832
    %v2878 = vpack.c.b16 %v2839, %v2836
    %v2879 = vpack.c.b16 %v2840, %v2837
    %v2880 = vpack.c.b16 %v2841, %v2838
    %v2881 = vpack.c.b16 %v2845, %v2842
    %v2882 = vpack.c.b16 %v2846, %v2843
    %v2883 = vpack.c.b16 %v2847, %v2844
    %v2884 = vpack.c.b16 %v2851, %v2848
    %v2885 = vpack.c.b16 %v2852, %v2849
    %v2886 = vpack.c.b16 %v2853, %v2850
    %v2887 = vpack.c.b16 %v2857, %v2854
    %v2888 = vpack.c.b16 %v2858, %v2855
    %v2889 = vpack.c.b16 %v2859, %v2856
    %v2890 = vpack.c.b16 %v2863, %v2860
    %v2891 = vpack.c.b16 %v2864, %v2861
    %v2892 = vpack.c.b16 %v2865, %v2862
    %v2893 = vpack.c.b16 %v2869, %v2866
    %v2894 = vpack.c.b16 %v2870, %v2867
    %v2895 = vpack.c.b16 %v2871, %v2868
    %v2921 = vlaneseq
    %v2922 = vshrl.u32 %v2921, 7
    %v2923 = vsub.s32 0, %v2922
    %v2924 = vrot.slane %v2791, %v2923
    %v2925 = vlaneseq
    %v2926 = vshrl.u32 %v2925, 7
    %v2927 = vsub.s32 1, %v2926
    %v2928 = vrot.slane %v2791, %v2927
    %v2929 = vlaneseq
    %v2930 = vshrl.u32 %v2929, 7
    %v2931 = vsub.s32 2, %v2930
    %v2932 = vrot.slane %v2791, %v2931
    %2936 = vmatprep.subr.bf16.mxu0 %v2873
    %2937 = vmatpush1.bf16.msra.mxu0 %v2872
    %2938 = vmatprep.subr.bf16.mxu0 %v2876
    %2939 = vmatpush1.bf16.msra.mxu0 %v2875
    %2940 = vmatprep.subr.bf16.mxu0 %v2879
    %2941 = vmatpush1.bf16.msra.mxu0 %v2878
    %2942 = vmatprep.subr.bf16.mxu0 %v2882
    %2943 = vmatpush1.bf16.msra.mxu0 %v2881
    %2944 = vmatprep.subr.bf16.mxu0 %v2885
    %2945 = vmatpush1.bf16.msra.mxu0 %v2884
    %2946 = vmatprep.subr.bf16.mxu0 %v2888
    %2947 = vmatpush1.bf16.msra.mxu0 %v2887
    %2948 = vmatprep.subr.bf16.mxu0 %v2891
    %2949 = vmatpush1.bf16.msra.mxu0 %v2890
    %2950 = vmatprep.subr.bf16.mxu0 %v2894
    %2951 = vmatpush1.bf16.msra.mxu0 %v2893
    %2952 = vmatprep.subr.bf16.mxu0 0
    %2953 = vmatpush1.bf16.msra.mxu0 0
    %2954 = vmatprep.subr.bf16.mxu0 0
    %2955 = vmatpush1.bf16.msra.mxu0 0
    %2956 = vmatprep.subr.bf16.mxu0 0
    %2957 = vmatpush1.bf16.msra.mxu0 0
    %2958 = vmatprep.subr.bf16.mxu0 0
    %2959 = vmatpush1.bf16.msra.mxu0 0
    %2960 = vmatprep.subr.bf16.mxu0 0
    %2961 = vmatpush1.bf16.msra.mxu0 0
    %2962 = vmatprep.subr.bf16.mxu0 0
    %2963 = vmatpush1.bf16.msra.mxu0 0
    %2964 = vmatprep.subr.bf16.mxu0 0
    %2965 = vmatpush1.bf16.msra.mxu0 0
    %2966 = vmatprep.subr.bf16.mxu0 0
    %2967 = vmatpush1.bf16.msra.mxu0 0
    %2968 = vmatprep.mubr.bf16.mxu0 0
    %2969 = vmatmul.mubr.bf16.gmra.mrb[0].mxu0 %v2758
    %v2970 = vpop.f32.mrb[0].mxu0
    %v2971 = vadd.f32 %v2924, %v2970
    %v2972 = vpop.f32.mrb[0].mxu0
    %v2973 = vadd.f32 %v2928, %v2972
    %v2974 = vpop.f32.mrb[0].mxu0
    %v2975 = vpop.f32.mrb[0].mxu0
    %2976 = vdwg.mxu0
    %2977 = vmatprep.subr.bf16.mxu0 0
    %2978 = vmatpush1.bf16.msra.mxu0 %v2874
    %2979 = vmatprep.subr.bf16.mxu0 0
    %2980 = vmatpush1.bf16.msra.mxu0 %v2877
    %2981 = vmatprep.subr.bf16.mxu0 0
    %2982 = vmatpush1.bf16.msra.mxu0 %v2880
    %2983 = vmatprep.subr.bf16.mxu0 0
    %2984 = vmatpush1.bf16.msra.mxu0 %v2883
    %2985 = vmatprep.subr.bf16.mxu0 0
    %2986 = vmatpush1.bf16.msra.mxu0 %v2886
    %2987 = vmatprep.subr.bf16.mxu0 0
    %2988 = vmatpush1.bf16.msra.mxu0 %v2889
    %2989 = vmatprep.subr.bf16.mxu0 0
    %2990 = vmatpush1.bf16.msra.mxu0 %v2892
    %2991 = vmatprep.subr.bf16.mxu0 0
    %2992 = vmatpush1.bf16.msra.mxu0 %v2895
    %2993 = vmatprep.subr.bf16.mxu0 0
    %2994 = vmatpush1.bf16.msra.mxu0 0
    %2995 = vmatprep.subr.bf16.mxu0 0
    %2996 = vmatpush1.bf16.msra.mxu0 0
    %2997 = vmatprep.subr.bf16.mxu0 0
    %2998 = vmatpush1.bf16.msra.mxu0 0
    %2999 = vmatprep.subr.bf16.mxu0 0
    %3000 = vmatpush1.bf16.msra.mxu0 0
    %3001 = vmatprep.subr.bf16.mxu0 0
    %3002 = vmatpush1.bf16.msra.mxu0 0
    %3003 = vmatprep.subr.bf16.mxu0 0
    %3004 = vmatpush1.bf16.msra.mxu0 0
    %3005 = vmatprep.subr.bf16.mxu0 0
    %3006 = vmatpush1.bf16.msra.mxu0 0
    %3007 = vmatprep.subr.bf16.mxu0 0
    %3008 = vmatpush1.bf16.msra.mxu0 0
    %3009 = vmatprep.mubr.bf16.mxu0 0
    %3010 = vmatmul.mubr.bf16.gmra.mrb[0].mxu0 %v2758
    %v3011 = vpop.f32.mrb[0].mxu0
    %v3012 = vadd.f32 %v2932, %v3011
    %v3013 = vpop.f32.mrb[0].mxu0
    %v3014 = vpop.f32.mrb[0].mxu0
    %v3015 = vpop.f32.mrb[0].mxu0
    %3016 = vdwg.mxu0
    %v3017 = vld [vmem:[#allocation9] sm:$0xff]
    %v3018 = vld [vmem:[#allocation9 + $0x8] sm:$0xf]
    %v3019 = vld [vmem:[#allocation9 + $0xc] sm:$0xff]
    %v3020 = vld [vmem:[#allocation9 + $0x14] sm:$0xf]
    %v3021 = vld [vmem:[#allocation9 + $0x18] sm:$0xff]
    %v3022 = vld [vmem:[#allocation9 + $0x20] sm:$0xf]
    %v3023 = vld [vmem:[#allocation9 + $0x24] sm:$0xff]
    %v3024 = vld [vmem:[#allocation9 + $0x2c] sm:$0xf]
    %v3025 = vld [vmem:[#allocation9 + $0x30] sm:$0xff]
    %v3026 = vld [vmem:[#allocation9 + $0x38] sm:$0xf]
    %v3027 = vld [vmem:[#allocation9 + $0x3c] sm:$0xff]
    %v3028 = vld [vmem:[#allocation9 + $0x44] sm:$0xf]
    %v3029 = vld [vmem:[#allocation9 + $0x48] sm:$0xff]
    %v3030 = vld [vmem:[#allocation9 + $0x50] sm:$0xf]
    %v3031 = vld [vmem:[#allocation9 + $0x54] sm:$0xff]
    %v3032 = vld [vmem:[#allocation9 + $0x5c] sm:$0xf]
    %v3033 = vld [vmem:[#allocation9 + $0x60] sm:$0xff]
    %v3034 = vld [vmem:[#allocation9 + $0x68] sm:$0xf]
    %v3035 = vld [vmem:[#allocation9 + $0x6c] sm:$0xff]
    %v3036 = vld [vmem:[#allocation9 + $0x74] sm:$0xf]
    %v3037 = vld [vmem:[#allocation9 + $0x78] sm:$0xff]
    %v3038 = vld [vmem:[#allocation9 + $0x80] sm:$0xf]
    %v3039 = vld [vmem:[#allocation9 + $0x84] sm:$0xff]
    %v3040 = vld [vmem:[#allocation9 + $0x8c] sm:$0xf]
    %v3041 = vld [vmem:[#allocation9 + $0x90] sm:$0xff]
    %v3042 = vld [vmem:[#allocation9 + $0x98] sm:$0xf]
    %v3043 = vld [vmem:[#allocation9 + $0x9c] sm:$0xff]
    %v3044 = vld [vmem:[#allocation9 + $0xa4] sm:$0xf]
    %v3045 = vld [vmem:[#allocation9 + $0xa8] sm:$0xff]
    %v3046 = vld [vmem:[#allocation9 + $0xb0] sm:$0xf]
    %v3047 = vld [vmem:[#allocation9 + $0xb4] sm:$0xff]
    %v3048 = vld [vmem:[#allocation9 + $0xbc] sm:$0xf]
    %v3049 = vld [vmem:[%s6] sm:$0x7]
    %v3082 = vunpack.c.l.b16 %v3017
    %v3083 = vunpack.c.h.b16 %v3017
    %v3084 = vunpack.c.l.b16 %v3018
    %v3085 = vunpack.c.l.b16 %v3019
    %v3086 = vunpack.c.h.b16 %v3019
    %v3087 = vunpack.c.l.b16 %v3020
    %v3088 = vunpack.c.l.b16 %v3021
    %v3089 = vunpack.c.h.b16 %v3021
    %v3090 = vunpack.c.l.b16 %v3022
    %v3091 = vunpack.c.l.b16 %v3023
    %v3092 = vunpack.c.h.b16 %v3023
    %v3093 = vunpack.c.l.b16 %v3024
    %v3094 = vunpack.c.l.b16 %v3025
    %v3095 = vunpack.c.h.b16 %v3025
    %v3096 = vunpack.c.l.b16 %v3026
    %v3097 = vunpack.c.l.b16 %v3027
    %v3098 = vunpack.c.h.b16 %v3027
    %v3099 = vunpack.c.l.b16 %v3028
    %v3100 = vunpack.c.l.b16 %v3029
    %v3101 = vunpack.c.h.b16 %v3029
    %v3102 = vunpack.c.l.b16 %v3030
    %v3103 = vunpack.c.l.b16 %v3031
    %v3104 = vunpack.c.h.b16 %v3031
    %v3105 = vunpack.c.l.b16 %v3032
    %v3106 = vunpack.c.l.b16 %v3033
    %v3107 = vunpack.c.h.b16 %v3033
    %v3108 = vunpack.c.l.b16 %v3034
    %v3109 = vunpack.c.l.b16 %v3035
    %v3110 = vunpack.c.h.b16 %v3035
    %v3111 = vunpack.c.l.b16 %v3036
    %v3112 = vunpack.c.l.b16 %v3037
    %v3113 = vunpack.c.h.b16 %v3037
    %v3114 = vunpack.c.l.b16 %v3038
    %v3115 = vunpack.c.l.b16 %v3039
    %v3116 = vunpack.c.h.b16 %v3039
    %v3117 = vunpack.c.l.b16 %v3040
    %v3118 = vunpack.c.l.b16 %v3041
    %v3119 = vunpack.c.h.b16 %v3041
    %v3120 = vunpack.c.l.b16 %v3042
    %v3121 = vunpack.c.l.b16 %v3043
    %v3122 = vunpack.c.h.b16 %v3043
    %v3123 = vunpack.c.l.b16 %v3044
    %v3124 = vunpack.c.l.b16 %v3045
    %v3125 = vunpack.c.h.b16 %v3045
    %v3126 = vunpack.c.l.b16 %v3046
    %v3127 = vunpack.c.l.b16 %v3047
    %v3128 = vunpack.c.h.b16 %v3047
    %v3129 = vunpack.c.l.b16 %v3048
    %v3130 = vpack.c.b16 %v3085, %v3082
    %v3131 = vpack.c.b16 %v3086, %v3083
    %v3132 = vpack.c.b16 %v3087, %v3084
    %v3133 = vpack.c.b16 %v3091, %v3088
    %v3134 = vpack.c.b16 %v3092, %v3089
    %v3135 = vpack.c.b16 %v3093, %v3090
    %v3136 = vpack.c.b16 %v3097, %v3094
    %v3137 = vpack.c.b16 %v3098, %v3095
    %v3138 = vpack.c.b16 %v3099, %v3096
    %v3139 = vpack.c.b16 %v3103, %v3100
    %v3140 = vpack.c.b16 %v3104, %v3101
    %v3141 = vpack.c.b16 %v3105, %v3102
    %v3142 = vpack.c.b16 %v3109, %v3106
    %v3143 = vpack.c.b16 %v3110, %v3107
    %v3144 = vpack.c.b16 %v3111, %v3108
    %v3145 = vpack.c.b16 %v3115, %v3112
    %v3146 = vpack.c.b16 %v3116, %v3113
    %v3147 = vpack.c.b16 %v3117, %v3114
    %v3148 = vpack.c.b16 %v3121, %v3118
    %v3149 = vpack.c.b16 %v3122, %v3119
    %v3150 = vpack.c.b16 %v3123, %v3120
    %v3151 = vpack.c.b16 %v3127, %v3124
    %v3152 = vpack.c.b16 %v3128, %v3125
    %v3153 = vpack.c.b16 %v3129, %v3126
    %v3179 = vlaneseq
    %v3180 = vshrl.u32 %v3179, 7
    %v3181 = vsub.s32 0, %v3180
    %v3182 = vrot.slane %v3049, %v3181
    %v3183 = vlaneseq
    %v3184 = vshrl.u32 %v3183, 7
    %v3185 = vsub.s32 1, %v3184
    %v3186 = vrot.slane %v3049, %v3185
    %v3187 = vlaneseq
    %v3188 = vshrl.u32 %v3187, 7
    %v3189 = vsub.s32 2, %v3188
    %v3190 = vrot.slane %v3049, %v3189
    %3194 = vmatprep.subr.bf16.mxu0 %v3131
    %3195 = vmatpush1.bf16.msra.mxu0 %v3130
    %3196 = vmatprep.subr.bf16.mxu0 %v3134
    %3197 = vmatpush1.bf16.msra.mxu0 %v3133
    %3198 = vmatprep.subr.bf16.mxu0 %v3137
    %3199 = vmatpush1.bf16.msra.mxu0 %v3136
    %3200 = vmatprep.subr.bf16.mxu0 %v3140
    %3201 = vmatpush1.bf16.msra.mxu0 %v3139
    %3202 = vmatprep.subr.bf16.mxu0 %v3143
    %3203 = vmatpush1.bf16.msra.mxu0 %v3142
    %3204 = vmatprep.subr.bf16.mxu0 %v3146
    %3205 = vmatpush1.bf16.msra.mxu0 %v3145
    %3206 = vmatprep.subr.bf16.mxu0 %v3149
    %3207 = vmatpush1.bf16.msra.mxu0 %v3148
    %3208 = vmatprep.subr.bf16.mxu0 %v3152
    %3209 = vmatpush1.bf16.msra.mxu0 %v3151
    %3210 = vmatprep.subr.bf16.mxu0 0
    %3211 = vmatpush1.bf16.msra.mxu0 0
    %3212 = vmatprep.subr.bf16.mxu0 0
    %3213 = vmatpush1.bf16.msra.mxu0 0
    %3214 = vmatprep.subr.bf16.mxu0 0
    %3215 = vmatpush1.bf16.msra.mxu0 0
    %3216 = vmatprep.subr.bf16.mxu0 0
    %3217 = vmatpush1.bf16.msra.mxu0 0
    %3218 = vmatprep.subr.bf16.mxu0 0
    %3219 = vmatpush1.bf16.msra.mxu0 0
    %3220 = vmatprep.subr.bf16.mxu0 0
    %3221 = vmatpush1.bf16.msra.mxu0 0
    %3222 = vmatprep.subr.bf16.mxu0 0
    %3223 = vmatpush1.bf16.msra.mxu0 0
    %3224 = vmatprep.subr.bf16.mxu0 0
    %3225 = vmatpush1.bf16.msra.mxu0 0
    %3226 = vmatprep.mubr.bf16.mxu0 0
    %3227 = vmatmul.mubr.bf16.gmra.mrb[0].mxu0 %v2634
    %v3228 = vpop.f32.mrb[0].mxu0
    %v3229 = vadd.f32 %v3182, %v3228
    %v3230 = vpop.f32.mrb[0].mxu0
    %v3231 = vadd.f32 %v3186, %v3230
    %v3232 = vpop.f32.mrb[0].mxu0
    %v3233 = vpop.f32.mrb[0].mxu0
    %3234 = vdwg.mxu0
    %3235 = vmatprep.subr.bf16.mxu0 0
    %3236 = vmatpush1.bf16.msra.mxu0 %v3132
    %3237 = vmatprep.subr.bf16.mxu0 0
    %3238 = vmatpush1.bf16.msra.mxu0 %v3135
    %3239 = vmatprep.subr.bf16.mxu0 0
    %3240 = vmatpush1.bf16.msra.mxu0 %v3138
    %3241 = vmatprep.subr.bf16.mxu0 0
    %3242 = vmatpush1.bf16.msra.mxu0 %v3141
    %3243 = vmatprep.subr.bf16.mxu0 0
    %3244 = vmatpush1.bf16.msra.mxu0 %v3144
    %3245 = vmatprep.subr.bf16.mxu0 0
    %3246 = vmatpush1.bf16.msra.mxu0 %v3147
    %3247 = vmatprep.subr.bf16.mxu0 0
    %3248 = vmatpush1.bf16.msra.mxu0 %v3150
    %3249 = vmatprep.subr.bf16.mxu0 0
    %3250 = vmatpush1.bf16.msra.mxu0 %v3153
    %3251 = vmatprep.subr.bf16.mxu0 0
    %3252 = vmatpush1.bf16.msra.mxu0 0
    %3253 = vmatprep.subr.bf16.mxu0 0
    %3254 = vmatpush1.bf16.msra.mxu0 0
    %3255 = vmatprep.subr.bf16.mxu0 0
    %3256 = vmatpush1.bf16.msra.mxu0 0
    %3257 = vmatprep.subr.bf16.mxu0 0
    %3258 = vmatpush1.bf16.msra.mxu0 0
    %3259 = vmatprep.subr.bf16.mxu0 0
    %3260 = vmatpush1.bf16.msra.mxu0 0
    %3261 = vmatprep.subr.bf16.mxu0 0
    %3262 = vmatpush1.bf16.msra.mxu0 0
    %3263 = vmatprep.subr.bf16.mxu0 0
    %3264 = vmatpush1.bf16.msra.mxu0 0
    %3265 = vmatprep.subr.bf16.mxu0 0
    %3266 = vmatpush1.bf16.msra.mxu0 0
    %3267 = vmatprep.mubr.bf16.mxu0 0
    %3268 = vmatmul.mubr.bf16.gmra.mrb[0].mxu0 %v2634
    %v3269 = vpop.f32.mrb[0].mxu0
    %v3270 = vadd.f32 %v3190, %v3269
    %v3271 = vpop.f32.mrb[0].mxu0
    %v3272 = vpop.f32.mrb[0].mxu0
    %v3273 = vpop.f32.mrb[0].mxu0
    %3274 = vdwg.mxu0
    %v3275 = vadd.f32 %v2971, %v3229
    %v3276 = vxor.u32 %v3275, 2147483648
    %v3277 = vmul.f32 %v3276, 1.442695
    %v3278 = vpow.pop %v3277
    %v3279 = vadd.f32 %v3278, 1.0
    %v3280 = vrcp.pop %v3279
    %v3281 = vmul.f32 1.0, %v3280
    %v3282 = vadd.f32 %v2973, %v3231
    %v3283 = vxor.u32 %v3282, 2147483648
    %v3284 = vmul.f32 %v3283, 1.442695
    %v3285 = vpow.pop %v3284
    %v3286 = vadd.f32 %v3285, 1.0
    %v3287 = vrcp.pop %v3286
    %v3288 = vmul.f32 1.0, %v3287
    %v3289 = vmul.f32 %v3281, %v3270
    %v3290 = vadd.f32 %v3012, %v3289
    %v3291 = vtanh.pop %v3290
    %v3292 = vsub.f32 1.0, %v3288
    %v3293 = vmul.f32 %v3292, %v3291
    %v3294 = vmul.f32 %v3288, %v2633
    %v3295 = vadd.f32 %v3293, %v3294
    %v3296 = vpack.c.bf16 %v3295, %v3295
    %v3297 = vld [vmem:[#allocation10] sm:$0xf]
    %v3298 = vld [vmem:[#allocation10 + $0x4] sm:$0xf]
    %v3299 = vld [vmem:[#allocation10 + $0x8] sm:$0xf]
    %v3300 = vld [vmem:[#allocation10 + $0xc] sm:$0xf]
    %v3301 = vld [vmem:[#allocation10 + $0x10] sm:$0xf]
    %v3302 = vld [vmem:[#allocation10 + $0x14] sm:$0xf]
    %v3303 = vld [vmem:[#allocation10 + $0x18] sm:$0xf]
    %v3304 = vld [vmem:[#allocation10 + $0x1c] sm:$0xf]
    %v3305 = vld [vmem:[#allocation10 + $0x20] sm:$0xf]
    %v3306 = vld [vmem:[#allocation10 + $0x24] sm:$0xf]
    %v3307 = vld [vmem:[#allocation10 + $0x28] sm:$0xf]
    %v3308 = vld [vmem:[#allocation10 + $0x2c] sm:$0xf]
    %v3309 = vld [vmem:[#allocation10 + $0x30] sm:$0xf]
    %v3310 = vld [vmem:[#allocation10 + $0x34] sm:$0xf]
    %v3311 = vld [vmem:[#allocation10 + $0x38] sm:$0xf]
    %v3312 = vld [vmem:[#allocation10 + $0x3c] sm:$0xf]
    %v3313 = vld [vmem:[%s8] sm:$0x1]
    %v3330 = vunpack.c.l.b16 %v3297
    %v3331 = vunpack.c.l.b16 %v3298
    %v3332 = vunpack.c.l.b16 %v3299
    %v3333 = vunpack.c.l.b16 %v3300
    %v3334 = vunpack.c.l.b16 %v3301
    %v3335 = vunpack.c.l.b16 %v3302
    %v3336 = vunpack.c.l.b16 %v3303
    %v3337 = vunpack.c.l.b16 %v3304
    %v3338 = vunpack.c.l.b16 %v3305
    %v3339 = vunpack.c.l.b16 %v3306
    %v3340 = vunpack.c.l.b16 %v3307
    %v3341 = vunpack.c.l.b16 %v3308
    %v3342 = vunpack.c.l.b16 %v3309
    %v3343 = vunpack.c.l.b16 %v3310
    %v3344 = vunpack.c.l.b16 %v3311
    %v3345 = vunpack.c.l.b16 %v3312
    %v3346 = vpack.c.b16 %v3331, %v3330
    %v3347 = vpack.c.b16 %v3333, %v3332
    %v3348 = vpack.c.b16 %v3335, %v3334
    %v3349 = vpack.c.b16 %v3337, %v3336
    %v3350 = vpack.c.b16 %v3339, %v3338
    %v3351 = vpack.c.b16 %v3341, %v3340
    %v3352 = vpack.c.b16 %v3343, %v3342
    %v3353 = vpack.c.b16 %v3345, %v3344
    %3362 = vmatprep.subr.bf16.mxu0 0
    %3363 = vmatpush1.bf16.msra.mxu0 %v3346
    %3364 = vmatprep.subr.bf16.mxu0 0
    %3365 = vmatpush1.bf16.msra.mxu0 %v3347
    %3366 = vmatprep.subr.bf16.mxu0 0
    %3367 = vmatpush1.bf16.msra.mxu0 %v3348
    %3368 = vmatprep.subr.bf16.mxu0 0
    %3369 = vmatpush1.bf16.msra.mxu0 %v3349
    %3370 = vmatprep.subr.bf16.mxu0 0
    %3371 = vmatpush1.bf16.msra.mxu0 %v3350
    %3372 = vmatprep.subr.bf16.mxu0 0
    %3373 = vmatpush1.bf16.msra.mxu0 %v3351
    %3374 = vmatprep.subr.bf16.mxu0 0
    %3375 = vmatpush1.bf16.msra.mxu0 %v3352
    %3376 = vmatprep.subr.bf16.mxu0 0
    %3377 = vmatpush1.bf16.msra.mxu0 %v3353
    %3378 = vmatprep.subr.bf16.mxu0 0
    %3379 = vmatpush1.bf16.msra.mxu0 0
    %3380 = vmatprep.subr.bf16.mxu0 0
    %3381 = vmatpush1.bf16.msra.mxu0 0
    %3382 = vmatprep.subr.bf16.mxu0 0
    %3383 = vmatpush1.bf16.msra.mxu0 0
    %3384 = vmatprep.subr.bf16.mxu0 0
    %3385 = vmatpush1.bf16.msra.mxu0 0
    %3386 = vmatprep.subr.bf16.mxu0 0
    %3387 = vmatpush1.bf16.msra.mxu0 0
    %3388 = vmatprep.subr.bf16.mxu0 0
    %3389 = vmatpush1.bf16.msra.mxu0 0
    %3390 = vmatprep.subr.bf16.mxu0 0
    %3391 = vmatpush1.bf16.msra.mxu0 0
    %3392 = vmatprep.subr.bf16.mxu0 0
    %3393 = vmatpush1.bf16.msra.mxu0 0
    %3394 = vmatprep.mubr.bf16.mxu0 0
    %3395 = vmatmul.mubr.bf16.gmra.mrb[0].mxu0 %v3296
    %v3396 = vpop.f32.mrb[0].mxu0
    %v3397 = vadd.f32 %v3313, %v3396
    %v3398 = vpop.f32.mrb[0].mxu0
    %v3399 = vpop.f32.mrb[0].mxu0
    %v3400 = vpop.f32.mrb[0].mxu0
    %3401 = vdwg.mxu0
    %v3402 = vsel %vm753, %v3397, -inf
    %3403 = vmax.xlane.f32.xlu0 %v3402
    %v3404 = vpop.xlane.xlu0 %3403
    %v3405 = vsub.f32 %v3397, %v3404
    %v3406 = vmul.f32 %v3405, 1.442695
    %v3407 = vpow.pop %v3406
    %v3408 = vsel %vm753, %v3407, 0.0
    %3409 = vadd.xlane.f32.xlu0 %v3408
    %v3410 = vpop.xlane.xlu0 %3409
    %v3411 = vlog2.pop %v3410
    %v3412 = vmul.f32 %v3411, 0.6931472
    %v3413 = vadd.f32 %v3412, %v3404
    %v3414 = vsub.f32 %v3397, %v3413
    %3415 = vst [vmem:[#allocation12 + $0x4] sm:$0x1] %v3414
    %s3416 = sld [smem:[#allocation2 + $0x5]]
    %s3417 = scalar_lea.vmem [#allocation6], %s3416
    %v3418 = vld [vmem:[%s3417] sm:$0x1]
    %v3419 = vmax.f32 %v3418, 0.0
    %v3420 = vpack.c.bf16 %v3419, %v3419
    %v3421 = vld [vmem:[#allocation7] sm:$0xff]
    %v3422 = vld [vmem:[#allocation7 + $0x8] sm:$0xf]
    %v3423 = vld [vmem:[#allocation7 + $0xc] sm:$0xff]
    %v3424 = vld [vmem:[#allocation7 + $0x14] sm:$0xf]
    %v3425 = vld [vmem:[#allocation7 + $0x18] sm:$0xff]
    %v3426 = vld [vmem:[#allocation7 + $0x20] sm:$0xf]
    %v3427 = vld [vmem:[#allocation7 + $0x24] sm:$0xff]
    %v3428 = vld [vmem:[#allocation7 + $0x2c] sm:$0xf]
    %v3429 = vld [vmem:[#allocation7 + $0x30] sm:$0xff]
    %v3430 = vld [vmem:[#allocation7 + $0x38] sm:$0xf]
    %v3431 = vld [vmem:[#allocation7 + $0x3c] sm:$0xff]
    %v3432 = vld [vmem:[#allocation7 + $0x44] sm:$0xf]
    %v3433 = vld [vmem:[#allocation7 + $0x48] sm:$0xff]
    %v3434 = vld [vmem:[#allocation7 + $0x50] sm:$0xf]
    %v3435 = vld [vmem:[#allocation7 + $0x54] sm:$0xff]
    %v3436 = vld [vmem:[#allocation7 + $0x5c] sm:$0xf]
    %v3437 = vld [vmem:[#allocation7 + $0x60] sm:$0xff]
    %v3438 = vld [vmem:[#allocation7 + $0x68] sm:$0xf]
    %v3439 = vld [vmem:[#allocation7 + $0x6c] sm:$0xff]
    %v3440 = vld [vmem:[#allocation7 + $0x74] sm:$0xf]
    %v3441 = vld [vmem:[#allocation7 + $0x78] sm:$0xff]
    %v3442 = vld [vmem:[#allocation7 + $0x80] sm:$0xf]
    %v3443 = vld [vmem:[#allocation7 + $0x84] sm:$0xff]
    %v3444 = vld [vmem:[#allocation7 + $0x8c] sm:$0xf]
    %v3445 = vld [vmem:[#allocation7 + $0x90] sm:$0xff]
    %v3446 = vld [vmem:[#allocation7 + $0x98] sm:$0xf]
    %v3447 = vld [vmem:[#allocation7 + $0x9c] sm:$0xff]
    %v3448 = vld [vmem:[#allocation7 + $0xa4] sm:$0xf]
    %v3449 = vld [vmem:[#allocation7 + $0xa8] sm:$0xff]
    %v3450 = vld [vmem:[#allocation7 + $0xb0] sm:$0xf]
    %v3451 = vld [vmem:[#allocation7 + $0xb4] sm:$0xff]
    %v3452 = vld [vmem:[#allocation7 + $0xbc] sm:$0xf]
    %v3453 = vld [vmem:[%s5] sm:$0x7]
    %v3486 = vunpack.c.l.b16 %v3421
    %v3487 = vunpack.c.h.b16 %v3421
    %v3488 = vunpack.c.l.b16 %v3422
    %v3489 = vunpack.c.l.b16 %v3423
    %v3490 = vunpack.c.h.b16 %v3423
    %v3491 = vunpack.c.l.b16 %v3424
    %v3492 = vunpack.c.l.b16 %v3425
    %v3493 = vunpack.c.h.b16 %v3425
    %v3494 = vunpack.c.l.b16 %v3426
    %v3495 = vunpack.c.l.b16 %v3427
    %v3496 = vunpack.c.h.b16 %v3427
    %v3497 = vunpack.c.l.b16 %v3428
    %v3498 = vunpack.c.l.b16 %v3429
    %v3499 = vunpack.c.h.b16 %v3429
    %v3500 = vunpack.c.l.b16 %v3430
    %v3501 = vunpack.c.l.b16 %v3431
    %v3502 = vunpack.c.h.b16 %v3431
    %v3503 = vunpack.c.l.b16 %v3432
    %v3504 = vunpack.c.l.b16 %v3433
    %v3505 = vunpack.c.h.b16 %v3433
    %v3506 = vunpack.c.l.b16 %v3434
    %v3507 = vunpack.c.l.b16 %v3435
    %v3508 = vunpack.c.h.b16 %v3435
    %v3509 = vunpack.c.l.b16 %v3436
    %v3510 = vunpack.c.l.b16 %v3437
    %v3511 = vunpack.c.h.b16 %v3437
    %v3512 = vunpack.c.l.b16 %v3438
    %v3513 = vunpack.c.l.b16 %v3439
    %v3514 = vunpack.c.h.b16 %v3439
    %v3515 = vunpack.c.l.b16 %v3440
    %v3516 = vunpack.c.l.b16 %v3441
    %v3517 = vunpack.c.h.b16 %v3441
    %v3518 = vunpack.c.l.b16 %v3442
    %v3519 = vunpack.c.l.b16 %v3443
    %v3520 = vunpack.c.h.b16 %v3443
    %v3521 = vunpack.c.l.b16 %v3444
    %v3522 = vunpack.c.l.b16 %v3445
    %v3523 = vunpack.c.h.b16 %v3445
    %v3524 = vunpack.c.l.b16 %v3446
    %v3525 = vunpack.c.l.b16 %v3447
    %v3526 = vunpack.c.h.b16 %v3447
    %v3527 = vunpack.c.l.b16 %v3448
    %v3528 = vunpack.c.l.b16 %v3449
    %v3529 = vunpack.c.h.b16 %v3449
    %v3530 = vunpack.c.l.b16 %v3450
    %v3531 = vunpack.c.l.b16 %v3451
    %v3532 = vunpack.c.h.b16 %v3451
    %v3533 = vunpack.c.l.b16 %v3452
    %v3534 = vpack.c.b16 %v3489, %v3486
    %v3535 = vpack.c.b16 %v3490, %v3487
    %v3536 = vpack.c.b16 %v3491, %v3488
    %v3537 = vpack.c.b16 %v3495, %v3492
    %v3538 = vpack.c.b16 %v3496, %v3493
    %v3539 = vpack.c.b16 %v3497, %v3494
    %v3540 = vpack.c.b16 %v3501, %v3498
    %v3541 = vpack.c.b16 %v3502, %v3499
    %v3542 = vpack.c.b16 %v3503, %v3500
    %v3543 = vpack.c.b16 %v3507, %v3504
    %v3544 = vpack.c.b16 %v3508, %v3505
    %v3545 = vpack.c.b16 %v3509, %v3506
    %v3546 = vpack.c.b16 %v3513, %v3510
    %v3547 = vpack.c.b16 %v3514, %v3511
    %v3548 = vpack.c.b16 %v3515, %v3512
    %v3549 = vpack.c.b16 %v3519, %v3516
    %v3550 = vpack.c.b16 %v3520, %v3517
    %v3551 = vpack.c.b16 %v3521, %v3518
    %v3552 = vpack.c.b16 %v3525, %v3522
    %v3553 = vpack.c.b16 %v3526, %v3523
    %v3554 = vpack.c.b16 %v3527, %v3524
    %v3555 = vpack.c.b16 %v3531, %v3528
    %v3556 = vpack.c.b16 %v3532, %v3529
    %v3557 = vpack.c.b16 %v3533, %v3530
    %v3583 = vlaneseq
    %v3584 = vshrl.u32 %v3583, 7
    %v3585 = vsub.s32 0, %v3584
    %v3586 = vrot.slane %v3453, %v3585
    %v3587 = vlaneseq
    %v3588 = vshrl.u32 %v3587, 7
    %v3589 = vsub.s32 1, %v3588
    %v3590 = vrot.slane %v3453, %v3589
    %v3591 = vlaneseq
    %v3592 = vshrl.u32 %v3591, 7
    %v3593 = vsub.s32 2, %v3592
    %v3594 = vrot.slane %v3453, %v3593
    %3598 = vmatprep.subr.bf16.mxu0 %v3535
    %3599 = vmatpush1.bf16.msra.mxu0 %v3534
    %3600 = vmatprep.subr.bf16.mxu0 %v3538
    %3601 = vmatpush1.bf16.msra.mxu0 %v3537
    %3602 = vmatprep.subr.bf16.mxu0 %v3541
    %3603 = vmatpush1.bf16.msra.mxu0 %v3540
    %3604 = vmatprep.subr.bf16.mxu0 %v3544
    %3605 = vmatpush1.bf16.msra.mxu0 %v3543
    %3606 = vmatprep.subr.bf16.mxu0 %v3547
    %3607 = vmatpush1.bf16.msra.mxu0 %v3546
    %3608 = vmatprep.subr.bf16.mxu0 %v3550
    %3609 = vmatpush1.bf16.msra.mxu0 %v3549
    %3610 = vmatprep.subr.bf16.mxu0 %v3553
    %3611 = vmatpush1.bf16.msra.mxu0 %v3552
    %3612 = vmatprep.subr.bf16.mxu0 %v3556
    %3613 = vmatpush1.bf16.msra.mxu0 %v3555
    %3614 = vmatprep.subr.bf16.mxu0 0
    %3615 = vmatpush1.bf16.msra.mxu0 0
    %3616 = vmatprep.subr.bf16.mxu0 0
    %3617 = vmatpush1.bf16.msra.mxu0 0
    %3618 = vmatprep.subr.bf16.mxu0 0
    %3619 = vmatpush1.bf16.msra.mxu0 0
    %3620 = vmatprep.subr.bf16.mxu0 0
    %3621 = vmatpush1.bf16.msra.mxu0 0
    %3622 = vmatprep.subr.bf16.mxu0 0
    %3623 = vmatpush1.bf16.msra.mxu0 0
    %3624 = vmatprep.subr.bf16.mxu0 0
    %3625 = vmatpush1.bf16.msra.mxu0 0
    %3626 = vmatprep.subr.bf16.mxu0 0
    %3627 = vmatpush1.bf16.msra.mxu0 0
    %3628 = vmatprep.subr.bf16.mxu0 0
    %3629 = vmatpush1.bf16.msra.mxu0 0
    %3630 = vmatprep.mubr.bf16.mxu0 0
    %3631 = vmatmul.mubr.bf16.gmra.mrb[0].mxu0 %v3420
    %v3632 = vpop.f32.mrb[0].mxu0
    %v3633 = vadd.f32 %v3586, %v3632
    %v3634 = vpop.f32.mrb[0].mxu0
    %v3635 = vadd.f32 %v3590, %v3634
    %v3636 = vpop.f32.mrb[0].mxu0
    %v3637 = vpop.f32.mrb[0].mxu0
    %3638 = vdwg.mxu0
    %3639 = vmatprep.subr.bf16.mxu0 0
    %3640 = vmatpush1.bf16.msra.mxu0 %v3536
    %3641 = vmatprep.subr.bf16.mxu0 0
    %3642 = vmatpush1.bf16.msra.mxu0 %v3539
    %3643 = vmatprep.subr.bf16.mxu0 0
    %3644 = vmatpush1.bf16.msra.mxu0 %v3542
    %3645 = vmatprep.subr.bf16.mxu0 0
    %3646 = vmatpush1.bf16.msra.mxu0 %v3545
    %3647 = vmatprep.subr.bf16.mxu0 0
    %3648 = vmatpush1.bf16.msra.mxu0 %v3548
    %3649 = vmatprep.subr.bf16.mxu0 0
    %3650 = vmatpush1.bf16.msra.mxu0 %v3551
    %3651 = vmatprep.subr.bf16.mxu0 0
    %3652 = vmatpush1.bf16.msra.mxu0 %v3554
    %3653 = vmatprep.subr.bf16.mxu0 0
    %3654 = vmatpush1.bf16.msra.mxu0 %v3557
    %3655 = vmatprep.subr.bf16.mxu0 0
    %3656 = vmatpush1.bf16.msra.mxu0 0
    %3657 = vmatprep.subr.bf16.mxu0 0
    %3658 = vmatpush1.bf16.msra.mxu0 0
    %3659 = vmatprep.subr.bf16.mxu0 0
    %3660 = vmatpush1.bf16.msra.mxu0 0
    %3661 = vmatprep.subr.bf16.mxu0 0
    %3662 = vmatpush1.bf16.msra.mxu0 0
    %3663 = vmatprep.subr.bf16.mxu0 0
    %3664 = vmatpush1.bf16.msra.mxu0 0
    %3665 = vmatprep.subr.bf16.mxu0 0
    %3666 = vmatpush1.bf16.msra.mxu0 0
    %3667 = vmatprep.subr.bf16.mxu0 0
    %3668 = vmatpush1.bf16.msra.mxu0 0
    %3669 = vmatprep.subr.bf16.mxu0 0
    %3670 = vmatpush1.bf16.msra.mxu0 0
    %3671 = vmatprep.mubr.bf16.mxu0 0
    %3672 = vmatmul.mubr.bf16.gmra.mrb[0].mxu0 %v3420
    %v3673 = vpop.f32.mrb[0].mxu0
    %v3674 = vadd.f32 %v3594, %v3673
    %v3675 = vpop.f32.mrb[0].mxu0
    %v3676 = vpop.f32.mrb[0].mxu0
    %v3677 = vpop.f32.mrb[0].mxu0
    %3678 = vdwg.mxu0
    %v3679 = vld [vmem:[#allocation9] sm:$0xff]
    %v3680 = vld [vmem:[#allocation9 + $0x8] sm:$0xf]
    %v3681 = vld [vmem:[#allocation9 + $0xc] sm:$0xff]
    %v3682 = vld [vmem:[#allocation9 + $0x14] sm:$0xf]
    %v3683 = vld [vmem:[#allocation9 + $0x18] sm:$0xff]
    %v3684 = vld [vmem:[#allocation9 + $0x20] sm:$0xf]
    %v3685 = vld [vmem:[#allocation9 + $0x24] sm:$0xff]
    %v3686 = vld [vmem:[#allocation9 + $0x2c] sm:$0xf]
    %v3687 = vld [vmem:[#allocation9 + $0x30] sm:$0xff]
    %v3688 = vld [vmem:[#allocation9 + $0x38] sm:$0xf]
    %v3689 = vld [vmem:[#allocation9 + $0x3c] sm:$0xff]
    %v3690 = vld [vmem:[#allocation9 + $0x44] sm:$0xf]
    %v3691 = vld [vmem:[#allocation9 + $0x48] sm:$0xff]
    %v3692 = vld [vmem:[#allocation9 + $0x50] sm:$0xf]
    %v3693 = vld [vmem:[#allocation9 + $0x54] sm:$0xff]
    %v3694 = vld [vmem:[#allocation9 + $0x5c] sm:$0xf]
    %v3695 = vld [vmem:[#allocation9 + $0x60] sm:$0xff]
    %v3696 = vld [vmem:[#allocation9 + $0x68] sm:$0xf]
    %v3697 = vld [vmem:[#allocation9 + $0x6c] sm:$0xff]
    %v3698 = vld [vmem:[#allocation9 + $0x74] sm:$0xf]
    %v3699 = vld [vmem:[#allocation9 + $0x78] sm:$0xff]
    %v3700 = vld [vmem:[#allocation9 + $0x80] sm:$0xf]
    %v3701 = vld [vmem:[#allocation9 + $0x84] sm:$0xff]
    %v3702 = vld [vmem:[#allocation9 + $0x8c] sm:$0xf]
    %v3703 = vld [vmem:[#allocation9 + $0x90] sm:$0xff]
    %v3704 = vld [vmem:[#allocation9 + $0x98] sm:$0xf]
    %v3705 = vld [vmem:[#allocation9 + $0x9c] sm:$0xff]
    %v3706 = vld [vmem:[#allocation9 + $0xa4] sm:$0xf]
    %v3707 = vld [vmem:[#allocation9 + $0xa8] sm:$0xff]
    %v3708 = vld [vmem:[#allocation9 + $0xb0] sm:$0xf]
    %v3709 = vld [vmem:[#allocation9 + $0xb4] sm:$0xff]
    %v3710 = vld [vmem:[#allocation9 + $0xbc] sm:$0xf]
    %v3711 = vld [vmem:[%s6] sm:$0x7]
    %v3744 = vunpack.c.l.b16 %v3679
    %v3745 = vunpack.c.h.b16 %v3679
    %v3746 = vunpack.c.l.b16 %v3680
    %v3747 = vunpack.c.l.b16 %v3681
    %v3748 = vunpack.c.h.b16 %v3681
    %v3749 = vunpack.c.l.b16 %v3682
    %v3750 = vunpack.c.l.b16 %v3683
    %v3751 = vunpack.c.h.b16 %v3683
    %v3752 = vunpack.c.l.b16 %v3684
    %v3753 = vunpack.c.l.b16 %v3685
    %v3754 = vunpack.c.h.b16 %v3685
    %v3755 = vunpack.c.l.b16 %v3686
    %v3756 = vunpack.c.l.b16 %v3687
    %v3757 = vunpack.c.h.b16 %v3687
    %v3758 = vunpack.c.l.b16 %v3688
    %v3759 = vunpack.c.l.b16 %v3689
    %v3760 = vunpack.c.h.b16 %v3689
    %v3761 = vunpack.c.l.b16 %v3690
    %v3762 = vunpack.c.l.b16 %v3691
    %v3763 = vunpack.c.h.b16 %v3691
    %v3764 = vunpack.c.l.b16 %v3692
    %v3765 = vunpack.c.l.b16 %v3693
    %v3766 = vunpack.c.h.b16 %v3693
    %v3767 = vunpack.c.l.b16 %v3694
    %v3768 = vunpack.c.l.b16 %v3695
    %v3769 = vunpack.c.h.b16 %v3695
    %v3770 = vunpack.c.l.b16 %v3696
    %v3771 = vunpack.c.l.b16 %v3697
    %v3772 = vunpack.c.h.b16 %v3697
    %v3773 = vunpack.c.l.b16 %v3698
    %v3774 = vunpack.c.l.b16 %v3699
    %v3775 = vunpack.c.h.b16 %v3699
    %v3776 = vunpack.c.l.b16 %v3700
    %v3777 = vunpack.c.l.b16 %v3701
    %v3778 = vunpack.c.h.b16 %v3701
    %v3779 = vunpack.c.l.b16 %v3702
    %v3780 = vunpack.c.l.b16 %v3703
    %v3781 = vunpack.c.h.b16 %v3703
    %v3782 = vunpack.c.l.b16 %v3704
    %v3783 = vunpack.c.l.b16 %v3705
    %v3784 = vunpack.c.h.b16 %v3705
    %v3785 = vunpack.c.l.b16 %v3706
    %v3786 = vunpack.c.l.b16 %v3707
    %v3787 = vunpack.c.h.b16 %v3707
    %v3788 = vunpack.c.l.b16 %v3708
    %v3789 = vunpack.c.l.b16 %v3709
    %v3790 = vunpack.c.h.b16 %v3709
    %v3791 = vunpack.c.l.b16 %v3710
    %v3792 = vpack.c.b16 %v3747, %v3744
    %v3793 = vpack.c.b16 %v3748, %v3745
    %v3794 = vpack.c.b16 %v3749, %v3746
    %v3795 = vpack.c.b16 %v3753, %v3750
    %v3796 = vpack.c.b16 %v3754, %v3751
    %v3797 = vpack.c.b16 %v3755, %v3752
    %v3798 = vpack.c.b16 %v3759, %v3756
    %v3799 = vpack.c.b16 %v3760, %v3757
    %v3800 = vpack.c.b16 %v3761, %v3758
    %v3801 = vpack.c.b16 %v3765, %v3762
    %v3802 = vpack.c.b16 %v3766, %v3763
    %v3803 = vpack.c.b16 %v3767, %v3764
    %v3804 = vpack.c.b16 %v3771, %v3768
    %v3805 = vpack.c.b16 %v3772, %v3769
    %v3806 = vpack.c.b16 %v3773, %v3770
    %v3807 = vpack.c.b16 %v3777, %v3774
    %v3808 = vpack.c.b16 %v3778, %v3775
    %v3809 = vpack.c.b16 %v3779, %v3776
    %v3810 = vpack.c.b16 %v3783, %v3780
    %v3811 = vpack.c.b16 %v3784, %v3781
    %v3812 = vpack.c.b16 %v3785, %v3782
    %v3813 = vpack.c.b16 %v3789, %v3786
    %v3814 = vpack.c.b16 %v3790, %v3787
    %v3815 = vpack.c.b16 %v3791, %v3788
    %v3841 = vlaneseq
    %v3842 = vshrl.u32 %v3841, 7
    %v3843 = vsub.s32 0, %v3842
    %v3844 = vrot.slane %v3711, %v3843
    %v3845 = vlaneseq
    %v3846 = vshrl.u32 %v3845, 7
    %v3847 = vsub.s32 1, %v3846
    %v3848 = vrot.slane %v3711, %v3847
    %v3849 = vlaneseq
    %v3850 = vshrl.u32 %v3849, 7
    %v3851 = vsub.s32 2, %v3850
    %v3852 = vrot.slane %v3711, %v3851
    %3856 = vmatprep.subr.bf16.mxu0 %v3793
    %3857 = vmatpush1.bf16.msra.mxu0 %v3792
    %3858 = vmatprep.subr.bf16.mxu0 %v3796
    %3859 = vmatpush1.bf16.msra.mxu0 %v3795
    %3860 = vmatprep.subr.bf16.mxu0 %v3799
    %3861 = vmatpush1.bf16.msra.mxu0 %v3798
    %3862 = vmatprep.subr.bf16.mxu0 %v3802
    %3863 = vmatpush1.bf16.msra.mxu0 %v3801
    %3864 = vmatprep.subr.bf16.mxu0 %v3805
    %3865 = vmatpush1.bf16.msra.mxu0 %v3804
    %3866 = vmatprep.subr.bf16.mxu0 %v3808
    %3867 = vmatpush1.bf16.msra.mxu0 %v3807
    %3868 = vmatprep.subr.bf16.mxu0 %v3811
    %3869 = vmatpush1.bf16.msra.mxu0 %v3810
    %3870 = vmatprep.subr.bf16.mxu0 %v3814
    %3871 = vmatpush1.bf16.msra.mxu0 %v3813
    %3872 = vmatprep.subr.bf16.mxu0 0
    %3873 = vmatpush1.bf16.msra.mxu0 0
    %3874 = vmatprep.subr.bf16.mxu0 0
    %3875 = vmatpush1.bf16.msra.mxu0 0
    %3876 = vmatprep.subr.bf16.mxu0 0
    %3877 = vmatpush1.bf16.msra.mxu0 0
    %3878 = vmatprep.subr.bf16.mxu0 0
    %3879 = vmatpush1.bf16.msra.mxu0 0
    %3880 = vmatprep.subr.bf16.mxu0 0
    %3881 = vmatpush1.bf16.msra.mxu0 0
    %3882 = vmatprep.subr.bf16.mxu0 0
    %3883 = vmatpush1.bf16.msra.mxu0 0
    %3884 = vmatprep.subr.bf16.mxu0 0
    %3885 = vmatpush1.bf16.msra.mxu0 0
    %3886 = vmatprep.subr.bf16.mxu0 0
    %3887 = vmatpush1.bf16.msra.mxu0 0
    %3888 = vmatprep.mubr.bf16.mxu0 0
    %3889 = vmatmul.mubr.bf16.gmra.mrb[0].mxu0 %v3296
    %v3890 = vpop.f32.mrb[0].mxu0
    %v3891 = vadd.f32 %v3844, %v3890
    %v3892 = vpop.f32.mrb[0].mxu0
    %v3893 = vadd.f32 %v3848, %v3892
    %v3894 = vpop.f32.mrb[0].mxu0
    %v3895 = vpop.f32.mrb[0].mxu0
    %3896 = vdwg.mxu0
    %3897 = vmatprep.subr.bf16.mxu0 0
    %3898 = vmatpush1.bf16.msra.mxu0 %v3794
    %3899 = vmatprep.subr.bf16.mxu0 0
    %3900 = vmatpush1.bf16.msra.mxu0 %v3797
    %3901 = vmatprep.subr.bf16.mxu0 0
    %3902 = vmatpush1.bf16.msra.mxu0 %v3800
    %3903 = vmatprep.subr.bf16.mxu0 0
    %3904 = vmatpush1.bf16.msra.mxu0 %v3803
    %3905 = vmatprep.subr.bf16.mxu0 0
    %3906 = vmatpush1.bf16.msra.mxu0 %v3806
    %3907 = vmatprep.subr.bf16.mxu0 0
    %3908 = vmatpush1.bf16.msra.mxu0 %v3809
    %3909 = vmatprep.subr.bf16.mxu0 0
    %3910 = vmatpush1.bf16.msra.mxu0 %v3812
    %3911 = vmatprep.subr.bf16.mxu0 0
    %3912 = vmatpush1.bf16.msra.mxu0 %v3815
    %3913 = vmatprep.subr.bf16.mxu0 0
    %3914 = vmatpush1.bf16.msra.mxu0 0
    %3915 = vmatprep.subr.bf16.mxu0 0
    %3916 = vmatpush1.bf16.msra.mxu0 0
    %3917 = vmatprep.subr.bf16.mxu0 0
    %3918 = vmatpush1.bf16.msra.mxu0 0
    %3919 = vmatprep.subr.bf16.mxu0 0
    %3920 = vmatpush1.bf16.msra.mxu0 0
    %3921 = vmatprep.subr.bf16.mxu0 0
    %3922 = vmatpush1.bf16.msra.mxu0 0
    %3923 = vmatprep.subr.bf16.mxu0 0
    %3924 = vmatpush1.bf16.msra.mxu0 0
    %3925 = vmatprep.subr.bf16.mxu0 0
    %3926 = vmatpush1.bf16.msra.mxu0 0
    %3927 = vmatprep.subr.bf16.mxu0 0
    %3928 = vmatpush1.bf16.msra.mxu0 0
    %3929 = vmatprep.mubr.bf16.mxu0 0
    %3930 = vmatmul.mubr.bf16.gmra.mrb[0].mxu0 %v3296
    %v3931 = vpop.f32.mrb[0].mxu0
    %v3932 = vadd.f32 %v3852, %v3931
    %v3933 = vpop.f32.mrb[0].mxu0
    %v3934 = vpop.f32.mrb[0].mxu0
    %v3935 = vpop.f32.mrb[0].mxu0
    %3936 = vdwg.mxu0
    %v3937 = vadd.f32 %v3633, %v3891
    %v3938 = vxor.u32 %v3937, 2147483648
    %v3939 = vmul.f32 %v3938, 1.442695
    %v3940 = vpow.pop %v3939
    %v3941 = vadd.f32 %v3940, 1.0
    %v3942 = vrcp.pop %v3941
    %v3943 = vmul.f32 1.0, %v3942
    %v3944 = vadd.f32 %v3635, %v3893
    %v3945 = vxor.u32 %v3944, 2147483648
    %v3946 = vmul.f32 %v3945, 1.442695
    %v3947 = vpow.pop %v3946
    %v3948 = vadd.f32 %v3947, 1.0
    %v3949 = vrcp.pop %v3948
    %v3950 = vmul.f32 1.0, %v3949
    %v3951 = vmul.f32 %v3943, %v3932
    %v3952 = vadd.f32 %v3674, %v3951
    %v3953 = vtanh.pop %v3952
    %v3954 = vsub.f32 1.0, %v3950
    %v3955 = vmul.f32 %v3954, %v3953
    %v3956 = vmul.f32 %v3950, %v3295
    %v3957 = vadd.f32 %v3955, %v3956
    %v3958 = vpack.c.bf16 %v3957, %v3957
    %v3959 = vld [vmem:[#allocation10] sm:$0xf]
    %v3960 = vld [vmem:[#allocation10 + $0x4] sm:$0xf]
    %v3961 = vld [vmem:[#allocation10 + $0x8] sm:$0xf]
    %v3962 = vld [vmem:[#allocation10 + $0xc] sm:$0xf]
    %v3963 = vld [vmem:[#allocation10 + $0x10] sm:$0xf]
    %v3964 = vld [vmem:[#allocation10 + $0x14] sm:$0xf]
    %v3965 = vld [vmem:[#allocation10 + $0x18] sm:$0xf]
    %v3966 = vld [vmem:[#allocation10 + $0x1c] sm:$0xf]
    %v3967 = vld [vmem:[#allocation10 + $0x20] sm:$0xf]
    %v3968 = vld [vmem:[#allocation10 + $0x24] sm:$0xf]
    %v3969 = vld [vmem:[#allocation10 + $0x28] sm:$0xf]
    %v3970 = vld [vmem:[#allocation10 + $0x2c] sm:$0xf]
    %v3971 = vld [vmem:[#allocation10 + $0x30] sm:$0xf]
    %v3972 = vld [vmem:[#allocation10 + $0x34] sm:$0xf]
    %v3973 = vld [vmem:[#allocation10 + $0x38] sm:$0xf]
    %v3974 = vld [vmem:[#allocation10 + $0x3c] sm:$0xf]
    %v3975 = vld [vmem:[%s8] sm:$0x1]
    %v3992 = vunpack.c.l.b16 %v3959
    %v3993 = vunpack.c.l.b16 %v3960
    %v3994 = vunpack.c.l.b16 %v3961
    %v3995 = vunpack.c.l.b16 %v3962
    %v3996 = vunpack.c.l.b16 %v3963
    %v3997 = vunpack.c.l.b16 %v3964
    %v3998 = vunpack.c.l.b16 %v3965
    %v3999 = vunpack.c.l.b16 %v3966
    %v4000 = vunpack.c.l.b16 %v3967
    %v4001 = vunpack.c.l.b16 %v3968
    %v4002 = vunpack.c.l.b16 %v3969
    %v4003 = vunpack.c.l.b16 %v3970
    %v4004 = vunpack.c.l.b16 %v3971
    %v4005 = vunpack.c.l.b16 %v3972
    %v4006 = vunpack.c.l.b16 %v3973
    %v4007 = vunpack.c.l.b16 %v3974
    %v4008 = vpack.c.b16 %v3993, %v3992
    %v4009 = vpack.c.b16 %v3995, %v3994
    %v4010 = vpack.c.b16 %v3997, %v3996
    %v4011 = vpack.c.b16 %v3999, %v3998
    %v4012 = vpack.c.b16 %v4001, %v4000
    %v4013 = vpack.c.b16 %v4003, %v4002
    %v4014 = vpack.c.b16 %v4005, %v4004
    %v4015 = vpack.c.b16 %v4007, %v4006
    %4024 = vmatprep.subr.bf16.mxu0 0
    %4025 = vmatpush1.bf16.msra.mxu0 %v4008
    %4026 = vmatprep.subr.bf16.mxu0 0
    %4027 = vmatpush1.bf16.msra.mxu0 %v4009
    %4028 = vmatprep.subr.bf16.mxu0 0
    %4029 = vmatpush1.bf16.msra.mxu0 %v4010
    %4030 = vmatprep.subr.bf16.mxu0 0
    %4031 = vmatpush1.bf16.msra.mxu0 %v4011
    %4032 = vmatprep.subr.bf16.mxu0 0
    %4033 = vmatpush1.bf16.msra.mxu0 %v4012
    %4034 = vmatprep.subr.bf16.mxu0 0
    %4035 = vmatpush1.bf16.msra.mxu0 %v4013
    %4036 = vmatprep.subr.bf16.mxu0 0
    %4037 = vmatpush1.bf16.msra.mxu0 %v4014
    %4038 = vmatprep.subr.bf16.mxu0 0
    %4039 = vmatpush1.bf16.msra.mxu0 %v4015
    %4040 = vmatprep.subr.bf16.mxu0 0
    %4041 = vmatpush1.bf16.msra.mxu0 0
    %4042 = vmatprep.subr.bf16.mxu0 0
    %4043 = vmatpush1.bf16.msra.mxu0 0
    %4044 = vmatprep.subr.bf16.mxu0 0
    %4045 = vmatpush1.bf16.msra.mxu0 0
    %4046 = vmatprep.subr.bf16.mxu0 0
    %4047 = vmatpush1.bf16.msra.mxu0 0
    %4048 = vmatprep.subr.bf16.mxu0 0
    %4049 = vmatpush1.bf16.msra.mxu0 0
    %4050 = vmatprep.subr.bf16.mxu0 0
    %4051 = vmatpush1.bf16.msra.mxu0 0
    %4052 = vmatprep.subr.bf16.mxu0 0
    %4053 = vmatpush1.bf16.msra.mxu0 0
    %4054 = vmatprep.subr.bf16.mxu0 0
    %4055 = vmatpush1.bf16.msra.mxu0 0
    %4056 = vmatprep.mubr.bf16.mxu0 0
    %4057 = vmatmul.mubr.bf16.gmra.mrb[0].mxu0 %v3958
    %v4058 = vpop.f32.mrb[0].mxu0
    %v4059 = vadd.f32 %v3975, %v4058
    %v4060 = vpop.f32.mrb[0].mxu0
    %v4061 = vpop.f32.mrb[0].mxu0
    %v4062 = vpop.f32.mrb[0].mxu0
    %4063 = vdwg.mxu0
    %v4064 = vsel %vm753, %v4059, -inf
    %4065 = vmax.xlane.f32.xlu0 %v4064
    %v4066 = vpop.xlane.xlu0 %4065
    %v4067 = vsub.f32 %v4059, %v4066
    %v4068 = vmul.f32 %v4067, 1.442695
    %v4069 = vpow.pop %v4068
    %v4070 = vsel %vm753, %v4069, 0.0
    %4071 = vadd.xlane.f32.xlu0 %v4070
    %v4072 = vpop.xlane.xlu0 %4071
    %v4073 = vlog2.pop %v4072
    %v4074 = vmul.f32 %v4073, 0.6931472
    %v4075 = vadd.f32 %v4074, %v4066
    %v4076 = vsub.f32 %v4059, %v4075
    %4077 = vst [vmem:[#allocation12 + $0x5] sm:$0x1] %v4076
    %s4078 = sld [smem:[#allocation2 + $0x6]]
    %s4079 = scalar_lea.vmem [#allocation6], %s4078
    %v4080 = vld [vmem:[%s4079] sm:$0x1]
    %v4081 = vmax.f32 %v4080, 0.0
    %v4082 = vpack.c.bf16 %v4081, %v4081
    %v4083 = vld [vmem:[#allocation7] sm:$0xff]
    %v4084 = vld [vmem:[#allocation7 + $0x8] sm:$0xf]
    %v4085 = vld [vmem:[#allocation7 + $0xc] sm:$0xff]
    %v4086 = vld [vmem:[#allocation7 + $0x14] sm:$0xf]
    %v4087 = vld [vmem:[#allocation7 + $0x18] sm:$0xff]
    %v4088 = vld [vmem:[#allocation7 + $0x20] sm:$0xf]
    %v4089 = vld [vmem:[#allocation7 + $0x24] sm:$0xff]
    %v4090 = vld [vmem:[#allocation7 + $0x2c] sm:$0xf]
    %v4091 = vld [vmem:[#allocation7 + $0x30] sm:$0xff]
    %v4092 = vld [vmem:[#allocation7 + $0x38] sm:$0xf]
    %v4093 = vld [vmem:[#allocation7 + $0x3c] sm:$0xff]
    %v4094 = vld [vmem:[#allocation7 + $0x44] sm:$0xf]
    %v4095 = vld [vmem:[#allocation7 + $0x48] sm:$0xff]
    %v4096 = vld [vmem:[#allocation7 + $0x50] sm:$0xf]
    %v4097 = vld [vmem:[#allocation7 + $0x54] sm:$0xff]
    %v4098 = vld [vmem:[#allocation7 + $0x5c] sm:$0xf]
    %v4099 = vld [vmem:[#allocation7 + $0x60] sm:$0xff]
    %v4100 = vld [vmem:[#allocation7 + $0x68] sm:$0xf]
    %v4101 = vld [vmem:[#allocation7 + $0x6c] sm:$0xff]
    %v4102 = vld [vmem:[#allocation7 + $0x74] sm:$0xf]
    %v4103 = vld [vmem:[#allocation7 + $0x78] sm:$0xff]
    %v4104 = vld [vmem:[#allocation7 + $0x80] sm:$0xf]
    %v4105 = vld [vmem:[#allocation7 + $0x84] sm:$0xff]
    %v4106 = vld [vmem:[#allocation7 + $0x8c] sm:$0xf]
    %v4107 = vld [vmem:[#allocation7 + $0x90] sm:$0xff]
    %v4108 = vld [vmem:[#allocation7 + $0x98] sm:$0xf]
    %v4109 = vld [vmem:[#allocation7 + $0x9c] sm:$0xff]
    %v4110 = vld [vmem:[#allocation7 + $0xa4] sm:$0xf]
    %v4111 = vld [vmem:[#allocation7 + $0xa8] sm:$0xff]
    %v4112 = vld [vmem:[#allocation7 + $0xb0] sm:$0xf]
    %v4113 = vld [vmem:[#allocation7 + $0xb4] sm:$0xff]
    %v4114 = vld [vmem:[#allocation7 + $0xbc] sm:$0xf]
    %v4115 = vld [vmem:[%s5] sm:$0x7]
    %v4148 = vunpack.c.l.b16 %v4083
    %v4149 = vunpack.c.h.b16 %v4083
    %v4150 = vunpack.c.l.b16 %v4084
    %v4151 = vunpack.c.l.b16 %v4085
    %v4152 = vunpack.c.h.b16 %v4085
    %v4153 = vunpack.c.l.b16 %v4086
    %v4154 = vunpack.c.l.b16 %v4087
    %v4155 = vunpack.c.h.b16 %v4087
    %v4156 = vunpack.c.l.b16 %v4088
    %v4157 = vunpack.c.l.b16 %v4089
    %v4158 = vunpack.c.h.b16 %v4089
    %v4159 = vunpack.c.l.b16 %v4090
    %v4160 = vunpack.c.l.b16 %v4091
    %v4161 = vunpack.c.h.b16 %v4091
    %v4162 = vunpack.c.l.b16 %v4092
    %v4163 = vunpack.c.l.b16 %v4093
    %v4164 = vunpack.c.h.b16 %v4093
    %v4165 = vunpack.c.l.b16 %v4094
    %v4166 = vunpack.c.l.b16 %v4095
    %v4167 = vunpack.c.h.b16 %v4095
    %v4168 = vunpack.c.l.b16 %v4096
    %v4169 = vunpack.c.l.b16 %v4097
    %v4170 = vunpack.c.h.b16 %v4097
    %v4171 = vunpack.c.l.b16 %v4098
    %v4172 = vunpack.c.l.b16 %v4099
    %v4173 = vunpack.c.h.b16 %v4099
    %v4174 = vunpack.c.l.b16 %v4100
    %v4175 = vunpack.c.l.b16 %v4101
    %v4176 = vunpack.c.h.b16 %v4101
    %v4177 = vunpack.c.l.b16 %v4102
    %v4178 = vunpack.c.l.b16 %v4103
    %v4179 = vunpack.c.h.b16 %v4103
    %v4180 = vunpack.c.l.b16 %v4104
    %v4181 = vunpack.c.l.b16 %v4105
    %v4182 = vunpack.c.h.b16 %v4105
    %v4183 = vunpack.c.l.b16 %v4106
    %v4184 = vunpack.c.l.b16 %v4107
    %v4185 = vunpack.c.h.b16 %v4107
    %v4186 = vunpack.c.l.b16 %v4108
    %v4187 = vunpack.c.l.b16 %v4109
    %v4188 = vunpack.c.h.b16 %v4109
    %v4189 = vunpack.c.l.b16 %v4110
    %v4190 = vunpack.c.l.b16 %v4111
    %v4191 = vunpack.c.h.b16 %v4111
    %v4192 = vunpack.c.l.b16 %v4112
    %v4193 = vunpack.c.l.b16 %v4113
    %v4194 = vunpack.c.h.b16 %v4113
    %v4195 = vunpack.c.l.b16 %v4114
    %v4196 = vpack.c.b16 %v4151, %v4148
    %v4197 = vpack.c.b16 %v4152, %v4149
    %v4198 = vpack.c.b16 %v4153, %v4150
    %v4199 = vpack.c.b16 %v4157, %v4154
    %v4200 = vpack.c.b16 %v4158, %v4155
    %v4201 = vpack.c.b16 %v4159, %v4156
    %v4202 = vpack.c.b16 %v4163, %v4160
    %v4203 = vpack.c.b16 %v4164, %v4161
    %v4204 = vpack.c.b16 %v4165, %v4162
    %v4205 = vpack.c.b16 %v4169, %v4166
    %v4206 = vpack.c.b16 %v4170, %v4167
    %v4207 = vpack.c.b16 %v4171, %v4168
    %v4208 = vpack.c.b16 %v4175, %v4172
    %v4209 = vpack.c.b16 %v4176, %v4173
    %v4210 = vpack.c.b16 %v4177, %v4174
    %v4211 = vpack.c.b16 %v4181, %v4178
    %v4212 = vpack.c.b16 %v4182, %v4179
    %v4213 = vpack.c.b16 %v4183, %v4180
    %v4214 = vpack.c.b16 %v4187, %v4184
    %v4215 = vpack.c.b16 %v4188, %v4185
    %v4216 = vpack.c.b16 %v4189, %v4186
    %v4217 = vpack.c.b16 %v4193, %v4190
    %v4218 = vpack.c.b16 %v4194, %v4191
    %v4219 = vpack.c.b16 %v4195, %v4192
    %v4245 = vlaneseq
    %v4246 = vshrl.u32 %v4245, 7
    %v4247 = vsub.s32 0, %v4246
    %v4248 = vrot.slane %v4115, %v4247
    %v4249 = vlaneseq
    %v4250 = vshrl.u32 %v4249, 7
    %v4251 = vsub.s32 1, %v4250
    %v4252 = vrot.slane %v4115, %v4251
    %v4253 = vlaneseq
    %v4254 = vshrl.u32 %v4253, 7
    %v4255 = vsub.s32 2, %v4254
    %v4256 = vrot.slane %v4115, %v4255
    %4260 = vmatprep.subr.bf16.mxu0 %v4197
    %4261 = vmatpush1.bf16.msra.mxu0 %v4196
    %4262 = vmatprep.subr.bf16.mxu0 %v4200
    %4263 = vmatpush1.bf16.msra.mxu0 %v4199
    %4264 = vmatprep.subr.bf16.mxu0 %v4203
    %4265 = vmatpush1.bf16.msra.mxu0 %v4202
    %4266 = vmatprep.subr.bf16.mxu0 %v4206
    %4267 = vmatpush1.bf16.msra.mxu0 %v4205
    %4268 = vmatprep.subr.bf16.mxu0 %v4209
    %4269 = vmatpush1.bf16.msra.mxu0 %v4208
    %4270 = vmatprep.subr.bf16.mxu0 %v4212
    %4271 = vmatpush1.bf16.msra.mxu0 %v4211
    %4272 = vmatprep.subr.bf16.mxu0 %v4215
    %4273 = vmatpush1.bf16.msra.mxu0 %v4214
    %4274 = vmatprep.subr.bf16.mxu0 %v4218
    %4275 = vmatpush1.bf16.msra.mxu0 %v4217
    %4276 = vmatprep.subr.bf16.mxu0 0
    %4277 = vmatpush1.bf16.msra.mxu0 0
    %4278 = vmatprep.subr.bf16.mxu0 0
    %4279 = vmatpush1.bf16.msra.mxu0 0
    %4280 = vmatprep.subr.bf16.mxu0 0
    %4281 = vmatpush1.bf16.msra.mxu0 0
    %4282 = vmatprep.subr.bf16.mxu0 0
    %4283 = vmatpush1.bf16.msra.mxu0 0
    %4284 = vmatprep.subr.bf16.mxu0 0
    %4285 = vmatpush1.bf16.msra.mxu0 0
    %4286 = vmatprep.subr.bf16.mxu0 0
    %4287 = vmatpush1.bf16.msra.mxu0 0
    %4288 = vmatprep.subr.bf16.mxu0 0
    %4289 = vmatpush1.bf16.msra.mxu0 0
    %4290 = vmatprep.subr.bf16.mxu0 0
    %4291 = vmatpush1.bf16.msra.mxu0 0
    %4292 = vmatprep.mubr.bf16.mxu0 0
    %4293 = vmatmul.mubr.bf16.gmra.mrb[0].mxu0 %v4082
    %v4294 = vpop.f32.mrb[0].mxu0
    %v4295 = vadd.f32 %v4248, %v4294
    %v4296 = vpop.f32.mrb[0].mxu0
    %v4297 = vadd.f32 %v4252, %v4296
    %v4298 = vpop.f32.mrb[0].mxu0
    %v4299 = vpop.f32.mrb[0].mxu0
    %4300 = vdwg.mxu0
    %4301 = vmatprep.subr.bf16.mxu0 0
    %4302 = vmatpush1.bf16.msra.mxu0 %v4198
    %4303 = vmatprep.subr.bf16.mxu0 0
    %4304 = vmatpush1.bf16.msra.mxu0 %v4201
    %4305 = vmatprep.subr.bf16.mxu0 0
    %4306 = vmatpush1.bf16.msra.mxu0 %v4204
    %4307 = vmatprep.subr.bf16.mxu0 0
    %4308 = vmatpush1.bf16.msra.mxu0 %v4207
    %4309 = vmatprep.subr.bf16.mxu0 0
    %4310 = vmatpush1.bf16.msra.mxu0 %v4210
    %4311 = vmatprep.subr.bf16.mxu0 0
    %4312 = vmatpush1.bf16.msra.mxu0 %v4213
    %4313 = vmatprep.subr.bf16.mxu0 0
    %4314 = vmatpush1.bf16.msra.mxu0 %v4216
    %4315 = vmatprep.subr.bf16.mxu0 0
    %4316 = vmatpush1.bf16.msra.mxu0 %v4219
    %4317 = vmatprep.subr.bf16.mxu0 0
    %4318 = vmatpush1.bf16.msra.mxu0 0
    %4319 = vmatprep.subr.bf16.mxu0 0
    %4320 = vmatpush1.bf16.msra.mxu0 0
    %4321 = vmatprep.subr.bf16.mxu0 0
    %4322 = vmatpush1.bf16.msra.mxu0 0
    %4323 = vmatprep.subr.bf16.mxu0 0
    %4324 = vmatpush1.bf16.msra.mxu0 0
    %4325 = vmatprep.subr.bf16.mxu0 0
    %4326 = vmatpush1.bf16.msra.mxu0 0
    %4327 = vmatprep.subr.bf16.mxu0 0
    %4328 = vmatpush1.bf16.msra.mxu0 0
    %4329 = vmatprep.subr.bf16.mxu0 0
    %4330 = vmatpush1.bf16.msra.mxu0 0
    %4331 = vmatprep.subr.bf16.mxu0 0
    %4332 = vmatpush1.bf16.msra.mxu0 0
    %4333 = vmatprep.mubr.bf16.mxu0 0
    %4334 = vmatmul.mubr.bf16.gmra.mrb[0].mxu0 %v4082
    %v4335 = vpop.f32.mrb[0].mxu0
    %v4336 = vadd.f32 %v4256, %v4335
    %v4337 = vpop.f32.mrb[0].mxu0
    %v4338 = vpop.f32.mrb[0].mxu0
    %v4339 = vpop.f32.mrb[0].mxu0
    %4340 = vdwg.mxu0
    %v4341 = vld [vmem:[#allocation9] sm:$0xff]
    %v4342 = vld [vmem:[#allocation9 + $0x8] sm:$0xf]
    %v4343 = vld [vmem:[#allocation9 + $0xc] sm:$0xff]
    %v4344 = vld [vmem:[#allocation9 + $0x14] sm:$0xf]
    %v4345 = vld [vmem:[#allocation9 + $0x18] sm:$0xff]
    %v4346 = vld [vmem:[#allocation9 + $0x20] sm:$0xf]
    %v4347 = vld [vmem:[#allocation9 + $0x24] sm:$0xff]
    %v4348 = vld [vmem:[#allocation9 + $0x2c] sm:$0xf]
    %v4349 = vld [vmem:[#allocation9 + $0x30] sm:$0xff]
    %v4350 = vld [vmem:[#allocation9 + $0x38] sm:$0xf]
    %v4351 = vld [vmem:[#allocation9 + $0x3c] sm:$0xff]
    %v4352 = vld [vmem:[#allocation9 + $0x44] sm:$0xf]
    %v4353 = vld [vmem:[#allocation9 + $0x48] sm:$0xff]
    %v4354 = vld [vmem:[#allocation9 + $0x50] sm:$0xf]
    %v4355 = vld [vmem:[#allocation9 + $0x54] sm:$0xff]
    %v4356 = vld [vmem:[#allocation9 + $0x5c] sm:$0xf]
    %v4357 = vld [vmem:[#allocation9 + $0x60] sm:$0xff]
    %v4358 = vld [vmem:[#allocation9 + $0x68] sm:$0xf]
    %v4359 = vld [vmem:[#allocation9 + $0x6c] sm:$0xff]
    %v4360 = vld [vmem:[#allocation9 + $0x74] sm:$0xf]
    %v4361 = vld [vmem:[#allocation9 + $0x78] sm:$0xff]
    %v4362 = vld [vmem:[#allocation9 + $0x80] sm:$0xf]
    %v4363 = vld [vmem:[#allocation9 + $0x84] sm:$0xff]
    %v4364 = vld [vmem:[#allocation9 + $0x8c] sm:$0xf]
    %v4365 = vld [vmem:[#allocation9 + $0x90] sm:$0xff]
    %v4366 = vld [vmem:[#allocation9 + $0x98] sm:$0xf]
    %v4367 = vld [vmem:[#allocation9 + $0x9c] sm:$0xff]
    %v4368 = vld [vmem:[#allocation9 + $0xa4] sm:$0xf]
    %v4369 = vld [vmem:[#allocation9 + $0xa8] sm:$0xff]
    %v4370 = vld [vmem:[#allocation9 + $0xb0] sm:$0xf]
    %v4371 = vld [vmem:[#allocation9 + $0xb4] sm:$0xff]
    %v4372 = vld [vmem:[#allocation9 + $0xbc] sm:$0xf]
    %v4373 = vld [vmem:[%s6] sm:$0x7]
    %v4406 = vunpack.c.l.b16 %v4341
    %v4407 = vunpack.c.h.b16 %v4341
    %v4408 = vunpack.c.l.b16 %v4342
    %v4409 = vunpack.c.l.b16 %v4343
    %v4410 = vunpack.c.h.b16 %v4343
    %v4411 = vunpack.c.l.b16 %v4344
    %v4412 = vunpack.c.l.b16 %v4345
    %v4413 = vunpack.c.h.b16 %v4345
    %v4414 = vunpack.c.l.b16 %v4346
    %v4415 = vunpack.c.l.b16 %v4347
    %v4416 = vunpack.c.h.b16 %v4347
    %v4417 = vunpack.c.l.b16 %v4348
    %v4418 = vunpack.c.l.b16 %v4349
    %v4419 = vunpack.c.h.b16 %v4349
    %v4420 = vunpack.c.l.b16 %v4350
    %v4421 = vunpack.c.l.b16 %v4351
    %v4422 = vunpack.c.h.b16 %v4351
    %v4423 = vunpack.c.l.b16 %v4352
    %v4424 = vunpack.c.l.b16 %v4353
    %v4425 = vunpack.c.h.b16 %v4353
    %v4426 = vunpack.c.l.b16 %v4354
    %v4427 = vunpack.c.l.b16 %v4355
    %v4428 = vunpack.c.h.b16 %v4355
    %v4429 = vunpack.c.l.b16 %v4356
    %v4430 = vunpack.c.l.b16 %v4357
    %v4431 = vunpack.c.h.b16 %v4357
    %v4432 = vunpack.c.l.b16 %v4358
    %v4433 = vunpack.c.l.b16 %v4359
    %v4434 = vunpack.c.h.b16 %v4359
    %v4435 = vunpack.c.l.b16 %v4360
    %v4436 = vunpack.c.l.b16 %v4361
    %v4437 = vunpack.c.h.b16 %v4361
    %v4438 = vunpack.c.l.b16 %v4362
    %v4439 = vunpack.c.l.b16 %v4363
    %v4440 = vunpack.c.h.b16 %v4363
    %v4441 = vunpack.c.l.b16 %v4364
    %v4442 = vunpack.c.l.b16 %v4365
    %v4443 = vunpack.c.h.b16 %v4365
    %v4444 = vunpack.c.l.b16 %v4366
    %v4445 = vunpack.c.l.b16 %v4367
    %v4446 = vunpack.c.h.b16 %v4367
    %v4447 = vunpack.c.l.b16 %v4368
    %v4448 = vunpack.c.l.b16 %v4369
    %v4449 = vunpack.c.h.b16 %v4369
    %v4450 = vunpack.c.l.b16 %v4370
    %v4451 = vunpack.c.l.b16 %v4371
    %v4452 = vunpack.c.h.b16 %v4371
    %v4453 = vunpack.c.l.b16 %v4372
    %v4454 = vpack.c.b16 %v4409, %v4406
    %v4455 = vpack.c.b16 %v4410, %v4407
    %v4456 = vpack.c.b16 %v4411, %v4408
    %v4457 = vpack.c.b16 %v4415, %v4412
    %v4458 = vpack.c.b16 %v4416, %v4413
    %v4459 = vpack.c.b16 %v4417, %v4414
    %v4460 = vpack.c.b16 %v4421, %v4418
    %v4461 = vpack.c.b16 %v4422, %v4419
    %v4462 = vpack.c.b16 %v4423, %v4420
    %v4463 = vpack.c.b16 %v4427, %v4424
    %v4464 = vpack.c.b16 %v4428, %v4425
    %v4465 = vpack.c.b16 %v4429, %v4426
    %v4466 = vpack.c.b16 %v4433, %v4430
    %v4467 = vpack.c.b16 %v4434, %v4431
    %v4468 = vpack.c.b16 %v4435, %v4432
    %v4469 = vpack.c.b16 %v4439, %v4436
    %v4470 = vpack.c.b16 %v4440, %v4437
    %v4471 = vpack.c.b16 %v4441, %v4438
    %v4472 = vpack.c.b16 %v4445, %v4442
    %v4473 = vpack.c.b16 %v4446, %v4443
    %v4474 = vpack.c.b16 %v4447, %v4444
    %v4475 = vpack.c.b16 %v4451, %v4448
    %v4476 = vpack.c.b16 %v4452, %v4449
    %v4477 = vpack.c.b16 %v4453, %v4450
    %v4503 = vlaneseq
    %v4504 = vshrl.u32 %v4503, 7
    %v4505 = vsub.s32 0, %v4504
    %v4506 = vrot.slane %v4373, %v4505
    %v4507 = vlaneseq
    %v4508 = vshrl.u32 %v4507, 7
    %v4509 = vsub.s32 1, %v4508
    %v4510 = vrot.slane %v4373, %v4509
    %v4511 = vlaneseq
    %v4512 = vshrl.u32 %v4511, 7
    %v4513 = vsub.s32 2, %v4512
    %v4514 = vrot.slane %v4373, %v4513
    %4518 = vmatprep.subr.bf16.mxu0 %v4455
    %4519 = vmatpush1.bf16.msra.mxu0 %v4454
    %4520 = vmatprep.subr.bf16.mxu0 %v4458
    %4521 = vmatpush1.bf16.msra.mxu0 %v4457
    %4522 = vmatprep.subr.bf16.mxu0 %v4461
    %4523 = vmatpush1.bf16.msra.mxu0 %v4460
    %4524 = vmatprep.subr.bf16.mxu0 %v4464
    %4525 = vmatpush1.bf16.msra.mxu0 %v4463
    %4526 = vmatprep.subr.bf16.mxu0 %v4467
    %4527 = vmatpush1.bf16.msra.mxu0 %v4466
    %4528 = vmatprep.subr.bf16.mxu0 %v4470
    %4529 = vmatpush1.bf16.msra.mxu0 %v4469
    %4530 = vmatprep.subr.bf16.mxu0 %v4473
    %4531 = vmatpush1.bf16.msra.mxu0 %v4472
    %4532 = vmatprep.subr.bf16.mxu0 %v4476
    %4533 = vmatpush1.bf16.msra.mxu0 %v4475
    %4534 = vmatprep.subr.bf16.mxu0 0
    %4535 = vmatpush1.bf16.msra.mxu0 0
    %4536 = vmatprep.subr.bf16.mxu0 0
    %4537 = vmatpush1.bf16.msra.mxu0 0
    %4538 = vmatprep.subr.bf16.mxu0 0
    %4539 = vmatpush1.bf16.msra.mxu0 0
    %4540 = vmatprep.subr.bf16.mxu0 0
    %4541 = vmatpush1.bf16.msra.mxu0 0
    %4542 = vmatprep.subr.bf16.mxu0 0
    %4543 = vmatpush1.bf16.msra.mxu0 0
    %4544 = vmatprep.subr.bf16.mxu0 0
    %4545 = vmatpush1.bf16.msra.mxu0 0
    %4546 = vmatprep.subr.bf16.mxu0 0
    %4547 = vmatpush1.bf16.msra.mxu0 0
    %4548 = vmatprep.subr.bf16.mxu0 0
    %4549 = vmatpush1.bf16.msra.mxu0 0
    %4550 = vmatprep.mubr.bf16.mxu0 0
    %4551 = vmatmul.mubr.bf16.gmra.mrb[0].mxu0 %v3958
    %v4552 = vpop.f32.mrb[0].mxu0
    %v4553 = vadd.f32 %v4506, %v4552
    %v4554 = vpop.f32.mrb[0].mxu0
    %v4555 = vadd.f32 %v4510, %v4554
    %v4556 = vpop.f32.mrb[0].mxu0
    %v4557 = vpop.f32.mrb[0].mxu0
    %4558 = vdwg.mxu0
    %4559 = vmatprep.subr.bf16.mxu0 0
    %4560 = vmatpush1.bf16.msra.mxu0 %v4456
    %4561 = vmatprep.subr.bf16.mxu0 0
    %4562 = vmatpush1.bf16.msra.mxu0 %v4459
    %4563 = vmatprep.subr.bf16.mxu0 0
    %4564 = vmatpush1.bf16.msra.mxu0 %v4462
    %4565 = vmatprep.subr.bf16.mxu0 0
    %4566 = vmatpush1.bf16.msra.mxu0 %v4465
    %4567 = vmatprep.subr.bf16.mxu0 0
    %4568 = vmatpush1.bf16.msra.mxu0 %v4468
    %4569 = vmatprep.subr.bf16.mxu0 0
    %4570 = vmatpush1.bf16.msra.mxu0 %v4471
    %4571 = vmatprep.subr.bf16.mxu0 0
    %4572 = vmatpush1.bf16.msra.mxu0 %v4474
    %4573 = vmatprep.subr.bf16.mxu0 0
    %4574 = vmatpush1.bf16.msra.mxu0 %v4477
    %4575 = vmatprep.subr.bf16.mxu0 0
    %4576 = vmatpush1.bf16.msra.mxu0 0
    %4577 = vmatprep.subr.bf16.mxu0 0
    %4578 = vmatpush1.bf16.msra.mxu0 0
    %4579 = vmatprep.subr.bf16.mxu0 0
    %4580 = vmatpush1.bf16.msra.mxu0 0
    %4581 = vmatprep.subr.bf16.mxu0 0
    %4582 = vmatpush1.bf16.msra.mxu0 0
    %4583 = vmatprep.subr.bf16.mxu0 0
    %4584 = vmatpush1.bf16.msra.mxu0 0
    %4585 = vmatprep.subr.bf16.mxu0 0
    %4586 = vmatpush1.bf16.msra.mxu0 0
    %4587 = vmatprep.subr.bf16.mxu0 0
    %4588 = vmatpush1.bf16.msra.mxu0 0
    %4589 = vmatprep.subr.bf16.mxu0 0
    %4590 = vmatpush1.bf16.msra.mxu0 0
    %4591 = vmatprep.mubr.bf16.mxu0 0
    %4592 = vmatmul.mubr.bf16.gmra.mrb[0].mxu0 %v3958
    %v4593 = vpop.f32.mrb[0].mxu0
    %v4594 = vadd.f32 %v4514, %v4593
    %v4595 = vpop.f32.mrb[0].mxu0
    %v4596 = vpop.f32.mrb[0].mxu0
    %v4597 = vpop.f32.mrb[0].mxu0
    %4598 = vdwg.mxu0
    %v4599 = vadd.f32 %v4295, %v4553
    %v4600 = vxor.u32 %v4599, 2147483648
    %v4601 = vmul.f32 %v4600, 1.442695
    %v4602 = vpow.pop %v4601
    %v4603 = vadd.f32 %v4602, 1.0
    %v4604 = vrcp.pop %v4603
    %v4605 = vmul.f32 1.0, %v4604
    %v4606 = vadd.f32 %v4297, %v4555
    %v4607 = vxor.u32 %v4606, 2147483648
    %v4608 = vmul.f32 %v4607, 1.442695
    %v4609 = vpow.pop %v4608
    %v4610 = vadd.f32 %v4609, 1.0
    %v4611 = vrcp.pop %v4610
    %v4612 = vmul.f32 1.0, %v4611
    %v4613 = vmul.f32 %v4605, %v4594
    %v4614 = vadd.f32 %v4336, %v4613
    %v4615 = vtanh.pop %v4614
    %v4616 = vsub.f32 1.0, %v4612
    %v4617 = vmul.f32 %v4616, %v4615
    %v4618 = vmul.f32 %v4612, %v3957
    %v4619 = vadd.f32 %v4617, %v4618
    %v4620 = vpack.c.bf16 %v4619, %v4619
    %v4621 = vld [vmem:[#allocation10] sm:$0xf]
    %v4622 = vld [vmem:[#allocation10 + $0x4] sm:$0xf]
    %v4623 = vld [vmem:[#allocation10 + $0x8] sm:$0xf]
    %v4624 = vld [vmem:[#allocation10 + $0xc] sm:$0xf]
    %v4625 = vld [vmem:[#allocation10 + $0x10] sm:$0xf]
    %v4626 = vld [vmem:[#allocation10 + $0x14] sm:$0xf]
    %v4627 = vld [vmem:[#allocation10 + $0x18] sm:$0xf]
    %v4628 = vld [vmem:[#allocation10 + $0x1c] sm:$0xf]
    %v4629 = vld [vmem:[#allocation10 + $0x20] sm:$0xf]
    %v4630 = vld [vmem:[#allocation10 + $0x24] sm:$0xf]
    %v4631 = vld [vmem:[#allocation10 + $0x28] sm:$0xf]
    %v4632 = vld [vmem:[#allocation10 + $0x2c] sm:$0xf]
    %v4633 = vld [vmem:[#allocation10 + $0x30] sm:$0xf]
    %v4634 = vld [vmem:[#allocation10 + $0x34] sm:$0xf]
    %v4635 = vld [vmem:[#allocation10 + $0x38] sm:$0xf]
    %v4636 = vld [vmem:[#allocation10 + $0x3c] sm:$0xf]
    %v4637 = vld [vmem:[%s8] sm:$0x1]
    %v4654 = vunpack.c.l.b16 %v4621
    %v4655 = vunpack.c.l.b16 %v4622
    %v4656 = vunpack.c.l.b16 %v4623
    %v4657 = vunpack.c.l.b16 %v4624
    %v4658 = vunpack.c.l.b16 %v4625
    %v4659 = vunpack.c.l.b16 %v4626
    %v4660 = vunpack.c.l.b16 %v4627
    %v4661 = vunpack.c.l.b16 %v4628
    %v4662 = vunpack.c.l.b16 %v4629
    %v4663 = vunpack.c.l.b16 %v4630
    %v4664 = vunpack.c.l.b16 %v4631
    %v4665 = vunpack.c.l.b16 %v4632
    %v4666 = vunpack.c.l.b16 %v4633
    %v4667 = vunpack.c.l.b16 %v4634
    %v4668 = vunpack.c.l.b16 %v4635
    %v4669 = vunpack.c.l.b16 %v4636
    %v4670 = vpack.c.b16 %v4655, %v4654
    %v4671 = vpack.c.b16 %v4657, %v4656
    %v4672 = vpack.c.b16 %v4659, %v4658
    %v4673 = vpack.c.b16 %v4661, %v4660
    %v4674 = vpack.c.b16 %v4663, %v4662
    %v4675 = vpack.c.b16 %v4665, %v4664
    %v4676 = vpack.c.b16 %v4667, %v4666
    %v4677 = vpack.c.b16 %v4669, %v4668
    %4686 = vmatprep.subr.bf16.mxu0 0
    %4687 = vmatpush1.bf16.msra.mxu0 %v4670
    %4688 = vmatprep.subr.bf16.mxu0 0
    %4689 = vmatpush1.bf16.msra.mxu0 %v4671
    %4690 = vmatprep.subr.bf16.mxu0 0
    %4691 = vmatpush1.bf16.msra.mxu0 %v4672
    %4692 = vmatprep.subr.bf16.mxu0 0
    %4693 = vmatpush1.bf16.msra.mxu0 %v4673
    %4694 = vmatprep.subr.bf16.mxu0 0
    %4695 = vmatpush1.bf16.msra.mxu0 %v4674
    %4696 = vmatprep.subr.bf16.mxu0 0
    %4697 = vmatpush1.bf16.msra.mxu0 %v4675
    %4698 = vmatprep.subr.bf16.mxu0 0
    %4699 = vmatpush1.bf16.msra.mxu0 %v4676
    %4700 = vmatprep.subr.bf16.mxu0 0
    %4701 = vmatpush1.bf16.msra.mxu0 %v4677
    %4702 = vmatprep.subr.bf16.mxu0 0
    %4703 = vmatpush1.bf16.msra.mxu0 0
    %4704 = vmatprep.subr.bf16.mxu0 0
    %4705 = vmatpush1.bf16.msra.mxu0 0
    %4706 = vmatprep.subr.bf16.mxu0 0
    %4707 = vmatpush1.bf16.msra.mxu0 0
    %4708 = vmatprep.subr.bf16.mxu0 0
    %4709 = vmatpush1.bf16.msra.mxu0 0
    %4710 = vmatprep.subr.bf16.mxu0 0
    %4711 = vmatpush1.bf16.msra.mxu0 0
    %4712 = vmatprep.subr.bf16.mxu0 0
    %4713 = vmatpush1.bf16.msra.mxu0 0
    %4714 = vmatprep.subr.bf16.mxu0 0
    %4715 = vmatpush1.bf16.msra.mxu0 0
    %4716 = vmatprep.subr.bf16.mxu0 0
    %4717 = vmatpush1.bf16.msra.mxu0 0
    %4718 = vmatprep.mubr.bf16.mxu0 0
    %4719 = vmatmul.mubr.bf16.gmra.mrb[0].mxu0 %v4620
    %v4720 = vpop.f32.mrb[0].mxu0
    %v4721 = vadd.f32 %v4637, %v4720
    %v4722 = vpop.f32.mrb[0].mxu0
    %v4723 = vpop.f32.mrb[0].mxu0
    %v4724 = vpop.f32.mrb[0].mxu0
    %4725 = vdwg.mxu0
    %v4726 = vsel %vm753, %v4721, -inf
    %4727 = vmax.xlane.f32.xlu0 %v4726
    %v4728 = vpop.xlane.xlu0 %4727
    %v4729 = vsub.f32 %v4721, %v4728
    %v4730 = vmul.f32 %v4729, 1.442695
    %v4731 = vpow.pop %v4730
    %v4732 = vsel %vm753, %v4731, 0.0
    %4733 = vadd.xlane.f32.xlu0 %v4732
    %v4734 = vpop.xlane.xlu0 %4733
    %v4735 = vlog2.pop %v4734
    %v4736 = vmul.f32 %v4735, 0.6931472
    %v4737 = vadd.f32 %v4736, %v4728
    %v4738 = vsub.f32 %v4721, %v4737
    %4739 = vst [vmem:[#allocation12 + $0x6] sm:$0x1] %v4738
    %s4740 = sld [smem:[#allocation2 + $0x7]]
    %s4741 = scalar_lea.vmem [#allocation6], %s4740
    %v4742 = vld [vmem:[%s4741] sm:$0x1]
    %v4743 = vmax.f32 %v4742, 0.0
    %v4744 = vpack.c.bf16 %v4743, %v4743
    %v4745 = vld [vmem:[#allocation7] sm:$0xff]
    %v4746 = vld [vmem:[#allocation7 + $0x8] sm:$0xf]
    %v4747 = vld [vmem:[#allocation7 + $0xc] sm:$0xff]
    %v4748 = vld [vmem:[#allocation7 + $0x14] sm:$0xf]
    %v4749 = vld [vmem:[#allocation7 + $0x18] sm:$0xff]
    %v4750 = vld [vmem:[#allocation7 + $0x20] sm:$0xf]
    %v4751 = vld [vmem:[#allocation7 + $0x24] sm:$0xff]
    %v4752 = vld [vmem:[#allocation7 + $0x2c] sm:$0xf]
    %v4753 = vld [vmem:[#allocation7 + $0x30] sm:$0xff]
    %v4754 = vld [vmem:[#allocation7 + $0x38] sm:$0xf]
    %v4755 = vld [vmem:[#allocation7 + $0x3c] sm:$0xff]
    %v4756 = vld [vmem:[#allocation7 + $0x44] sm:$0xf]
    %v4757 = vld [vmem:[#allocation7 + $0x48] sm:$0xff]
    %v4758 = vld [vmem:[#allocation7 + $0x50] sm:$0xf]
    %v4759 = vld [vmem:[#allocation7 + $0x54] sm:$0xff]
    %v4760 = vld [vmem:[#allocation7 + $0x5c] sm:$0xf]
    %v4761 = vld [vmem:[#allocation7 + $0x60] sm:$0xff]
    %v4762 = vld [vmem:[#allocation7 + $0x68] sm:$0xf]
    %v4763 = vld [vmem:[#allocation7 + $0x6c] sm:$0xff]
    %v4764 = vld [vmem:[#allocation7 + $0x74] sm:$0xf]
    %v4765 = vld [vmem:[#allocation7 + $0x78] sm:$0xff]
    %v4766 = vld [vmem:[#allocation7 + $0x80] sm:$0xf]
    %v4767 = vld [vmem:[#allocation7 + $0x84] sm:$0xff]
    %v4768 = vld [vmem:[#allocation7 + $0x8c] sm:$0xf]
    %v4769 = vld [vmem:[#allocation7 + $0x90] sm:$0xff]
    %v4770 = vld [vmem:[#allocation7 + $0x98] sm:$0xf]
    %v4771 = vld [vmem:[#allocation7 + $0x9c] sm:$0xff]
    %v4772 = vld [vmem:[#allocation7 + $0xa4] sm:$0xf]
    %v4773 = vld [vmem:[#allocation7 + $0xa8] sm:$0xff]
    %v4774 = vld [vmem:[#allocation7 + $0xb0] sm:$0xf]
    %v4775 = vld [vmem:[#allocation7 + $0xb4] sm:$0xff]
    %v4776 = vld [vmem:[#allocation7 + $0xbc] sm:$0xf]
    %v4777 = vld [vmem:[%s5] sm:$0x7]
    %v4810 = vunpack.c.l.b16 %v4745
    %v4811 = vunpack.c.h.b16 %v4745
    %v4812 = vunpack.c.l.b16 %v4746
    %v4813 = vunpack.c.l.b16 %v4747
    %v4814 = vunpack.c.h.b16 %v4747
    %v4815 = vunpack.c.l.b16 %v4748
    %v4816 = vunpack.c.l.b16 %v4749
    %v4817 = vunpack.c.h.b16 %v4749
    %v4818 = vunpack.c.l.b16 %v4750
    %v4819 = vunpack.c.l.b16 %v4751
    %v4820 = vunpack.c.h.b16 %v4751
    %v4821 = vunpack.c.l.b16 %v4752
    %v4822 = vunpack.c.l.b16 %v4753
    %v4823 = vunpack.c.h.b16 %v4753
    %v4824 = vunpack.c.l.b16 %v4754
    %v4825 = vunpack.c.l.b16 %v4755
    %v4826 = vunpack.c.h.b16 %v4755
    %v4827 = vunpack.c.l.b16 %v4756
    %v4828 = vunpack.c.l.b16 %v4757
    %v4829 = vunpack.c.h.b16 %v4757
    %v4830 = vunpack.c.l.b16 %v4758
    %v4831 = vunpack.c.l.b16 %v4759
    %v4832 = vunpack.c.h.b16 %v4759
    %v4833 = vunpack.c.l.b16 %v4760
    %v4834 = vunpack.c.l.b16 %v4761
    %v4835 = vunpack.c.h.b16 %v4761
    %v4836 = vunpack.c.l.b16 %v4762
    %v4837 = vunpack.c.l.b16 %v4763
    %v4838 = vunpack.c.h.b16 %v4763
    %v4839 = vunpack.c.l.b16 %v4764
    %v4840 = vunpack.c.l.b16 %v4765
    %v4841 = vunpack.c.h.b16 %v4765
    %v4842 = vunpack.c.l.b16 %v4766
    %v4843 = vunpack.c.l.b16 %v4767
    %v4844 = vunpack.c.h.b16 %v4767
    %v4845 = vunpack.c.l.b16 %v4768
    %v4846 = vunpack.c.l.b16 %v4769
    %v4847 = vunpack.c.h.b16 %v4769
    %v4848 = vunpack.c.l.b16 %v4770
    %v4849 = vunpack.c.l.b16 %v4771
    %v4850 = vunpack.c.h.b16 %v4771
    %v4851 = vunpack.c.l.b16 %v4772
    %v4852 = vunpack.c.l.b16 %v4773
    %v4853 = vunpack.c.h.b16 %v4773
    %v4854 = vunpack.c.l.b16 %v4774
    %v4855 = vunpack.c.l.b16 %v4775
    %v4856 = vunpack.c.h.b16 %v4775
    %v4857 = vunpack.c.l.b16 %v4776
    %v4858 = vpack.c.b16 %v4813, %v4810
    %v4859 = vpack.c.b16 %v4814, %v4811
    %v4860 = vpack.c.b16 %v4815, %v4812
    %v4861 = vpack.c.b16 %v4819, %v4816
    %v4862 = vpack.c.b16 %v4820, %v4817
    %v4863 = vpack.c.b16 %v4821, %v4818
    %v4864 = vpack.c.b16 %v4825, %v4822
    %v4865 = vpack.c.b16 %v4826, %v4823
    %v4866 = vpack.c.b16 %v4827, %v4824
    %v4867 = vpack.c.b16 %v4831, %v4828
    %v4868 = vpack.c.b16 %v4832, %v4829
    %v4869 = vpack.c.b16 %v4833, %v4830
    %v4870 = vpack.c.b16 %v4837, %v4834
    %v4871 = vpack.c.b16 %v4838, %v4835
    %v4872 = vpack.c.b16 %v4839, %v4836
    %v4873 = vpack.c.b16 %v4843, %v4840
    %v4874 = vpack.c.b16 %v4844, %v4841
    %v4875 = vpack.c.b16 %v4845, %v4842
    %v4876 = vpack.c.b16 %v4849, %v4846
    %v4877 = vpack.c.b16 %v4850, %v4847
    %v4878 = vpack.c.b16 %v4851, %v4848
    %v4879 = vpack.c.b16 %v4855, %v4852
    %v4880 = vpack.c.b16 %v4856, %v4853
    %v4881 = vpack.c.b16 %v4857, %v4854
    %v4907 = vlaneseq
    %v4908 = vshrl.u32 %v4907, 7
    %v4909 = vsub.s32 0, %v4908
    %v4910 = vrot.slane %v4777, %v4909
    %v4911 = vlaneseq
    %v4912 = vshrl.u32 %v4911, 7
    %v4913 = vsub.s32 1, %v4912
    %v4914 = vrot.slane %v4777, %v4913
    %v4915 = vlaneseq
    %v4916 = vshrl.u32 %v4915, 7
    %v4917 = vsub.s32 2, %v4916
    %v4918 = vrot.slane %v4777, %v4917
    %4922 = vmatprep.subr.bf16.mxu0 %v4859
    %4923 = vmatpush1.bf16.msra.mxu0 %v4858
    %4924 = vmatprep.subr.bf16.mxu0 %v4862
    %4925 = vmatpush1.bf16.msra.mxu0 %v4861
    %4926 = vmatprep.subr.bf16.mxu0 %v4865
    %4927 = vmatpush1.bf16.msra.mxu0 %v4864
    %4928 = vmatprep.subr.bf16.mxu0 %v4868
    %4929 = vmatpush1.bf16.msra.mxu0 %v4867
    %4930 = vmatprep.subr.bf16.mxu0 %v4871
    %4931 = vmatpush1.bf16.msra.mxu0 %v4870
    %4932 = vmatprep.subr.bf16.mxu0 %v4874
    %4933 = vmatpush1.bf16.msra.mxu0 %v4873
    %4934 = vmatprep.subr.bf16.mxu0 %v4877
    %4935 = vmatpush1.bf16.msra.mxu0 %v4876
    %4936 = vmatprep.subr.bf16.mxu0 %v4880
    %4937 = vmatpush1.bf16.msra.mxu0 %v4879
    %4938 = vmatprep.subr.bf16.mxu0 0
    %4939 = vmatpush1.bf16.msra.mxu0 0
    %4940 = vmatprep.subr.bf16.mxu0 0
    %4941 = vmatpush1.bf16.msra.mxu0 0
    %4942 = vmatprep.subr.bf16.mxu0 0
    %4943 = vmatpush1.bf16.msra.mxu0 0
    %4944 = vmatprep.subr.bf16.mxu0 0
    %4945 = vmatpush1.bf16.msra.mxu0 0
    %4946 = vmatprep.subr.bf16.mxu0 0
    %4947 = vmatpush1.bf16.msra.mxu0 0
    %4948 = vmatprep.subr.bf16.mxu0 0
    %4949 = vmatpush1.bf16.msra.mxu0 0
    %4950 = vmatprep.subr.bf16.mxu0 0
    %4951 = vmatpush1.bf16.msra.mxu0 0
    %4952 = vmatprep.subr.bf16.mxu0 0
    %4953 = vmatpush1.bf16.msra.mxu0 0
    %4954 = vmatprep.mubr.bf16.mxu0 0
    %4955 = vmatmul.mubr.bf16.gmra.mrb[0].mxu0 %v4744
    %v4956 = vpop.f32.mrb[0].mxu0
    %v4957 = vadd.f32 %v4910, %v4956
    %v4958 = vpop.f32.mrb[0].mxu0
    %v4959 = vadd.f32 %v4914, %v4958
    %v4960 = vpop.f32.mrb[0].mxu0
    %v4961 = vpop.f32.mrb[0].mxu0
    %4962 = vdwg.mxu0
    %4963 = vmatprep.subr.bf16.mxu0 0
    %4964 = vmatpush1.bf16.msra.mxu0 %v4860
    %4965 = vmatprep.subr.bf16.mxu0 0
    %4966 = vmatpush1.bf16.msra.mxu0 %v4863
    %4967 = vmatprep.subr.bf16.mxu0 0
    %4968 = vmatpush1.bf16.msra.mxu0 %v4866
    %4969 = vmatprep.subr.bf16.mxu0 0
    %4970 = vmatpush1.bf16.msra.mxu0 %v4869
    %4971 = vmatprep.subr.bf16.mxu0 0
    %4972 = vmatpush1.bf16.msra.mxu0 %v4872
    %4973 = vmatprep.subr.bf16.mxu0 0
    %4974 = vmatpush1.bf16.msra.mxu0 %v4875
    %4975 = vmatprep.subr.bf16.mxu0 0
    %4976 = vmatpush1.bf16.msra.mxu0 %v4878
    %4977 = vmatprep.subr.bf16.mxu0 0
    %4978 = vmatpush1.bf16.msra.mxu0 %v4881
    %4979 = vmatprep.subr.bf16.mxu0 0
    %4980 = vmatpush1.bf16.msra.mxu0 0
    %4981 = vmatprep.subr.bf16.mxu0 0
    %4982 = vmatpush1.bf16.msra.mxu0 0
    %4983 = vmatprep.subr.bf16.mxu0 0
    %4984 = vmatpush1.bf16.msra.mxu0 0
    %4985 = vmatprep.subr.bf16.mxu0 0
    %4986 = vmatpush1.bf16.msra.mxu0 0
    %4987 = vmatprep.subr.bf16.mxu0 0
    %4988 = vmatpush1.bf16.msra.mxu0 0
    %4989 = vmatprep.subr.bf16.mxu0 0
    %4990 = vmatpush1.bf16.msra.mxu0 0
    %4991 = vmatprep.subr.bf16.mxu0 0
    %4992 = vmatpush1.bf16.msra.mxu0 0
    %4993 = vmatprep.subr.bf16.mxu0 0
    %4994 = vmatpush1.bf16.msra.mxu0 0
    %4995 = vmatprep.mubr.bf16.mxu0 0
    %4996 = vmatmul.mubr.bf16.gmra.mrb[0].mxu0 %v4744
    %v4997 = vpop.f32.mrb[0].mxu0
    %v4998 = vadd.f32 %v4918, %v4997
    %v4999 = vpop.f32.mrb[0].mxu0
    %v5000 = vpop.f32.mrb[0].mxu0
    %v5001 = vpop.f32.mrb[0].mxu0
    %5002 = vdwg.mxu0
    %v5003 = vld [vmem:[#allocation9] sm:$0xff]
    %v5004 = vld [vmem:[#allocation9 + $0x8] sm:$0xf]
    %v5005 = vld [vmem:[#allocation9 + $0xc] sm:$0xff]
    %v5006 = vld [vmem:[#allocation9 + $0x14] sm:$0xf]
    %v5007 = vld [vmem:[#allocation9 + $0x18] sm:$0xff]
    %v5008 = vld [vmem:[#allocation9 + $0x20] sm:$0xf]
    %v5009 = vld [vmem:[#allocation9 + $0x24] sm:$0xff]
    %v5010 = vld [vmem:[#allocation9 + $0x2c] sm:$0xf]
    %v5011 = vld [vmem:[#allocation9 + $0x30] sm:$0xff]
    %v5012 = vld [vmem:[#allocation9 + $0x38] sm:$0xf]
    %v5013 = vld [vmem:[#allocation9 + $0x3c] sm:$0xff]
    %v5014 = vld [vmem:[#allocation9 + $0x44] sm:$0xf]
    %v5015 = vld [vmem:[#allocation9 + $0x48] sm:$0xff]
    %v5016 = vld [vmem:[#allocation9 + $0x50] sm:$0xf]
    %v5017 = vld [vmem:[#allocation9 + $0x54] sm:$0xff]
    %v5018 = vld [vmem:[#allocation9 + $0x5c] sm:$0xf]
    %v5019 = vld [vmem:[#allocation9 + $0x60] sm:$0xff]
    %v5020 = vld [vmem:[#allocation9 + $0x68] sm:$0xf]
    %v5021 = vld [vmem:[#allocation9 + $0x6c] sm:$0xff]
    %v5022 = vld [vmem:[#allocation9 + $0x74] sm:$0xf]
    %v5023 = vld [vmem:[#allocation9 + $0x78] sm:$0xff]
    %v5024 = vld [vmem:[#allocation9 + $0x80] sm:$0xf]
    %v5025 = vld [vmem:[#allocation9 + $0x84] sm:$0xff]
    %v5026 = vld [vmem:[#allocation9 + $0x8c] sm:$0xf]
    %v5027 = vld [vmem:[#allocation9 + $0x90] sm:$0xff]
    %v5028 = vld [vmem:[#allocation9 + $0x98] sm:$0xf]
    %v5029 = vld [vmem:[#allocation9 + $0x9c] sm:$0xff]
    %v5030 = vld [vmem:[#allocation9 + $0xa4] sm:$0xf]
    %v5031 = vld [vmem:[#allocation9 + $0xa8] sm:$0xff]
    %v5032 = vld [vmem:[#allocation9 + $0xb0] sm:$0xf]
    %v5033 = vld [vmem:[#allocation9 + $0xb4] sm:$0xff]
    %v5034 = vld [vmem:[#allocation9 + $0xbc] sm:$0xf]
    %v5035 = vld [vmem:[%s6] sm:$0x7]
    %v5068 = vunpack.c.l.b16 %v5003
    %v5069 = vunpack.c.h.b16 %v5003
    %v5070 = vunpack.c.l.b16 %v5004
    %v5071 = vunpack.c.l.b16 %v5005
    %v5072 = vunpack.c.h.b16 %v5005
    %v5073 = vunpack.c.l.b16 %v5006
    %v5074 = vunpack.c.l.b16 %v5007
    %v5075 = vunpack.c.h.b16 %v5007
    %v5076 = vunpack.c.l.b16 %v5008
    %v5077 = vunpack.c.l.b16 %v5009
    %v5078 = vunpack.c.h.b16 %v5009
    %v5079 = vunpack.c.l.b16 %v5010
    %v5080 = vunpack.c.l.b16 %v5011
    %v5081 = vunpack.c.h.b16 %v5011
    %v5082 = vunpack.c.l.b16 %v5012
    %v5083 = vunpack.c.l.b16 %v5013
    %v5084 = vunpack.c.h.b16 %v5013
    %v5085 = vunpack.c.l.b16 %v5014
    %v5086 = vunpack.c.l.b16 %v5015
    %v5087 = vunpack.c.h.b16 %v5015
    %v5088 = vunpack.c.l.b16 %v5016
    %v5089 = vunpack.c.l.b16 %v5017
    %v5090 = vunpack.c.h.b16 %v5017
    %v5091 = vunpack.c.l.b16 %v5018
    %v5092 = vunpack.c.l.b16 %v5019
    %v5093 = vunpack.c.h.b16 %v5019
    %v5094 = vunpack.c.l.b16 %v5020
    %v5095 = vunpack.c.l.b16 %v5021
    %v5096 = vunpack.c.h.b16 %v5021
    %v5097 = vunpack.c.l.b16 %v5022
    %v5098 = vunpack.c.l.b16 %v5023
    %v5099 = vunpack.c.h.b16 %v5023
    %v5100 = vunpack.c.l.b16 %v5024
    %v5101 = vunpack.c.l.b16 %v5025
    %v5102 = vunpack.c.h.b16 %v5025
    %v5103 = vunpack.c.l.b16 %v5026
    %v5104 = vunpack.c.l.b16 %v5027
    %v5105 = vunpack.c.h.b16 %v5027
    %v5106 = vunpack.c.l.b16 %v5028
    %v5107 = vunpack.c.l.b16 %v5029
    %v5108 = vunpack.c.h.b16 %v5029
    %v5109 = vunpack.c.l.b16 %v5030
    %v5110 = vunpack.c.l.b16 %v5031
    %v5111 = vunpack.c.h.b16 %v5031
    %v5112 = vunpack.c.l.b16 %v5032
    %v5113 = vunpack.c.l.b16 %v5033
    %v5114 = vunpack.c.h.b16 %v5033
    %v5115 = vunpack.c.l.b16 %v5034
    %v5116 = vpack.c.b16 %v5071, %v5068
    %v5117 = vpack.c.b16 %v5072, %v5069
    %v5118 = vpack.c.b16 %v5073, %v5070
    %v5119 = vpack.c.b16 %v5077, %v5074
    %v5120 = vpack.c.b16 %v5078, %v5075
    %v5121 = vpack.c.b16 %v5079, %v5076
    %v5122 = vpack.c.b16 %v5083, %v5080
    %v5123 = vpack.c.b16 %v5084, %v5081
    %v5124 = vpack.c.b16 %v5085, %v5082
    %v5125 = vpack.c.b16 %v5089, %v5086
    %v5126 = vpack.c.b16 %v5090, %v5087
    %v5127 = vpack.c.b16 %v5091, %v5088
    %v5128 = vpack.c.b16 %v5095, %v5092
    %v5129 = vpack.c.b16 %v5096, %v5093
    %v5130 = vpack.c.b16 %v5097, %v5094
    %v5131 = vpack.c.b16 %v5101, %v5098
    %v5132 = vpack.c.b16 %v5102, %v5099
    %v5133 = vpack.c.b16 %v5103, %v5100
    %v5134 = vpack.c.b16 %v5107, %v5104
    %v5135 = vpack.c.b16 %v5108, %v5105
    %v5136 = vpack.c.b16 %v5109, %v5106
    %v5137 = vpack.c.b16 %v5113, %v5110
    %v5138 = vpack.c.b16 %v5114, %v5111
    %v5139 = vpack.c.b16 %v5115, %v5112
    %v5165 = vlaneseq
    %v5166 = vshrl.u32 %v5165, 7
    %v5167 = vsub.s32 0, %v5166
    %v5168 = vrot.slane %v5035, %v5167
    %v5169 = vlaneseq
    %v5170 = vshrl.u32 %v5169, 7
    %v5171 = vsub.s32 1, %v5170
    %v5172 = vrot.slane %v5035, %v5171
    %v5173 = vlaneseq
    %v5174 = vshrl.u32 %v5173, 7
    %v5175 = vsub.s32 2, %v5174
    %v5176 = vrot.slane %v5035, %v5175
    %5180 = vmatprep.subr.bf16.mxu0 %v5117
    %5181 = vmatpush1.bf16.msra.mxu0 %v5116
    %5182 = vmatprep.subr.bf16.mxu0 %v5120
    %5183 = vmatpush1.bf16.msra.mxu0 %v5119
    %5184 = vmatprep.subr.bf16.mxu0 %v5123
    %5185 = vmatpush1.bf16.msra.mxu0 %v5122
    %5186 = vmatprep.subr.bf16.mxu0 %v5126
    %5187 = vmatpush1.bf16.msra.mxu0 %v5125
    %5188 = vmatprep.subr.bf16.mxu0 %v5129
    %5189 = vmatpush1.bf16.msra.mxu0 %v5128
    %5190 = vmatprep.subr.bf16.mxu0 %v5132
    %5191 = vmatpush1.bf16.msra.mxu0 %v5131
    %5192 = vmatprep.subr.bf16.mxu0 %v5135
    %5193 = vmatpush1.bf16.msra.mxu0 %v5134
    %5194 = vmatprep.subr.bf16.mxu0 %v5138
    %5195 = vmatpush1.bf16.msra.mxu0 %v5137
    %5196 = vmatprep.subr.bf16.mxu0 0
    %5197 = vmatpush1.bf16.msra.mxu0 0
    %5198 = vmatprep.subr.bf16.mxu0 0
    %5199 = vmatpush1.bf16.msra.mxu0 0
    %5200 = vmatprep.subr.bf16.mxu0 0
    %5201 = vmatpush1.bf16.msra.mxu0 0
    %5202 = vmatprep.subr.bf16.mxu0 0
    %5203 = vmatpush1.bf16.msra.mxu0 0
    %5204 = vmatprep.subr.bf16.mxu0 0
    %5205 = vmatpush1.bf16.msra.mxu0 0
    %5206 = vmatprep.subr.bf16.mxu0 0
    %5207 = vmatpush1.bf16.msra.mxu0 0
    %5208 = vmatprep.subr.bf16.mxu0 0
    %5209 = vmatpush1.bf16.msra.mxu0 0
    %5210 = vmatprep.subr.bf16.mxu0 0
    %5211 = vmatpush1.bf16.msra.mxu0 0
    %5212 = vmatprep.mubr.bf16.mxu0 0
    %5213 = vmatmul.mubr.bf16.gmra.mrb[0].mxu0 %v4620
    %v5214 = vpop.f32.mrb[0].mxu0
    %v5215 = vadd.f32 %v5168, %v5214
    %v5216 = vpop.f32.mrb[0].mxu0
    %v5217 = vadd.f32 %v5172, %v5216
    %v5218 = vpop.f32.mrb[0].mxu0
    %v5219 = vpop.f32.mrb[0].mxu0
    %5220 = vdwg.mxu0
    %5221 = vmatprep.subr.bf16.mxu0 0
    %5222 = vmatpush1.bf16.msra.mxu0 %v5118
    %5223 = vmatprep.subr.bf16.mxu0 0
    %5224 = vmatpush1.bf16.msra.mxu0 %v5121
    %5225 = vmatprep.subr.bf16.mxu0 0
    %5226 = vmatpush1.bf16.msra.mxu0 %v5124
    %5227 = vmatprep.subr.bf16.mxu0 0
    %5228 = vmatpush1.bf16.msra.mxu0 %v5127
    %5229 = vmatprep.subr.bf16.mxu0 0
    %5230 = vmatpush1.bf16.msra.mxu0 %v5130
    %5231 = vmatprep.subr.bf16.mxu0 0
    %5232 = vmatpush1.bf16.msra.mxu0 %v5133
    %5233 = vmatprep.subr.bf16.mxu0 0
    %5234 = vmatpush1.bf16.msra.mxu0 %v5136
    %5235 = vmatprep.subr.bf16.mxu0 0
    %5236 = vmatpush1.bf16.msra.mxu0 %v5139
    %5237 = vmatprep.subr.bf16.mxu0 0
    %5238 = vmatpush1.bf16.msra.mxu0 0
    %5239 = vmatprep.subr.bf16.mxu0 0
    %5240 = vmatpush1.bf16.msra.mxu0 0
    %5241 = vmatprep.subr.bf16.mxu0 0
    %5242 = vmatpush1.bf16.msra.mxu0 0
    %5243 = vmatprep.subr.bf16.mxu0 0
    %5244 = vmatpush1.bf16.msra.mxu0 0
    %5245 = vmatprep.subr.bf16.mxu0 0
    %5246 = vmatpush1.bf16.msra.mxu0 0
    %5247 = vmatprep.subr.bf16.mxu0 0
    %5248 = vmatpush1.bf16.msra.mxu0 0
    %5249 = vmatprep.subr.bf16.mxu0 0
    %5250 = vmatpush1.bf16.msra.mxu0 0
    %5251 = vmatprep.subr.bf16.mxu0 0
    %5252 = vmatpush1.bf16.msra.mxu0 0
    %5253 = vmatprep.mubr.bf16.mxu0 0
    %5254 = vmatmul.mubr.bf16.gmra.mrb[0].mxu0 %v4620
    %v5255 = vpop.f32.mrb[0].mxu0
    %v5256 = vadd.f32 %v5176, %v5255
    %v5257 = vpop.f32.mrb[0].mxu0
    %v5258 = vpop.f32.mrb[0].mxu0
    %v5259 = vpop.f32.mrb[0].mxu0
    %5260 = vdwg.mxu0
    %v5261 = vadd.f32 %v4957, %v5215
    %v5262 = vxor.u32 %v5261, 2147483648
    %v5263 = vmul.f32 %v5262, 1.442695
    %v5264 = vpow.pop %v5263
    %v5265 = vadd.f32 %v5264, 1.0
    %v5266 = vrcp.pop %v5265
    %v5267 = vmul.f32 1.0, %v5266
    %v5268 = vadd.f32 %v4959, %v5217
    %v5269 = vxor.u32 %v5268, 2147483648
    %v5270 = vmul.f32 %v5269, 1.442695
    %v5271 = vpow.pop %v5270
    %v5272 = vadd.f32 %v5271, 1.0
    %v5273 = vrcp.pop %v5272
    %v5274 = vmul.f32 1.0, %v5273
    %v5275 = vmul.f32 %v5267, %v5256
    %v5276 = vadd.f32 %v4998, %v5275
    %v5277 = vtanh.pop %v5276
    %v5278 = vsub.f32 1.0, %v5274
    %v5279 = vmul.f32 %v5278, %v5277
    %v5280 = vmul.f32 %v5274, %v4619
    %v5281 = vadd.f32 %v5279, %v5280
    %v5282 = vpack.c.bf16 %v5281, %v5281
    %v5283 = vld [vmem:[#allocation10] sm:$0xf]
    %v5284 = vld [vmem:[#allocation10 + $0x4] sm:$0xf]
    %v5285 = vld [vmem:[#allocation10 + $0x8] sm:$0xf]
    %v5286 = vld [vmem:[#allocation10 + $0xc] sm:$0xf]
    %v5287 = vld [vmem:[#allocation10 + $0x10] sm:$0xf]
    %v5288 = vld [vmem:[#allocation10 + $0x14] sm:$0xf]
    %v5289 = vld [vmem:[#allocation10 + $0x18] sm:$0xf]
    %v5290 = vld [vmem:[#allocation10 + $0x1c] sm:$0xf]
    %v5291 = vld [vmem:[#allocation10 + $0x20] sm:$0xf]
    %v5292 = vld [vmem:[#allocation10 + $0x24] sm:$0xf]
    %v5293 = vld [vmem:[#allocation10 + $0x28] sm:$0xf]
    %v5294 = vld [vmem:[#allocation10 + $0x2c] sm:$0xf]
    %v5295 = vld [vmem:[#allocation10 + $0x30] sm:$0xf]
    %v5296 = vld [vmem:[#allocation10 + $0x34] sm:$0xf]
    %v5297 = vld [vmem:[#allocation10 + $0x38] sm:$0xf]
    %v5298 = vld [vmem:[#allocation10 + $0x3c] sm:$0xf]
    %v5299 = vld [vmem:[%s8] sm:$0x1]
    %v5316 = vunpack.c.l.b16 %v5283
    %v5317 = vunpack.c.l.b16 %v5284
    %v5318 = vunpack.c.l.b16 %v5285
    %v5319 = vunpack.c.l.b16 %v5286
    %v5320 = vunpack.c.l.b16 %v5287
    %v5321 = vunpack.c.l.b16 %v5288
    %v5322 = vunpack.c.l.b16 %v5289
    %v5323 = vunpack.c.l.b16 %v5290
    %v5324 = vunpack.c.l.b16 %v5291
    %v5325 = vunpack.c.l.b16 %v5292
    %v5326 = vunpack.c.l.b16 %v5293
    %v5327 = vunpack.c.l.b16 %v5294
    %v5328 = vunpack.c.l.b16 %v5295
    %v5329 = vunpack.c.l.b16 %v5296
    %v5330 = vunpack.c.l.b16 %v5297
    %v5331 = vunpack.c.l.b16 %v5298
    %v5332 = vpack.c.b16 %v5317, %v5316
    %v5333 = vpack.c.b16 %v5319, %v5318
    %v5334 = vpack.c.b16 %v5321, %v5320
    %v5335 = vpack.c.b16 %v5323, %v5322
    %v5336 = vpack.c.b16 %v5325, %v5324
    %v5337 = vpack.c.b16 %v5327, %v5326
    %v5338 = vpack.c.b16 %v5329, %v5328
    %v5339 = vpack.c.b16 %v5331, %v5330
    %5348 = vmatprep.subr.bf16.mxu0 0
    %5349 = vmatpush1.bf16.msra.mxu0 %v5332
    %5350 = vmatprep.subr.bf16.mxu0 0
    %5351 = vmatpush1.bf16.msra.mxu0 %v5333
    %5352 = vmatprep.subr.bf16.mxu0 0
    %5353 = vmatpush1.bf16.msra.mxu0 %v5334
    %5354 = vmatprep.subr.bf16.mxu0 0
    %5355 = vmatpush1.bf16.msra.mxu0 %v5335
    %5356 = vmatprep.subr.bf16.mxu0 0
    %5357 = vmatpush1.bf16.msra.mxu0 %v5336
    %5358 = vmatprep.subr.bf16.mxu0 0
    %5359 = vmatpush1.bf16.msra.mxu0 %v5337
    %5360 = vmatprep.subr.bf16.mxu0 0
    %5361 = vmatpush1.bf16.msra.mxu0 %v5338
    %5362 = vmatprep.subr.bf16.mxu0 0
    %5363 = vmatpush1.bf16.msra.mxu0 %v5339
    %5364 = vmatprep.subr.bf16.mxu0 0
    %5365 = vmatpush1.bf16.msra.mxu0 0
    %5366 = vmatprep.subr.bf16.mxu0 0
    %5367 = vmatpush1.bf16.msra.mxu0 0
    %5368 = vmatprep.subr.bf16.mxu0 0
    %5369 = vmatpush1.bf16.msra.mxu0 0
    %5370 = vmatprep.subr.bf16.mxu0 0
    %5371 = vmatpush1.bf16.msra.mxu0 0
    %5372 = vmatprep.subr.bf16.mxu0 0
    %5373 = vmatpush1.bf16.msra.mxu0 0
    %5374 = vmatprep.subr.bf16.mxu0 0
    %5375 = vmatpush1.bf16.msra.mxu0 0
    %5376 = vmatprep.subr.bf16.mxu0 0
    %5377 = vmatpush1.bf16.msra.mxu0 0
    %5378 = vmatprep.subr.bf16.mxu0 0
    %5379 = vmatpush1.bf16.msra.mxu0 0
    %5380 = vmatprep.mubr.bf16.mxu0 0
    %5381 = vmatmul.mubr.bf16.gmra.mrb[0].mxu0 %v5282
    %v5382 = vpop.f32.mrb[0].mxu0
    %v5383 = vadd.f32 %v5299, %v5382
    %v5384 = vpop.f32.mrb[0].mxu0
    %v5385 = vpop.f32.mrb[0].mxu0
    %v5386 = vpop.f32.mrb[0].mxu0
    %5387 = vdwg.mxu0
    %v5388 = vsel %vm753, %v5383, -inf
    %5389 = vmax.xlane.f32.xlu0 %v5388
    %v5390 = vpop.xlane.xlu0 %5389
    %v5391 = vsub.f32 %v5383, %v5390
    %v5392 = vmul.f32 %v5391, 1.442695
    %v5393 = vpow.pop %v5392
    %v5394 = vsel %vm753, %v5393, 0.0
    %5395 = vadd.xlane.f32.xlu0 %v5394
    %v5396 = vpop.xlane.xlu0 %5395
    %v5397 = vlog2.pop %v5396
    %v5398 = vmul.f32 %v5397, 0.6931472
    %v5399 = vadd.f32 %v5398, %v5390
    %v5400 = vsub.f32 %v5383, %v5399
    %5401 = vst [vmem:[#allocation12 + $0x7] sm:$0x1] %v5400
    %5402 = vst [vmem:[#allocation13] sm:$0x1] %v5281
    // Predicated region
    $region58: #{tpu_custom_call.1} parent=1 // pred_check
      _
    $region59: #{tpu_custom_call.1} parent=1 // pred_check_branch
      %5404 = sbr.rel (0) target = $region61
    $region60: #{tpu_custom_call.1} parent=1 // pred_region
      %s5406 = ssub.s32 128, 128
      %5407 = vsyncadd [#allocation4], %s5406
      %s5409 = sshll.u32 [#allocation12], 4
      %s5410 = int_to_ptr.vmem [resolvable:$true] %s5409
      %5412 = dma.vmem_to_hbm [thread:$0]  %s5410, 128, %s9, [#allocation4]
    $region61: #{tpu_custom_call.1} parent=1 // pred_fallthru
      _
    // Predicated region
    $region62: #{tpu_custom_call.1} parent=1 // pred_check
      _
    $region63: #{tpu_custom_call.1} parent=1 // pred_check_branch
      %5414 = sbr.rel (0) target = $region65
    $region64: #{tpu_custom_call.1} parent=1 // pred_region
      %s5416 = ssub.s32 16, 16
      %5417 = vsyncadd [#allocation14], %s5416
      %s5419 = sshll.u32 [#allocation13], 4
      %s5420 = int_to_ptr.vmem [resolvable:$true] %s5419
      %5422 = dma.vmem_to_hbm [thread:$0]  %s5420, 16, %s10, [#allocation14]
    $region65: #{tpu_custom_call.1} parent=1 // pred_fallthru
      _
    // Predicated region
    $region66: #{tpu_custom_call.1} parent=1 // pred_check
      _
    $region67: #{tpu_custom_call.1} parent=1 // pred_check_branch
      %5424 = sbr.rel (0) target = $region69
    $region68: #{tpu_custom_call.1} parent=1 // pred_region
      %5425 = dma.done [#allocation4], 128
    $region69: #{tpu_custom_call.1} parent=1 // pred_fallthru
      _
    // Predicated region
    $region70: #{tpu_custom_call.1} parent=1 // pred_check
      _
    $region71: #{tpu_custom_call.1} parent=1 // pred_check_branch
      %5427 = sbr.rel (0) target = $region73
    $region72: #{tpu_custom_call.1} parent=1 // pred_region
      %5428 = dma.done [#allocation14], 16
    $region73: #{tpu_custom_call.1} parent=1 // pred_fallthru
      _
    %5429 = vsyncpa [#allocation3], 1
    %5430 = vsyncpa [#allocation8], 1
    %5431 = vsyncpa [#allocation11], 1
    %5432 = vsyncpa [#allocation4], 1
    %5433 = vsyncpa [#allocation14], 1
    %5434 = vsyncpa [#allocation5], 1

</llo_original>
